<compile_context>
chip_gen: v5e
topology: v5e:2x2
jax: 0.10.0
libtpu: 0.0.40
codegen_flags: <defaults>
</compile_context>

<pallas_src>
import functools

import jax
import jax.numpy as jnp
from jax import lax
from jax.experimental import pallas as pl
from jax.experimental.pallas import tpu as pltpu

LANE = 128


def _round_up(x, m):
    return (x + m - 1) // m * m


def convblock_kernel(x_ref, w1_ref, b1_ref, w2_ref, b2_ref, o_ref,
                     xpad_ref, mid_ref):
    """One grid step = `nb` batch images.

    x_ref   : (nb, H, W, Cin)       raw (unpadded) input tile
    w1_ref  : (9*Cip, Cop)          conv1 weights, taps x padded-Cin flattened,
                                    BN1 scale pre-folded into the columns
    b1_ref  : (1, Cop)              folded BN1 bias (f32)
    w2_ref  : (9*Cop, Cop)          conv2 weights (BN2 scale folded)
    b2_ref  : (1, Cop)              folded BN2 bias (f32)
    o_ref   : (nb, H, W, Cop)       lane-dense output tile (channels padded)
    xpad_ref: (nb, H+2, W+2, Cip)   VMEM scratch: zero-halo, channel-padded x
    mid_ref : (nb, H+2, W+2, Cop)   VMEM scratch: zero-halo conv1 output
    """
    nb, H, W, Cin = x_ref.shape
    Cip = xpad_ref.shape[-1]
    Cop = o_ref.shape[-1]
    M = nb * H * W

    # Stage the input with a zero halo and zero channel padding.
    # (zero-fill + interior store; halo/padded channels stay exactly zero.)
    xpad_ref[...] = jnp.zeros_like(xpad_ref)
    xpad_ref[:, 1:H + 1, 1:W + 1, :Cin] = x_ref[...].astype(xpad_ref.dtype)

    def conv3x3(src_ref, w_ref, cin):
        # Fused 3x3 conv: concatenate the 9 shifted taps along the lane-dense
        # channel axis and run ONE MXU matmul with K = 9*cin.
        taps = []
        for k in range(9):
            dy, dx = k // 3, k % 3
            taps.append(src_ref[:, dy:dy + H, dx:dx + W, :])
        patch = jnp.concatenate(taps, axis=-1).reshape(M, 9 * cin)
        return jnp.dot(patch, w_ref[...], preferred_element_type=jnp.float32)

    # conv1 -> BN1 (scale folded into w1) -> ReLU
    h = jnp.maximum(conv3x3(xpad_ref, w1_ref, Cip) + b1_ref[0], 0.0)

    # Stage conv1 output with a zero halo for conv2.
    mid_ref[...] = jnp.zeros_like(mid_ref)
    mid_ref[:, 1:H + 1, 1:W + 1, :] = h.reshape(nb, H, W, Cop).astype(
        mid_ref.dtype)

    # conv2 -> BN2 -> ReLU
    out = jnp.maximum(conv3x3(mid_ref, w2_ref, Cop) + b2_ref[0], 0.0)
    o_ref[...] = out.reshape(nb, H, W, Cop).astype(o_ref.dtype)


def _fold_bn(gamma, beta, mean, var, eps):
    scale = gamma / jnp.sqrt(var + eps)
    bias = beta - mean * scale
    return scale, bias


# TODO(synk): training-mode BatchNorm (batch statistics + running-stat update)
# is not implemented; the kernel implements eval-mode BN folded into the conv.
@functools.partial(jax.jit, static_argnames=("eps", "batch_block"))
def convblock_pallas_nhwc(x_nhwc, w1, g1, bt1, rm1, rv1,
                          w2, g2, bt2, rm2, rv2,
                          eps=1e-5, batch_block=1):
    N, H, W, Cin = x_nhwc.shape
    Cout = w1.shape[-1]
    nb = min(batch_block, N)
    assert N % nb == 0, "batch_block must divide N"

    Cip = _round_up(Cin, LANE)          # lane-dense padded channel counts
    Cop = _round_up(Cout, LANE)
    cdt = x_nhwc.dtype                  # MXU operand dtype (bf16 in -> bf16 MXU)

    # Fold eval-mode BN into per-output-channel scale/bias; fold the scale
    # straight into the conv weights so the kernel epilogue is bias+ReLU only.
    s1, b1 = _fold_bn(g1.astype(jnp.float32), bt1.astype(jnp.float32),
                      rm1.astype(jnp.float32), rv1.astype(jnp.float32), eps)
    s2, b2 = _fold_bn(g2.astype(jnp.float32), bt2.astype(jnp.float32),
                      rm2.astype(jnp.float32), rv2.astype(jnp.float32), eps)
    w1s = w1.astype(jnp.float32) * s1           # (3,3,Cin,Cout)
    w2s = w2.astype(jnp.float32) * s2           # (3,3,Cout,Cout)

    # Zero-pad channels to lane width and flatten the 3x3 taps into the K dim.
    w1p = jnp.zeros((3, 3, Cip, Cop), cdt).at[:, :, :Cin, :Cout].set(
        w1s.astype(cdt))
    w2p = jnp.zeros((3, 3, Cop, Cop), cdt).at[:, :, :Cout, :Cout].set(
        w2s.astype(cdt))
    w1f = w1p.reshape(9 * Cip, Cop)
    w2f = w2p.reshape(9 * Cop, Cop)
    b1p = jnp.zeros((1, Cop), jnp.float32).at[0, :Cout].set(b1)
    b2p = jnp.zeros((1, Cop), jnp.float32).at[0, :Cout].set(b2)

    # Rough per-step VMEM budget; raise the scoped limit only if needed
    # (stay well under v7x's 64 MiB physical VMEM).
    isz = jnp.dtype(cdt).itemsize
    est = (2 * nb * H * W * Cin * isz                   # double-buffered input
           + 2 * nb * H * W * Cop * isz                 # double-buffered output
           + 2 * (9 * Cip + 9 * Cop) * Cop * isz        # double-buffered weights
           + nb * (H + 2) * (W + 2) * (Cip + Cop) * isz  # scratches
           + 2 * nb * H * W * 9 * max(Cip, Cop) * 4)    # patch temporaries
    cp_kwargs = dict(dimension_semantics=("parallel",))
    if est > 32 * 1024 * 1024:
        cp_kwargs["vmem_limit_bytes"] = min(int(est * 1.25), 56 * 1024 * 1024)

    out_padded = pl.pallas_call(
        convblock_kernel,
        out_shape=jax.ShapeDtypeStruct((N, H, W, Cop), x_nhwc.dtype),
        grid_spec=pltpu.PrefetchScalarGridSpec(
            num_scalar_prefetch=0,
            grid=(N // nb,),
            in_specs=[
                pl.BlockSpec((nb, H, W, Cin), lambda b: (b, 0, 0, 0)),
                pl.BlockSpec((9 * Cip, Cop), lambda b: (0, 0)),
                pl.BlockSpec((1, Cop), lambda b: (0, 0)),
                pl.BlockSpec((9 * Cop, Cop), lambda b: (0, 0)),
                pl.BlockSpec((1, Cop), lambda b: (0, 0)),
            ],
            out_specs=pl.BlockSpec((nb, H, W, Cop), lambda b: (b, 0, 0, 0)),
            scratch_shapes=[
                pltpu.VMEM((nb, H + 2, W + 2, Cip), cdt),
                pltpu.VMEM((nb, H + 2, W + 2, Cop), cdt),
            ],
        ),
        compiler_params=pltpu.CompilerParams(**cp_kwargs),
    )(x_nhwc, w1f, b1p, w2f, b2p)

    # Drop the padded output channels (fuses with the caller's transpose).
    return out_padded[..., :Cout]


def convblock_pallas_nchw(x_nchw, params, eps=1e-5, batch_block=1):
    """PyTorch-facing wrapper: NCHW in, NCHW out (stay NHWC if callers allow)."""
    x_nhwc = jnp.transpose(x_nchw, (0, 2, 3, 1))
    out = convblock_pallas_nhwc(x_nhwc, *params, eps=eps,
                                batch_block=batch_block)
    return jnp.transpose(out, (0, 3, 1, 2))


def convblock_ref_nhwc(x_nhwc, w1, g1, bt1, rm1, rv1, w2, g2, bt2, rm2, rv2,
                       eps=1e-5):
    """Pure-JAX reference (lax conv) for verification."""
    s1, b1 = _fold_bn(g1, bt1, rm1, rv1, eps)
    s2, b2 = _fold_bn(g2, bt2, rm2, rv2, eps)
    dn1 = lax.conv_dimension_numbers(x_nhwc.shape, w1.shape,
                                     ('NHWC', 'HWIO', 'NHWC'))
    out = lax.conv_general_dilated(x_nhwc, w1, (1, 1), 'SAME',
                                   dimension_numbers=dn1)
    out = jnp.maximum(out * s1 + b1, 0.0)
    dn2 = lax.conv_dimension_numbers(out.shape, w2.shape,
                                     ('NHWC', 'HWIO', 'NHWC'))
    out = lax.conv_general_dilated(out, w2, (1, 1), 'SAME',
                                   dimension_numbers=dn2)
    return jnp.maximum(out * s2 + b2, 0.0)


if __name__ == "__main__":
    # Small shapes consistent with ConvBlock(in_channels=4, out_channels=8):
    # x is NCHW (2, 4, 16, 16).
    N, Cin, Cout, H, W = 2, 4, 8, 16, 16
    key = jax.random.PRNGKey(0)
    ks = jax.random.split(key, 11)

    x_nchw = jax.random.normal(ks[0], (N, Cin, H, W), jnp.float32)

    # Deterministic synthetic parameters (conv weights in HWIO, bias=False).
    w1 = jax.random.normal(ks[1], (3, 3, Cin, Cout), jnp.float32) / jnp.sqrt(
        Cin * 9)
    w2 = jax.random.normal(ks[2], (3, 3, Cout, Cout), jnp.float32) / jnp.sqrt(
        Cout * 9)
    g1 = 1.0 + 0.1 * jax.random.normal(ks[3], (Cout,), jnp.float32)
    bt1 = 0.1 * jax.random.normal(ks[4], (Cout,), jnp.float32)
    rm1 = 0.1 * jax.random.normal(ks[5], (Cout,), jnp.float32)
    rv1 = 1.0 + 0.1 * jnp.abs(jax.random.normal(ks[6], (Cout,), jnp.float32))
    g2 = 1.0 + 0.1 * jax.random.normal(ks[7], (Cout,), jnp.float32)
    bt2 = 0.1 * jax.random.normal(ks[8], (Cout,), jnp.float32)
    rm2 = 0.1 * jax.random.normal(ks[9], (Cout,), jnp.float32)
    rv2 = 1.0 + 0.1 * jnp.abs(jax.random.normal(ks[10], (Cout,), jnp.float32))

    params = (w1, g1, bt1, rm1, rv1, w2, g2, bt2, rm2, rv2)

    out_nchw = convblock_pallas_nchw(x_nchw, params)
    out_nchw = jax.block_until_ready(out_nchw)

    # Verify against the pure-JAX reference.
    x_nhwc = jnp.transpose(x_nchw, (0, 2, 3, 1))
    ref = convblock_ref_nhwc(x_nhwc, *params)
    ref_nchw = jnp.transpose(ref, (0, 3, 1, 2))
    assert out_nchw.shape == (N, Cout, H, W)
    max_err = float(jnp.max(jnp.abs(out_nchw - ref_nchw)))
    assert jnp.allclose(out_nchw, ref_nchw, atol=1e-4, rtol=1e-4), max_err

    print("KERNEL_OK")
</pallas_src>

<mosaic_0001>
module attributes {stable_mosaic.version = 11 : i64} {
  func.func @convblock_kernel(%arg0: i32, %arg1: memref<1x16x16x4xf32, #tpu.memory_space<vmem>>, %arg2: memref<1152x128xf32, #tpu.memory_space<vmem>>, %arg3: memref<1x128xf32, #tpu.memory_space<vmem>>, %arg4: memref<1152x128xf32, #tpu.memory_space<vmem>>, %arg5: memref<1x128xf32, #tpu.memory_space<vmem>>, %arg6: memref<1x16x16x128xf32, #tpu.memory_space<vmem>>, %arg7: memref<1x18x18x128xf32, #tpu.memory_space<vmem>>, %arg8: memref<1x18x18x128xf32, #tpu.memory_space<vmem>>) attributes {dimension_semantics = [#tpu.dimension_semantics<parallel>], iteration_bounds = array<i64: 2>, scalar_prefetch = 0 : i64, scratch_operands = 2 : i64, tpu.core_type = #tpu.core_type<tc>, window_params = [{transform_indices = @transform_0, window_bounds = array<i64: 1, 16, 16, 4>}, {pipeline_mode = #tpu.pipeline_mode<synchronous>, transform_indices = @transform_1, window_bounds = array<i64: 1152, 128>}, {pipeline_mode = #tpu.pipeline_mode<synchronous>, transform_indices = @transform_2, window_bounds = array<i64: 1, 128>}, {pipeline_mode = #tpu.pipeline_mode<synchronous>, transform_indices = @transform_3, window_bounds = array<i64: 1152, 128>}, {pipeline_mode = #tpu.pipeline_mode<synchronous>, transform_indices = @transform_4, window_bounds = array<i64: 1, 128>}, {transform_indices = @transform_5, window_bounds = array<i64: 1, 16, 16, 128>}]} {
    %cst = arith.constant 0.000000e+00 : f32
    %0 = vector.broadcast %cst : f32 to vector<1x18x18x128xf32>
    %c0 = arith.constant 0 : index
    %c0_0 = arith.constant 0 : index
    %c0_1 = arith.constant 0 : index
    %c0_2 = arith.constant 0 : index
    %1 = vector.load %arg7[%c0, %c0_0, %c0_1, %c0_2] : memref<1x18x18x128xf32, #tpu.memory_space<vmem>>, vector<1x18x18x128xf32>
    tpu.vector_store %arg7[%c0, %c0_0, %c0_1, %c0_2], %0 {strides = array<i32>} : memref<1x18x18x128xf32, #tpu.memory_space<vmem>>, vector<1x18x18x128xf32>,
    %c0_3 = arith.constant 0 : index
    %c0_4 = arith.constant 0 : index
    %c0_5 = arith.constant 0 : index
    %c0_6 = arith.constant 0 : index
    %2 = vector.load %arg1[%c0_3, %c0_4, %c0_5, %c0_6] : memref<1x16x16x4xf32, #tpu.memory_space<vmem>>, vector<1x16x16x4xf32>
    %c0_7 = arith.constant 0 : index
    %c1 = arith.constant 1 : index
    %c1_8 = arith.constant 1 : index
    %c0_9 = arith.constant 0 : index
    %3 = vector.load %arg7[%c0_7, %c1, %c1_8, %c0_9] : memref<1x18x18x128xf32, #tpu.memory_space<vmem>>, vector<1x16x16x4xf32>
    tpu.vector_store %arg7[%c0_7, %c1, %c1_8, %c0_9], %2 {strides = array<i32>} : memref<1x18x18x128xf32, #tpu.memory_space<vmem>>, vector<1x16x16x4xf32>,
    %c0_10 = arith.constant 0 : index
    %c0_11 = arith.constant 0 : index
    %c0_12 = arith.constant 0 : index
    %c0_13 = arith.constant 0 : index
    %4 = vector.load %arg7[%c0_10, %c0_11, %c0_12, %c0_13] : memref<1x18x18x128xf32, #tpu.memory_space<vmem>>, vector<1x16x16x128xf32>
    %c0_14 = arith.constant 0 : index
    %c0_15 = arith.constant 0 : index
    %c1_16 = arith.constant 1 : index
    %c0_17 = arith.constant 0 : index
    %5 = vector.load %arg7[%c0_14, %c0_15, %c1_16, %c0_17] : memref<1x18x18x128xf32, #tpu.memory_space<vmem>>, vector<1x16x16x128xf32>
    %c0_18 = arith.constant 0 : index
    %c0_19 = arith.constant 0 : index
    %c2 = arith.constant 2 : index
    %c0_20 = arith.constant 0 : index
    %6 = vector.load %arg7[%c0_18, %c0_19, %c2, %c0_20] : memref<1x18x18x128xf32, #tpu.memory_space<vmem>>, vector<1x16x16x128xf32>
    %c0_21 = arith.constant 0 : index
    %c1_22 = arith.constant 1 : index
    %c0_23 = arith.constant 0 : index
    %c0_24 = arith.constant 0 : index
    %7 = vector.load %arg7[%c0_21, %c1_22, %c0_23, %c0_24] : memref<1x18x18x128xf32, #tpu.memory_space<vmem>>, vector<1x16x16x128xf32>
    %c0_25 = arith.constant 0 : index
    %c1_26 = arith.constant 1 : index
    %c1_27 = arith.constant 1 : index
    %c0_28 = arith.constant 0 : index
    %8 = vector.load %arg7[%c0_25, %c1_26, %c1_27, %c0_28] : memref<1x18x18x128xf32, #tpu.memory_space<vmem>>, vector<1x16x16x128xf32>
    %c0_29 = arith.constant 0 : index
    %c1_30 = arith.constant 1 : index
    %c2_31 = arith.constant 2 : index
    %c0_32 = arith.constant 0 : index
    %9 = vector.load %arg7[%c0_29, %c1_30, %c2_31, %c0_32] : memref<1x18x18x128xf32, #tpu.memory_space<vmem>>, vector<1x16x16x128xf32>
    %c0_33 = arith.constant 0 : index
    %c2_34 = arith.constant 2 : index
    %c0_35 = arith.constant 0 : index
    %c0_36 = arith.constant 0 : index
    %10 = vector.load %arg7[%c0_33, %c2_34, %c0_35, %c0_36] : memref<1x18x18x128xf32, #tpu.memory_space<vmem>>, vector<1x16x16x128xf32>
    %c0_37 = arith.constant 0 : index
    %c2_38 = arith.constant 2 : index
    %c1_39 = arith.constant 1 : index
    %c0_40 = arith.constant 0 : index
    %11 = vector.load %arg7[%c0_37, %c2_38, %c1_39, %c0_40] : memref<1x18x18x128xf32, #tpu.memory_space<vmem>>, vector<1x16x16x128xf32>
    %c0_41 = arith.constant 0 : index
    %c2_42 = arith.constant 2 : index
    %c2_43 = arith.constant 2 : index
    %c0_44 = arith.constant 0 : index
    %12 = vector.load %arg7[%c0_41, %c2_42, %c2_43, %c0_44] : memref<1x18x18x128xf32, #tpu.memory_space<vmem>>, vector<1x16x16x128xf32>
    %13 = tpu.concatenate %4, %5, %6, %7, %8, %9, %10, %11, %12 in 3 : vector<1x16x16x128xf32>, vector<1x16x16x128xf32>, vector<1x16x16x128xf32>, vector<1x16x16x128xf32>, vector<1x16x16x128xf32>, vector<1x16x16x128xf32>, vector<1x16x16x128xf32>, vector<1x16x16x128xf32>, vector<1x16x16x128xf32> -> vector<1x16x16x1152xf32>
    %14 = vector.shape_cast %13 : vector<1x16x16x1152xf32> to vector<256x1152xf32>
    %c0_45 = arith.constant 0 : index
    %c0_46 = arith.constant 0 : index
    %15 = vector.load %arg2[%c0_45, %c0_46] : memref<1152x128xf32, #tpu.memory_space<vmem>>, vector<1152x128xf32>
    %cst_47 = arith.constant dense<0.000000e+00> : vector<256x128xf32>
    %16 = tpu.matmul %14, %15, %cst_47 {dimension_numbers = #tpu.dot_dimension_numbers<[1], [0], [0], [1], [0, 0, 1, 1], [], []>} : vector<256x1152xf32>, vector<1152x128xf32>, vector<256x128xf32> -> vector<256x128xf32>
    %c0_48 = arith.constant 0 : index
    %c0_49 = arith.constant 0 : index
    %17 = vector.load %arg3[%c0_48, %c0_49] : memref<1x128xf32, #tpu.memory_space<vmem>>, vector<1x128xf32>
    %18 = vector.shape_cast %17 : vector<1x128xf32> to vector<128xf32>
    %19 = vector.shape_cast %18 : vector<128xf32> to vector<1x128xf32>
    %20 = vector.broadcast %19 : vector<1x128xf32> to vector<256x128xf32>
    %21 = arith.addf %16, %20 : vector<256x128xf32>
    %cst_50 = arith.constant 0.000000e+00 : f32
    %22 = vector.broadcast %cst_50 : f32 to vector<256x128xf32>
    %23 = arith.maximumf %21, %22 : vector<256x128xf32>
    %cst_51 = arith.constant 0.000000e+00 : f32
    %24 = vector.broadcast %cst_51 : f32 to vector<1x18x18x128xf32>
    %c0_52 = arith.constant 0 : index
    %c0_53 = arith.constant 0 : index
    %c0_54 = arith.constant 0 : index
    %c0_55 = arith.constant 0 : index
    %25 = vector.load %arg8[%c0_52, %c0_53, %c0_54, %c0_55] : memref<1x18x18x128xf32, #tpu.memory_space<vmem>>, vector<1x18x18x128xf32>
    tpu.vector_store %arg8[%c0_52, %c0_53, %c0_54, %c0_55], %24 {strides = array<i32>} : memref<1x18x18x128xf32, #tpu.memory_space<vmem>>, vector<1x18x18x128xf32>,
    %26 = vector.shape_cast %23 : vector<256x128xf32> to vector<1x16x16x128xf32>
    %c0_56 = arith.constant 0 : index
    %c1_57 = arith.constant 1 : index
    %c1_58 = arith.constant 1 : index
    %c0_59 = arith.constant 0 : index
    %27 = vector.load %arg8[%c0_56, %c1_57, %c1_58, %c0_59] : memref<1x18x18x128xf32, #tpu.memory_space<vmem>>, vector<1x16x16x128xf32>
    tpu.vector_store %arg8[%c0_56, %c1_57, %c1_58, %c0_59], %26 {strides = array<i32>} : memref<1x18x18x128xf32, #tpu.memory_space<vmem>>, vector<1x16x16x128xf32>,
    %c0_60 = arith.constant 0 : index
    %c0_61 = arith.constant 0 : index
    %c0_62 = arith.constant 0 : index
    %c0_63 = arith.constant 0 : index
    %28 = vector.load %arg8[%c0_60, %c0_61, %c0_62, %c0_63] : memref<1x18x18x128xf32, #tpu.memory_space<vmem>>, vector<1x16x16x128xf32>
    %c0_64 = arith.constant 0 : index
    %c0_65 = arith.constant 0 : index
    %c1_66 = arith.constant 1 : index
    %c0_67 = arith.constant 0 : index
    %29 = vector.load %arg8[%c0_64, %c0_65, %c1_66, %c0_67] : memref<1x18x18x128xf32, #tpu.memory_space<vmem>>, vector<1x16x16x128xf32>
    %c0_68 = arith.constant 0 : index
    %c0_69 = arith.constant 0 : index
    %c2_70 = arith.constant 2 : index
    %c0_71 = arith.constant 0 : index
    %30 = vector.load %arg8[%c0_68, %c0_69, %c2_70, %c0_71] : memref<1x18x18x128xf32, #tpu.memory_space<vmem>>, vector<1x16x16x128xf32>
    %c0_72 = arith.constant 0 : index
    %c1_73 = arith.constant 1 : index
    %c0_74 = arith.constant 0 : index
    %c0_75 = arith.constant 0 : index
    %31 = vector.load %arg8[%c0_72, %c1_73, %c0_74, %c0_75] : memref<1x18x18x128xf32, #tpu.memory_space<vmem>>, vector<1x16x16x128xf32>
    %c0_76 = arith.constant 0 : index
    %c1_77 = arith.constant 1 : index
    %c1_78 = arith.constant 1 : index
    %c0_79 = arith.constant 0 : index
    %32 = vector.load %arg8[%c0_76, %c1_77, %c1_78, %c0_79] : memref<1x18x18x128xf32, #tpu.memory_space<vmem>>, vector<1x16x16x128xf32>
    %c0_80 = arith.constant 0 : index
    %c1_81 = arith.constant 1 : index
    %c2_82 = arith.constant 2 : index
    %c0_83 = arith.constant 0 : index
    %33 = vector.load %arg8[%c0_80, %c1_81, %c2_82, %c0_83] : memref<1x18x18x128xf32, #tpu.memory_space<vmem>>, vector<1x16x16x128xf32>
    %c0_84 = arith.constant 0 : index
    %c2_85 = arith.constant 2 : index
    %c0_86 = arith.constant 0 : index
    %c0_87 = arith.constant 0 : index
    %34 = vector.load %arg8[%c0_84, %c2_85, %c0_86, %c0_87] : memref<1x18x18x128xf32, #tpu.memory_space<vmem>>, vector<1x16x16x128xf32>
    %c0_88 = arith.constant 0 : index
    %c2_89 = arith.constant 2 : index
    %c1_90 = arith.constant 1 : index
    %c0_91 = arith.constant 0 : index
    %35 = vector.load %arg8[%c0_88, %c2_89, %c1_90, %c0_91] : memref<1x18x18x128xf32, #tpu.memory_space<vmem>>, vector<1x16x16x128xf32>
    %c0_92 = arith.constant 0 : index
    %c2_93 = arith.constant 2 : index
    %c2_94 = arith.constant 2 : index
    %c0_95 = arith.constant 0 : index
    %36 = vector.load %arg8[%c0_92, %c2_93, %c2_94, %c0_95] : memref<1x18x18x128xf32, #tpu.memory_space<vmem>>, vector<1x16x16x128xf32>
    %37 = tpu.concatenate %28, %29, %30, %31, %32, %33, %34, %35, %36 in 3 : vector<1x16x16x128xf32>, vector<1x16x16x128xf32>, vector<1x16x16x128xf32>, vector<1x16x16x128xf32>, vector<1x16x16x128xf32>, vector<1x16x16x128xf32>, vector<1x16x16x128xf32>, vector<1x16x16x128xf32>, vector<1x16x16x128xf32> -> vector<1x16x16x1152xf32>
    %38 = vector.shape_cast %37 : vector<1x16x16x1152xf32> to vector<256x1152xf32>
    %c0_96 = arith.constant 0 : index
    %c0_97 = arith.constant 0 : index
    %39 = vector.load %arg4[%c0_96, %c0_97] : memref<1152x128xf32, #tpu.memory_space<vmem>>, vector<1152x128xf32>
    %cst_98 = arith.constant dense<0.000000e+00> : vector<256x128xf32>
    %40 = tpu.matmul %38, %39, %cst_98 {dimension_numbers = #tpu.dot_dimension_numbers<[1], [0], [0], [1], [0, 0, 1, 1], [], []>} : vector<256x1152xf32>, vector<1152x128xf32>, vector<256x128xf32> -> vector<256x128xf32>
    %c0_99 = arith.constant 0 : index
    %c0_100 = arith.constant 0 : index
    %41 = vector.load %arg5[%c0_99, %c0_100] : memref<1x128xf32, #tpu.memory_space<vmem>>, vector<1x128xf32>
    %42 = vector.shape_cast %41 : vector<1x128xf32> to vector<128xf32>
    %43 = vector.shape_cast %42 : vector<128xf32> to vector<1x128xf32>
    %44 = vector.broadcast %43 : vector<1x128xf32> to vector<256x128xf32>
    %45 = arith.addf %40, %44 : vector<256x128xf32>
    %cst_101 = arith.constant 0.000000e+00 : f32
    %46 = vector.broadcast %cst_101 : f32 to vector<256x128xf32>
    %47 = arith.maximumf %45, %46 : vector<256x128xf32>
    %48 = vector.shape_cast %47 : vector<256x128xf32> to vector<1x16x16x128xf32>
    %c0_102 = arith.constant 0 : index
    %c0_103 = arith.constant 0 : index
    %c0_104 = arith.constant 0 : index
    %c0_105 = arith.constant 0 : index
    %49 = vector.load %arg6[%c0_102, %c0_103, %c0_104, %c0_105] : memref<1x16x16x128xf32, #tpu.memory_space<vmem>>, vector<1x16x16x128xf32>
    tpu.vector_store %arg6[%c0_102, %c0_103, %c0_104, %c0_105], %48 {strides = array<i32>} : memref<1x16x16x128xf32, #tpu.memory_space<vmem>>, vector<1x16x16x128xf32>,
    return
  }
  func.func @transform_0(%arg0: i32) -> (i32, i32, i32, i32) {
    %c0_i32 = arith.constant 0 : i32
    %c0_i32_0 = arith.constant 0 : i32
    %c0_i32_1 = arith.constant 0 : i32
    %c0_i32_2 = arith.constant 0 : i32
    return %arg0, %c0_i32, %c0_i32_0, %c0_i32_1 : i32, i32, i32, i32
  }
  func.func @transform_1(%arg0: i32) -> (i32, i32) {
    %c0_i32 = arith.constant 0 : i32
    %c0_i32_0 = arith.constant 0 : i32
    %c0_i32_1 = arith.constant 0 : i32
    return %c0_i32, %c0_i32_0 : i32, i32
  }
  func.func @transform_2(%arg0: i32) -> (i32, i32) {
    %c0_i32 = arith.constant 0 : i32
    %c0_i32_0 = arith.constant 0 : i32
    %c0_i32_1 = arith.constant 0 : i32
    return %c0_i32, %c0_i32_0 : i32, i32
  }
  func.func @transform_3(%arg0: i32) -> (i32, i32) {
    %c0_i32 = arith.constant 0 : i32
    %c0_i32_0 = arith.constant 0 : i32
    %c0_i32_1 = arith.constant 0 : i32
    return %c0_i32, %c0_i32_0 : i32, i32
  }
  func.func @transform_4(%arg0: i32) -> (i32, i32) {
    %c0_i32 = arith.constant 0 : i32
    %c0_i32_0 = arith.constant 0 : i32
    %c0_i32_1 = arith.constant 0 : i32
    return %c0_i32, %c0_i32_0 : i32, i32
  }
  func.func @transform_5(%arg0: i32) -> (i32, i32, i32, i32) {
    %c0_i32 = arith.constant 0 : i32
    %c0_i32_0 = arith.constant 0 : i32
    %c0_i32_1 = arith.constant 0 : i32
    %c0_i32_2 = arith.constant 0 : i32
    return %arg0, %c0_i32, %c0_i32_0, %c0_i32_1 : i32, i32, i32, i32
  }
}

</mosaic_0001>

<llo_original>
// kernel: convblock_pallas_nhwc.1
$region0: #{convblock_pallas_nhwc.1}
  #allocation0 [shape = 'u32[]', space=smem, size = 0x4, offset = 0x4, fixed_abs, tag = 'smem constant byte address 0x4 - core index']
  #allocation1 [shape = 'u32[72,128]{1,0:T(1,128)}', space=vmem, size = 0x9000, scoped, tag = 'internal scratch']
  #allocation2 [shape = 'f32[1,18,18,128]{3,2,1,0:T(8,128)}', space=vmem, size = 0x36000, scoped, tag = 'scratch operand']
  #allocation3 [shape = 'f32[1,18,18,128]{3,2,1,0:T(8,128)}', space=vmem, size = 0x36000, scoped, tag = 'scratch operand']
  %s0 = inlined_call_operand.vmem [shape: f32[2,16,16,4], index: 0, kind: input, shape index: {}]
  %s1 = inlined_call_operand.vmem [shape: f32[1152,128], index: 1, kind: input, shape index: {}]
  %s2 = inlined_call_operand.vmem [shape: f32[1,128], index: 2, kind: input, shape index: {}]
  %s3 = inlined_call_operand.vmem [shape: f32[1152,128], index: 3, kind: input, shape index: {}]
  %s4 = inlined_call_operand.vmem [shape: f32[1,128], index: 4, kind: input, shape index: {}]
  %s5 = inlined_call_operand.vmem [shape: f32[2,16,16,128], index: 5, kind: output, shape index: {}]
  %s6 = sld [smem:[#allocation0]]
  $region53: #{convblock_pallas_nhwc.1} parent=0
    _
  %s8 = ssub.s32 1, %s6
  %s9 = scalar_select 0, %s8, %s6
  loop: start=0, step=1, limit=4
  $region2: #{convblock_pallas_nhwc.1} parent=0 // loop_pre_header
    _
  $region3: #{convblock_pallas_nhwc.1} parent=0 // loop_header
    %s11 = sphi 0, %s15
    %p12 = scmp.ge.s32.totalorder %s11, 4
    %s21 = sphi 0, %s23
    %s24 = sphi 0, %s21
    %s25 = sphi 0, %s24
    %s41 = sphi 0, %s25
    %s45 = sphi 0, %s45
    %s47 = sphi 0, %s45
    %s48 = sphi 0, %s47
    %s62 = sphi 0, %s48
    %s66 = sphi 0, %s66
    %s68 = sphi 0, %s66
    %s69 = sphi 0, %s68
    %s83 = sphi 0, %s69
    %s87 = sphi 0, %s87
    %s89 = sphi 0, %s87
    %s90 = sphi 0, %s89
    %s104 = sphi 0, %s90
    %s108 = sphi 0, %s108
    %s110 = sphi 0, %s108
    %s111 = sphi 0, %s110
    %s125 = sphi 0, %s111
    %s131 = sphi 0, %s133
    %s134 = sphi 0, %s131
    %s135 = sphi 0, %s134
    %s151 = sphi 0, %s135
  $region4: #{convblock_pallas_nhwc.1} parent=0 // loop_header_branch
    %14 = sbr.rel (%p12) target = $region8
  $region5: #{convblock_pallas_nhwc.1} parent=0 // loop_body
    %s16 = ssub.s32 %s11, 1
    %s17 = ssub.s32 %s11, 2
    %s18 = sadd.s32 %s11, 1
    %s19 = ssub.s32 %s11, %s18
    %p20 = scmp.eq.s32.totalorder %s19, 0
    %s22 = sadd.s32 %s21, 1
    %s23 = scalar_select %p20, %s21, %s22
    %p26 = pneg %p20
    %p27 = scmp.eq.s32.totalorder %s11, 1
    %p28 = por %p26, %p27
    %p29 = scmp.ne.s32.totalorder %s21, %s24
    %p30 = scmp.eq.s32.totalorder %s11, 0
    %p31 = por %p29, %p30
    %p32 = scmp.ne.s32.totalorder %s21, %s24
    %p33 = scmp.eq.s32.totalorder %s16, 1
    %p34 = por %p32, %p33
    %p35 = scmp.ne.s32.totalorder %s24, %s25
    %p36 = scmp.eq.s32.totalorder %s16, 0
    %p37 = por %p35, %p36
    %p38 = scmp.ne.s32.totalorder %s24, %s25
    %p39 = scmp.eq.s32.totalorder %s17, 1
    %p40 = por %p38, %p39
    %p42 = scmp.ne.s32.totalorder %s25, %s41
    %p43 = scmp.eq.s32.totalorder %s17, 0
    %p44 = por %p42, %p43
    %s46 = sadd.s32 %s45, 1
    %p49 = scmp.eq.s32.totalorder %s11, 1
    %p50 = scmp.ne.s32.totalorder %s45, %s47
    %p51 = scmp.eq.s32.totalorder %s11, 0
    %p52 = por %p50, %p51
    %p53 = scmp.ne.s32.totalorder %s45, %s47
    %p54 = scmp.eq.s32.totalorder %s16, 1
    %p55 = por %p53, %p54
    %p56 = scmp.ne.s32.totalorder %s47, %s48
    %p57 = scmp.eq.s32.totalorder %s16, 0
    %p58 = por %p56, %p57
    %p59 = scmp.ne.s32.totalorder %s47, %s48
    %p60 = scmp.eq.s32.totalorder %s17, 1
    %p61 = por %p59, %p60
    %p63 = scmp.ne.s32.totalorder %s48, %s62
    %p64 = scmp.eq.s32.totalorder %s17, 0
    %p65 = por %p63, %p64
    %s67 = sadd.s32 %s66, 1
    %p70 = scmp.eq.s32.totalorder %s11, 1
    %p71 = scmp.ne.s32.totalorder %s66, %s68
    %p72 = scmp.eq.s32.totalorder %s11, 0
    %p73 = por %p71, %p72
    %p74 = scmp.ne.s32.totalorder %s66, %s68
    %p75 = scmp.eq.s32.totalorder %s16, 1
    %p76 = por %p74, %p75
    %p77 = scmp.ne.s32.totalorder %s68, %s69
    %p78 = scmp.eq.s32.totalorder %s16, 0
    %p79 = por %p77, %p78
    %p80 = scmp.ne.s32.totalorder %s68, %s69
    %p81 = scmp.eq.s32.totalorder %s17, 1
    %p82 = por %p80, %p81
    %p84 = scmp.ne.s32.totalorder %s69, %s83
    %p85 = scmp.eq.s32.totalorder %s17, 0
    %p86 = por %p84, %p85
    %s88 = sadd.s32 %s87, 1
    %p91 = scmp.eq.s32.totalorder %s11, 1
    %p92 = scmp.ne.s32.totalorder %s87, %s89
    %p93 = scmp.eq.s32.totalorder %s11, 0
    %p94 = por %p92, %p93
    %p95 = scmp.ne.s32.totalorder %s87, %s89
    %p96 = scmp.eq.s32.totalorder %s16, 1
    %p97 = por %p95, %p96
    %p98 = scmp.ne.s32.totalorder %s89, %s90
    %p99 = scmp.eq.s32.totalorder %s16, 0
    %p100 = por %p98, %p99
    %p101 = scmp.ne.s32.totalorder %s89, %s90
    %p102 = scmp.eq.s32.totalorder %s17, 1
    %p103 = por %p101, %p102
    %p105 = scmp.ne.s32.totalorder %s90, %s104
    %p106 = scmp.eq.s32.totalorder %s17, 0
    %p107 = por %p105, %p106
    %s109 = sadd.s32 %s108, 1
    %p112 = scmp.eq.s32.totalorder %s11, 1
    %p113 = scmp.ne.s32.totalorder %s108, %s110
    %p114 = scmp.eq.s32.totalorder %s11, 0
    %p115 = por %p113, %p114
    %p116 = scmp.ne.s32.totalorder %s108, %s110
    %p117 = scmp.eq.s32.totalorder %s16, 1
    %p118 = por %p116, %p117
    %p119 = scmp.ne.s32.totalorder %s110, %s111
    %p120 = scmp.eq.s32.totalorder %s16, 0
    %p121 = por %p119, %p120
    %p122 = scmp.ne.s32.totalorder %s110, %s111
    %p123 = scmp.eq.s32.totalorder %s17, 1
    %p124 = por %p122, %p123
    %p126 = scmp.ne.s32.totalorder %s111, %s125
    %p127 = scmp.eq.s32.totalorder %s17, 0
    %p128 = por %p126, %p127
    %s129 = ssub.s32 %s11, %s18
    %p130 = scmp.eq.s32.totalorder %s129, 0
    %s132 = sadd.s32 %s131, 1
    %s133 = scalar_select %p130, %s131, %s132
    %p136 = pneg %p130
    %p137 = scmp.eq.s32.totalorder %s11, 1
    %p138 = por %p136, %p137
    %p139 = scmp.ne.s32.totalorder %s131, %s134
    %p140 = scmp.eq.s32.totalorder %s11, 0
    %p141 = por %p139, %p140
    %p142 = scmp.ne.s32.totalorder %s131, %s134
    %p143 = scmp.eq.s32.totalorder %s16, 1
    %p144 = por %p142, %p143
    %p145 = scmp.ne.s32.totalorder %s134, %s135
    %p146 = scmp.eq.s32.totalorder %s16, 0
    %p147 = por %p145, %p146
    %p148 = scmp.ne.s32.totalorder %s134, %s135
    %p149 = scmp.eq.s32.totalorder %s17, 1
    %p150 = por %p148, %p149
    %p152 = scmp.ne.s32.totalorder %s135, %s151
    %p153 = scmp.eq.s32.totalorder %s17, 0
    %p154 = por %p152, %p153
    %p155 = scmp.le.s32.totalorder 1, %s11
    %p156 = scmp.lt.s32.totalorder %s11, 3
    %p157 = pnand %p155, %p156
    %p158 = pneg %p157
    // Predicated region
    $region9: #{convblock_pallas_nhwc.1} parent=5 // pred_check
      _
    $region10: #{convblock_pallas_nhwc.1} parent=5 // pred_check_branch
      %160 = sbr.rel (%p157) target = $region12
    $region11: #{convblock_pallas_nhwc.1} parent=5 // pred_region
      %s161 = ssub.s32 %s11, 1
      // Predicated region
      $region13: #{convblock_pallas_nhwc.1} parent=11 // pred_check
        %p162 = pneg %p58
      $region14: #{convblock_pallas_nhwc.1} parent=11 // pred_check_branch
        %164 = sbr.rel (%p162) target = $region16
      $region15: #{convblock_pallas_nhwc.1} parent=11 // pred_region
        _
      $region16: #{convblock_pallas_nhwc.1} parent=11 // pred_fallthru
        _
      // Predicated region
      $region17: #{convblock_pallas_nhwc.1} parent=11 // pred_check
        %p165 = pneg %p79
      $region18: #{convblock_pallas_nhwc.1} parent=11 // pred_check_branch
        %167 = sbr.rel (%p165) target = $region20
      $region19: #{convblock_pallas_nhwc.1} parent=11 // pred_region
        _
      $region20: #{convblock_pallas_nhwc.1} parent=11 // pred_fallthru
        _
      // Predicated region
      $region21: #{convblock_pallas_nhwc.1} parent=11 // pred_check
        %p168 = pneg %p100
      $region22: #{convblock_pallas_nhwc.1} parent=11 // pred_check_branch
        %170 = sbr.rel (%p168) target = $region24
      $region23: #{convblock_pallas_nhwc.1} parent=11 // pred_region
        _
      $region24: #{convblock_pallas_nhwc.1} parent=11 // pred_fallthru
        _
      // Predicated region
      $region25: #{convblock_pallas_nhwc.1} parent=11 // pred_check
        %p171 = pneg %p121
      $region26: #{convblock_pallas_nhwc.1} parent=11 // pred_check_branch
        %173 = sbr.rel (%p171) target = $region28
      $region27: #{convblock_pallas_nhwc.1} parent=11 // pred_region
        _
      $region28: #{convblock_pallas_nhwc.1} parent=11 // pred_fallthru
        _
    $region12: #{convblock_pallas_nhwc.1} parent=5 // pred_fallthru
      _
    %p174 = scmp.lt.s32.totalorder %s11, 2
    // Predicated region
    $region29: #{convblock_pallas_nhwc.1} parent=5 // pred_check
      %p175 = pneg %p174
    $region30: #{convblock_pallas_nhwc.1} parent=5 // pred_check_branch
      %177 = sbr.rel (%p175) target = $region32
    $region31: #{convblock_pallas_nhwc.1} parent=5 // pred_region
      // Predicated region
      $region33: #{convblock_pallas_nhwc.1} parent=31 // pred_check
        %p178 = pneg %p31
      $region34: #{convblock_pallas_nhwc.1} parent=31 // pred_check_branch
        %180 = sbr.rel (%p178) target = $region36
      $region35: #{convblock_pallas_nhwc.1} parent=31 // pred_region
        %p181 = scmp.lt.s32.totalorder %s11, 1
        %s182 = scalar_select %p181, %s11, 1
        %s183 = smul.addr %s182, 32
        %s184 = smul.addr %s183, 8
        %s185 = scalar_lea.vmem %s0, %s184
      $region36: #{convblock_pallas_nhwc.1} parent=31 // pred_fallthru
        _
    $region32: #{convblock_pallas_nhwc.1} parent=5 // pred_fallthru
      _
    %p186 = scmp.le.s32.totalorder 1, %s11
    %p187 = scmp.lt.s32.totalorder %s11, 3
    %p188 = pnand %p186, %p187
    %p189 = pneg %p188
    // Predicated region
    $region37: #{convblock_pallas_nhwc.1} parent=5 // pred_check
      _
    $region38: #{convblock_pallas_nhwc.1} parent=5 // pred_check_branch
      %191 = sbr.rel (%p188) target = $region40
    $region39: #{convblock_pallas_nhwc.1} parent=5 // pred_region
      %s192 = ssub.s32 %s11, 1
      %p193 = scmp.lt.s32.totalorder %s16, 1
      %s194 = scalar_select %p193, %s16, 1
      %s195 = smul.addr %s194, 32
      %s196 = smul.addr %s195, 8
      %s197 = scalar_lea.vmem %s0, %s196
      %p198 = pneg %p37
      %p199 = pneg %p34
      %p200 = pneg %p58
      %p201 = pneg %p55
      %p202 = pneg %p79
      %p203 = pneg %p76
      %p204 = pneg %p100
      %p205 = pneg %p97
      %p206 = pneg %p121
      %p207 = pneg %p118
      %p208 = pneg %p147
      %p209 = pneg %p144
      %p210 = scmp.lt.s32.totalorder %s16, 1
      %s211 = scalar_select %p210, %s16, 1
      %s212 = smul.addr %s211, 32
      %s213 = smul.addr %s212, 8
      %s214 = scalar_lea.vmem %s5, %s213
      %p215 = scmp.lt.s32.totalorder %s16, 1
      %s216 = scalar_select %p215, %s16, 1
      %s217 = smul.addr %s216, 32
      %s218 = smul.addr %s217, 8
      %s219 = scalar_lea.vmem %s0, %s218
      %p220 = scmp.lt.s32.totalorder %s16, 1
      %s221 = scalar_select %p220, %s16, 1
      %s222 = smul.addr %s221, 32
      %s223 = smul.addr %s222, 8
      %s224 = scalar_lea.vmem %s5, %s223
      %225 = vst [vmem:[#allocation2] sm:$0xff] 0.0
      %226 = vst [vmem:[#allocation2 + $0x8] sm:$0xff] 0.0
      %227 = vst [vmem:[#allocation2 + $0x10] sm:$0x3] 0.0
      %228 = vst [vmem:[#allocation2 + $0x18] sm:$0xff] 0.0
      %229 = vst [vmem:[#allocation2 + $0x20] sm:$0xff] 0.0
      %230 = vst [vmem:[#allocation2 + $0x28] sm:$0x3] 0.0
      %231 = vst [vmem:[#allocation2 + $0x30] sm:$0xff] 0.0
      %232 = vst [vmem:[#allocation2 + $0x38] sm:$0xff] 0.0
      %233 = vst [vmem:[#allocation2 + $0x40] sm:$0x3] 0.0
      %234 = vst [vmem:[#allocation2 + $0x48] sm:$0xff] 0.0
      %235 = vst [vmem:[#allocation2 + $0x50] sm:$0xff] 0.0
      %236 = vst [vmem:[#allocation2 + $0x58] sm:$0x3] 0.0
      %237 = vst [vmem:[#allocation2 + $0x60] sm:$0xff] 0.0
      %238 = vst [vmem:[#allocation2 + $0x68] sm:$0xff] 0.0
      %239 = vst [vmem:[#allocation2 + $0x70] sm:$0x3] 0.0
      %240 = vst [vmem:[#allocation2 + $0x78] sm:$0xff] 0.0
      %241 = vst [vmem:[#allocation2 + $0x80] sm:$0xff] 0.0
      %242 = vst [vmem:[#allocation2 + $0x88] sm:$0x3] 0.0
      %243 = vst [vmem:[#allocation2 + $0x90] sm:$0xff] 0.0
      %244 = vst [vmem:[#allocation2 + $0x98] sm:$0xff] 0.0
      %245 = vst [vmem:[#allocation2 + $0xa0] sm:$0x3] 0.0
      %246 = vst [vmem:[#allocation2 + $0xa8] sm:$0xff] 0.0
      %247 = vst [vmem:[#allocation2 + $0xb0] sm:$0xff] 0.0
      %248 = vst [vmem:[#allocation2 + $0xb8] sm:$0x3] 0.0
      %249 = vst [vmem:[#allocation2 + $0xc0] sm:$0xff] 0.0
      %250 = vst [vmem:[#allocation2 + $0xc8] sm:$0xff] 0.0
      %251 = vst [vmem:[#allocation2 + $0xd0] sm:$0x3] 0.0
      %252 = vst [vmem:[#allocation2 + $0xd8] sm:$0xff] 0.0
      %253 = vst [vmem:[#allocation2 + $0xe0] sm:$0xff] 0.0
      %254 = vst [vmem:[#allocation2 + $0xe8] sm:$0x3] 0.0
      %255 = vst [vmem:[#allocation2 + $0xf0] sm:$0xff] 0.0
      %256 = vst [vmem:[#allocation2 + $0xf8] sm:$0xff] 0.0
      %257 = vst [vmem:[#allocation2 + $0x100] sm:$0x3] 0.0
      %258 = vst [vmem:[#allocation2 + $0x108] sm:$0xff] 0.0
      %259 = vst [vmem:[#allocation2 + $0x110] sm:$0xff] 0.0
      %260 = vst [vmem:[#allocation2 + $0x118] sm:$0x3] 0.0
      %261 = vst [vmem:[#allocation2 + $0x120] sm:$0xff] 0.0
      %262 = vst [vmem:[#allocation2 + $0x128] sm:$0xff] 0.0
      %263 = vst [vmem:[#allocation2 + $0x130] sm:$0x3] 0.0
      %264 = vst [vmem:[#allocation2 + $0x138] sm:$0xff] 0.0
      %265 = vst [vmem:[#allocation2 + $0x140] sm:$0xff] 0.0
      %266 = vst [vmem:[#allocation2 + $0x148] sm:$0x3] 0.0
      %267 = vst [vmem:[#allocation2 + $0x150] sm:$0xff] 0.0
      %268 = vst [vmem:[#allocation2 + $0x158] sm:$0xff] 0.0
      %269 = vst [vmem:[#allocation2 + $0x160] sm:$0x3] 0.0
      %270 = vst [vmem:[#allocation2 + $0x168] sm:$0xff] 0.0
      %271 = vst [vmem:[#allocation2 + $0x170] sm:$0xff] 0.0
      %272 = vst [vmem:[#allocation2 + $0x178] sm:$0x3] 0.0
      %273 = vst [vmem:[#allocation2 + $0x180] sm:$0xff] 0.0
      %274 = vst [vmem:[#allocation2 + $0x188] sm:$0xff] 0.0
      %275 = vst [vmem:[#allocation2 + $0x190] sm:$0x3] 0.0
      %276 = vst [vmem:[#allocation2 + $0x198] sm:$0xff] 0.0
      %277 = vst [vmem:[#allocation2 + $0x1a0] sm:$0xff] 0.0
      %278 = vst [vmem:[#allocation2 + $0x1a8] sm:$0x3] 0.0
      %v279 = vld [vmem:[%s219] sm:$0xff]
      %v280 = vld [vmem:[%s219 + $0x8] sm:$0xff]
      %v281 = vld [vmem:[%s219 + $0x10] sm:$0xff]
      %v282 = vld [vmem:[%s219 + $0x18] sm:$0xff]
      %v283 = vld [vmem:[%s219 + $0x20] sm:$0xff]
      %v284 = vld [vmem:[%s219 + $0x28] sm:$0xff]
      %v285 = vld [vmem:[%s219 + $0x30] sm:$0xff]
      %v286 = vld [vmem:[%s219 + $0x38] sm:$0xff]
      %v287 = vld [vmem:[%s219 + $0x40] sm:$0xff]
      %v288 = vld [vmem:[%s219 + $0x48] sm:$0xff]
      %v289 = vld [vmem:[%s219 + $0x50] sm:$0xff]
      %v290 = vld [vmem:[%s219 + $0x58] sm:$0xff]
      %v291 = vld [vmem:[%s219 + $0x60] sm:$0xff]
      %v292 = vld [vmem:[%s219 + $0x68] sm:$0xff]
      %v293 = vld [vmem:[%s219 + $0x70] sm:$0xff]
      %v294 = vld [vmem:[%s219 + $0x78] sm:$0xff]
      %v295 = vld [vmem:[%s219 + $0x80] sm:$0xff]
      %v296 = vld [vmem:[%s219 + $0x88] sm:$0xff]
      %v297 = vld [vmem:[%s219 + $0x90] sm:$0xff]
      %v298 = vld [vmem:[%s219 + $0x98] sm:$0xff]
      %v299 = vld [vmem:[%s219 + $0xa0] sm:$0xff]
      %v300 = vld [vmem:[%s219 + $0xa8] sm:$0xff]
      %v301 = vld [vmem:[%s219 + $0xb0] sm:$0xff]
      %v302 = vld [vmem:[%s219 + $0xb8] sm:$0xff]
      %v303 = vld [vmem:[%s219 + $0xc0] sm:$0xff]
      %v304 = vld [vmem:[%s219 + $0xc8] sm:$0xff]
      %v305 = vld [vmem:[%s219 + $0xd0] sm:$0xff]
      %v306 = vld [vmem:[%s219 + $0xd8] sm:$0xff]
      %v307 = vld [vmem:[%s219 + $0xe0] sm:$0xff]
      %v308 = vld [vmem:[%s219 + $0xe8] sm:$0xff]
      %v309 = vld [vmem:[%s219 + $0xf0] sm:$0xff]
      %v310 = vld [vmem:[%s219 + $0xf8] sm:$0xff]
      %s311 = scalar_lea.vmem [#allocation2], 24
      %vm312 = vcmask 31744
      %313 = vst.msk [vmem:[%s311 + $0x1] sm:$0xff] %vm312, %v279
      %314 = vst.msk [vmem:[%s311 + $0x9] sm:$0xff] %vm312, %v280
      %315 = vst.msk [vmem:[%s311 + $0x19] sm:$0xff] %vm312, %v281
      %316 = vst.msk [vmem:[%s311 + $0x21] sm:$0xff] %vm312, %v282
      %317 = vst.msk [vmem:[%s311 + $0x31] sm:$0xff] %vm312, %v283
      %318 = vst.msk [vmem:[%s311 + $0x39] sm:$0xff] %vm312, %v284
      %319 = vst.msk [vmem:[%s311 + $0x49] sm:$0xff] %vm312, %v285
      %320 = vst.msk [vmem:[%s311 + $0x51] sm:$0xff] %vm312, %v286
      %321 = vst.msk [vmem:[%s311 + $0x61] sm:$0xff] %vm312, %v287
      %322 = vst.msk [vmem:[%s311 + $0x69] sm:$0xff] %vm312, %v288
      %323 = vst.msk [vmem:[%s311 + $0x79] sm:$0xff] %vm312, %v289
      %324 = vst.msk [vmem:[%s311 + $0x81] sm:$0xff] %vm312, %v290
      %325 = vst.msk [vmem:[%s311 + $0x91] sm:$0xff] %vm312, %v291
      %326 = vst.msk [vmem:[%s311 + $0x99] sm:$0xff] %vm312, %v292
      %327 = vst.msk [vmem:[%s311 + $0xa9] sm:$0xff] %vm312, %v293
      %328 = vst.msk [vmem:[%s311 + $0xb1] sm:$0xff] %vm312, %v294
      %329 = vst.msk [vmem:[%s311 + $0xc1] sm:$0xff] %vm312, %v295
      %330 = vst.msk [vmem:[%s311 + $0xc9] sm:$0xff] %vm312, %v296
      %331 = vst.msk [vmem:[%s311 + $0xd9] sm:$0xff] %vm312, %v297
      %332 = vst.msk [vmem:[%s311 + $0xe1] sm:$0xff] %vm312, %v298
      %333 = vst.msk [vmem:[%s311 + $0xf1] sm:$0xff] %vm312, %v299
      %334 = vst.msk [vmem:[%s311 + $0xf9] sm:$0xff] %vm312, %v300
      %335 = vst.msk [vmem:[%s311 + $0x109] sm:$0xff] %vm312, %v301
      %336 = vst.msk [vmem:[%s311 + $0x111] sm:$0xff] %vm312, %v302
      %337 = vst.msk [vmem:[%s311 + $0x121] sm:$0xff] %vm312, %v303
      %338 = vst.msk [vmem:[%s311 + $0x129] sm:$0xff] %vm312, %v304
      %339 = vst.msk [vmem:[%s311 + $0x139] sm:$0xff] %vm312, %v305
      %340 = vst.msk [vmem:[%s311 + $0x141] sm:$0xff] %vm312, %v306
      %341 = vst.msk [vmem:[%s311 + $0x151] sm:$0xff] %vm312, %v307
      %342 = vst.msk [vmem:[%s311 + $0x159] sm:$0xff] %vm312, %v308
      %343 = vst.msk [vmem:[%s311 + $0x169] sm:$0xff] %vm312, %v309
      %344 = vst.msk [vmem:[%s311 + $0x171] sm:$0xff] %vm312, %v310
      %v345 = vld [vmem:[#allocation2] sm:$0xff]
      %v346 = vld [vmem:[#allocation2 + $0x8] sm:$0xff]
      %v347 = vld [vmem:[#allocation2 + $0x18] sm:$0xff]
      %v348 = vld [vmem:[#allocation2 + $0x20] sm:$0xff]
      %v349 = vld [vmem:[#allocation2 + $0x30] sm:$0xff]
      %v350 = vld [vmem:[#allocation2 + $0x38] sm:$0xff]
      %v351 = vld [vmem:[#allocation2 + $0x48] sm:$0xff]
      %v352 = vld [vmem:[#allocation2 + $0x50] sm:$0xff]
      %v353 = vld [vmem:[#allocation2 + $0x60] sm:$0xff]
      %v354 = vld [vmem:[#allocation2 + $0x68] sm:$0xff]
      %v355 = vld [vmem:[#allocation2 + $0x78] sm:$0xff]
      %v356 = vld [vmem:[#allocation2 + $0x80] sm:$0xff]
      %v357 = vld [vmem:[#allocation2 + $0x90] sm:$0xff]
      %v358 = vld [vmem:[#allocation2 + $0x98] sm:$0xff]
      %v359 = vld [vmem:[#allocation2 + $0xa8] sm:$0xff]
      %v360 = vld [vmem:[#allocation2 + $0xb0] sm:$0xff]
      %v361 = vld [vmem:[#allocation2 + $0xc0] sm:$0xff]
      %v362 = vld [vmem:[#allocation2 + $0xc8] sm:$0xff]
      %v363 = vld [vmem:[#allocation2 + $0xd8] sm:$0xff]
      %v364 = vld [vmem:[#allocation2 + $0xe0] sm:$0xff]
      %v365 = vld [vmem:[#allocation2 + $0xf0] sm:$0xff]
      %v366 = vld [vmem:[#allocation2 + $0xf8] sm:$0xff]
      %v367 = vld [vmem:[#allocation2 + $0x108] sm:$0xff]
      %v368 = vld [vmem:[#allocation2 + $0x110] sm:$0xff]
      %v369 = vld [vmem:[#allocation2 + $0x120] sm:$0xff]
      %v370 = vld [vmem:[#allocation2 + $0x128] sm:$0xff]
      %v371 = vld [vmem:[#allocation2 + $0x138] sm:$0xff]
      %v372 = vld [vmem:[#allocation2 + $0x140] sm:$0xff]
      %v373 = vld [vmem:[#allocation2 + $0x150] sm:$0xff]
      %v374 = vld [vmem:[#allocation2 + $0x158] sm:$0xff]
      %v375 = vld [vmem:[#allocation2 + $0x168] sm:$0xff]
      %v376 = vld [vmem:[#allocation2 + $0x170] sm:$0xff]
      %v377 = vld [vmem:[#allocation2 + $0x1] sm:$0xff]
      %v378 = vld [vmem:[#allocation2 + $0x9] sm:$0xff]
      %v379 = vld [vmem:[#allocation2 + $0x19] sm:$0xff]
      %v380 = vld [vmem:[#allocation2 + $0x21] sm:$0xff]
      %v381 = vld [vmem:[#allocation2 + $0x31] sm:$0xff]
      %v382 = vld [vmem:[#allocation2 + $0x39] sm:$0xff]
      %v383 = vld [vmem:[#allocation2 + $0x49] sm:$0xff]
      %v384 = vld [vmem:[#allocation2 + $0x51] sm:$0xff]
      %v385 = vld [vmem:[#allocation2 + $0x61] sm:$0xff]
      %v386 = vld [vmem:[#allocation2 + $0x69] sm:$0xff]
      %v387 = vld [vmem:[#allocation2 + $0x79] sm:$0xff]
      %v388 = vld [vmem:[#allocation2 + $0x81] sm:$0xff]
      %v389 = vld [vmem:[#allocation2 + $0x91] sm:$0xff]
      %v390 = vld [vmem:[#allocation2 + $0x99] sm:$0xff]
      %v391 = vld [vmem:[#allocation2 + $0xa9] sm:$0xff]
      %v392 = vld [vmem:[#allocation2 + $0xb1] sm:$0xff]
      %v393 = vld [vmem:[#allocation2 + $0xc1] sm:$0xff]
      %v394 = vld [vmem:[#allocation2 + $0xc9] sm:$0xff]
      %v395 = vld [vmem:[#allocation2 + $0xd9] sm:$0xff]
      %v396 = vld [vmem:[#allocation2 + $0xe1] sm:$0xff]
      %v397 = vld [vmem:[#allocation2 + $0xf1] sm:$0xff]
      %v398 = vld [vmem:[#allocation2 + $0xf9] sm:$0xff]
      %v399 = vld [vmem:[#allocation2 + $0x109] sm:$0xff]
      %v400 = vld [vmem:[#allocation2 + $0x111] sm:$0xff]
      %v401 = vld [vmem:[#allocation2 + $0x121] sm:$0xff]
      %v402 = vld [vmem:[#allocation2 + $0x129] sm:$0xff]
      %v403 = vld [vmem:[#allocation2 + $0x139] sm:$0xff]
      %v404 = vld [vmem:[#allocation2 + $0x141] sm:$0xff]
      %v405 = vld [vmem:[#allocation2 + $0x151] sm:$0xff]
      %v406 = vld [vmem:[#allocation2 + $0x159] sm:$0xff]
      %v407 = vld [vmem:[#allocation2 + $0x169] sm:$0xff]
      %v408 = vld [vmem:[#allocation2 + $0x171] sm:$0xff]
      %v409 = vld [vmem:[#allocation2 + $0x2] sm:$0xff]
      %v410 = vld [vmem:[#allocation2 + $0xa] sm:$0xff]
      %v411 = vld [vmem:[#allocation2 + $0x1a] sm:$0xff]
      %v412 = vld [vmem:[#allocation2 + $0x22] sm:$0xff]
      %v413 = vld [vmem:[#allocation2 + $0x32] sm:$0xff]
      %v414 = vld [vmem:[#allocation2 + $0x3a] sm:$0xff]
      %v415 = vld [vmem:[#allocation2 + $0x4a] sm:$0xff]
      %v416 = vld [vmem:[#allocation2 + $0x52] sm:$0xff]
      %v417 = vld [vmem:[#allocation2 + $0x62] sm:$0xff]
      %v418 = vld [vmem:[#allocation2 + $0x6a] sm:$0xff]
      %v419 = vld [vmem:[#allocation2 + $0x7a] sm:$0xff]
      %v420 = vld [vmem:[#allocation2 + $0x82] sm:$0xff]
      %v421 = vld [vmem:[#allocation2 + $0x92] sm:$0xff]
      %v422 = vld [vmem:[#allocation2 + $0x9a] sm:$0xff]
      %v423 = vld [vmem:[#allocation2 + $0xaa] sm:$0xff]
      %v424 = vld [vmem:[#allocation2 + $0xb2] sm:$0xff]
      %v425 = vld [vmem:[#allocation2 + $0xc2] sm:$0xff]
      %v426 = vld [vmem:[#allocation2 + $0xca] sm:$0xff]
      %v427 = vld [vmem:[#allocation2 + $0xda] sm:$0xff]
      %v428 = vld [vmem:[#allocation2 + $0xe2] sm:$0xff]
      %v429 = vld [vmem:[#allocation2 + $0xf2] sm:$0xff]
      %v430 = vld [vmem:[#allocation2 + $0xfa] sm:$0xff]
      %v431 = vld [vmem:[#allocation2 + $0x10a] sm:$0xff]
      %v432 = vld [vmem:[#allocation2 + $0x112] sm:$0xff]
      %v433 = vld [vmem:[#allocation2 + $0x122] sm:$0xff]
      %v434 = vld [vmem:[#allocation2 + $0x12a] sm:$0xff]
      %v435 = vld [vmem:[#allocation2 + $0x13a] sm:$0xff]
      %v436 = vld [vmem:[#allocation2 + $0x142] sm:$0xff]
      %v437 = vld [vmem:[#allocation2 + $0x152] sm:$0xff]
      %v438 = vld [vmem:[#allocation2 + $0x15a] sm:$0xff]
      %v439 = vld [vmem:[#allocation2 + $0x16a] sm:$0xff]
      %v440 = vld [vmem:[#allocation2 + $0x172] sm:$0xff]
      %v441 = vld [vmem:[%s311] sm:$0xff]
      %v442 = vld [vmem:[%s311 + $0x8] sm:$0xff]
      %v443 = vld [vmem:[%s311 + $0x18] sm:$0xff]
      %v444 = vld [vmem:[%s311 + $0x20] sm:$0xff]
      %v445 = vld [vmem:[%s311 + $0x30] sm:$0xff]
      %v446 = vld [vmem:[%s311 + $0x38] sm:$0xff]
      %v447 = vld [vmem:[%s311 + $0x48] sm:$0xff]
      %v448 = vld [vmem:[%s311 + $0x50] sm:$0xff]
      %v449 = vld [vmem:[%s311 + $0x60] sm:$0xff]
      %v450 = vld [vmem:[%s311 + $0x68] sm:$0xff]
      %v451 = vld [vmem:[%s311 + $0x78] sm:$0xff]
      %v452 = vld [vmem:[%s311 + $0x80] sm:$0xff]
      %v453 = vld [vmem:[%s311 + $0x90] sm:$0xff]
      %v454 = vld [vmem:[%s311 + $0x98] sm:$0xff]
      %v455 = vld [vmem:[%s311 + $0xa8] sm:$0xff]
      %v456 = vld [vmem:[%s311 + $0xb0] sm:$0xff]
      %v457 = vld [vmem:[%s311 + $0xc0] sm:$0xff]
      %v458 = vld [vmem:[%s311 + $0xc8] sm:$0xff]
      %v459 = vld [vmem:[%s311 + $0xd8] sm:$0xff]
      %v460 = vld [vmem:[%s311 + $0xe0] sm:$0xff]
      %v461 = vld [vmem:[%s311 + $0xf0] sm:$0xff]
      %v462 = vld [vmem:[%s311 + $0xf8] sm:$0xff]
      %v463 = vld [vmem:[%s311 + $0x108] sm:$0xff]
      %v464 = vld [vmem:[%s311 + $0x110] sm:$0xff]
      %v465 = vld [vmem:[%s311 + $0x120] sm:$0xff]
      %v466 = vld [vmem:[%s311 + $0x128] sm:$0xff]
      %v467 = vld [vmem:[%s311 + $0x138] sm:$0xff]
      %v468 = vld [vmem:[%s311 + $0x140] sm:$0xff]
      %v469 = vld [vmem:[%s311 + $0x150] sm:$0xff]
      %v470 = vld [vmem:[%s311 + $0x158] sm:$0xff]
      %v471 = vld [vmem:[%s311 + $0x168] sm:$0xff]
      %v472 = vld [vmem:[%s311 + $0x170] sm:$0xff]
      %v473 = vld [vmem:[%s311 + $0x1] sm:$0xff]
      %v474 = vld [vmem:[%s311 + $0x9] sm:$0xff]
      %v475 = vld [vmem:[%s311 + $0x19] sm:$0xff]
      %v476 = vld [vmem:[%s311 + $0x21] sm:$0xff]
      %v477 = vld [vmem:[%s311 + $0x31] sm:$0xff]
      %v478 = vld [vmem:[%s311 + $0x39] sm:$0xff]
      %v479 = vld [vmem:[%s311 + $0x49] sm:$0xff]
      %v480 = vld [vmem:[%s311 + $0x51] sm:$0xff]
      %v481 = vld [vmem:[%s311 + $0x61] sm:$0xff]
      %v482 = vld [vmem:[%s311 + $0x69] sm:$0xff]
      %v483 = vld [vmem:[%s311 + $0x79] sm:$0xff]
      %v484 = vld [vmem:[%s311 + $0x81] sm:$0xff]
      %v485 = vld [vmem:[%s311 + $0x91] sm:$0xff]
      %v486 = vld [vmem:[%s311 + $0x99] sm:$0xff]
      %v487 = vld [vmem:[%s311 + $0xa9] sm:$0xff]
      %v488 = vld [vmem:[%s311 + $0xb1] sm:$0xff]
      %v489 = vld [vmem:[%s311 + $0xc1] sm:$0xff]
      %v490 = vld [vmem:[%s311 + $0xc9] sm:$0xff]
      %v491 = vld [vmem:[%s311 + $0xd9] sm:$0xff]
      %v492 = vld [vmem:[%s311 + $0xe1] sm:$0xff]
      %v493 = vld [vmem:[%s311 + $0xf1] sm:$0xff]
      %v494 = vld [vmem:[%s311 + $0xf9] sm:$0xff]
      %v495 = vld [vmem:[%s311 + $0x109] sm:$0xff]
      %v496 = vld [vmem:[%s311 + $0x111] sm:$0xff]
      %v497 = vld [vmem:[%s311 + $0x121] sm:$0xff]
      %v498 = vld [vmem:[%s311 + $0x129] sm:$0xff]
      %v499 = vld [vmem:[%s311 + $0x139] sm:$0xff]
      %v500 = vld [vmem:[%s311 + $0x141] sm:$0xff]
      %v501 = vld [vmem:[%s311 + $0x151] sm:$0xff]
      %v502 = vld [vmem:[%s311 + $0x159] sm:$0xff]
      %v503 = vld [vmem:[%s311 + $0x169] sm:$0xff]
      %v504 = vld [vmem:[%s311 + $0x171] sm:$0xff]
      %v505 = vld [vmem:[%s311 + $0x2] sm:$0xff]
      %v506 = vld [vmem:[%s311 + $0xa] sm:$0xff]
      %v507 = vld [vmem:[%s311 + $0x1a] sm:$0xff]
      %v508 = vld [vmem:[%s311 + $0x22] sm:$0xff]
      %v509 = vld [vmem:[%s311 + $0x32] sm:$0xff]
      %v510 = vld [vmem:[%s311 + $0x3a] sm:$0xff]
      %v511 = vld [vmem:[%s311 + $0x4a] sm:$0xff]
      %v512 = vld [vmem:[%s311 + $0x52] sm:$0xff]
      %v513 = vld [vmem:[%s311 + $0x62] sm:$0xff]
      %v514 = vld [vmem:[%s311 + $0x6a] sm:$0xff]
      %v515 = vld [vmem:[%s311 + $0x7a] sm:$0xff]
      %v516 = vld [vmem:[%s311 + $0x82] sm:$0xff]
      %v517 = vld [vmem:[%s311 + $0x92] sm:$0xff]
      %v518 = vld [vmem:[%s311 + $0x9a] sm:$0xff]
      %v519 = vld [vmem:[%s311 + $0xaa] sm:$0xff]
      %v520 = vld [vmem:[%s311 + $0xb2] sm:$0xff]
      %v521 = vld [vmem:[%s311 + $0xc2] sm:$0xff]
      %v522 = vld [vmem:[%s311 + $0xca] sm:$0xff]
      %v523 = vld [vmem:[%s311 + $0xda] sm:$0xff]
      %v524 = vld [vmem:[%s311 + $0xe2] sm:$0xff]
      %v525 = vld [vmem:[%s311 + $0xf2] sm:$0xff]
      %v526 = vld [vmem:[%s311 + $0xfa] sm:$0xff]
      %v527 = vld [vmem:[%s311 + $0x10a] sm:$0xff]
      %v528 = vld [vmem:[%s311 + $0x112] sm:$0xff]
      %v529 = vld [vmem:[%s311 + $0x122] sm:$0xff]
      %v530 = vld [vmem:[%s311 + $0x12a] sm:$0xff]
      %v531 = vld [vmem:[%s311 + $0x13a] sm:$0xff]
      %v532 = vld [vmem:[%s311 + $0x142] sm:$0xff]
      %v533 = vld [vmem:[%s311 + $0x152] sm:$0xff]
      %v534 = vld [vmem:[%s311 + $0x15a] sm:$0xff]
      %v535 = vld [vmem:[%s311 + $0x16a] sm:$0xff]
      %v536 = vld [vmem:[%s311 + $0x172] sm:$0xff]
      %s537 = scalar_lea.vmem [#allocation2], 48
      %v538 = vld [vmem:[%s537] sm:$0xff]
      %v539 = vld [vmem:[%s537 + $0x8] sm:$0xff]
      %v540 = vld [vmem:[%s537 + $0x18] sm:$0xff]
      %v541 = vld [vmem:[%s537 + $0x20] sm:$0xff]
      %v542 = vld [vmem:[%s537 + $0x30] sm:$0xff]
      %v543 = vld [vmem:[%s537 + $0x38] sm:$0xff]
      %v544 = vld [vmem:[%s537 + $0x48] sm:$0xff]
      %v545 = vld [vmem:[%s537 + $0x50] sm:$0xff]
      %v546 = vld [vmem:[%s537 + $0x60] sm:$0xff]
      %v547 = vld [vmem:[%s537 + $0x68] sm:$0xff]
      %v548 = vld [vmem:[%s537 + $0x78] sm:$0xff]
      %v549 = vld [vmem:[%s537 + $0x80] sm:$0xff]
      %v550 = vld [vmem:[%s537 + $0x90] sm:$0xff]
      %v551 = vld [vmem:[%s537 + $0x98] sm:$0xff]
      %v552 = vld [vmem:[%s537 + $0xa8] sm:$0xff]
      %v553 = vld [vmem:[%s537 + $0xb0] sm:$0xff]
      %v554 = vld [vmem:[%s537 + $0xc0] sm:$0xff]
      %v555 = vld [vmem:[%s537 + $0xc8] sm:$0xff]
      %v556 = vld [vmem:[%s537 + $0xd8] sm:$0xff]
      %v557 = vld [vmem:[%s537 + $0xe0] sm:$0xff]
      %v558 = vld [vmem:[%s537 + $0xf0] sm:$0xff]
      %v559 = vld [vmem:[%s537 + $0xf8] sm:$0xff]
      %v560 = vld [vmem:[%s537 + $0x108] sm:$0xff]
      %v561 = vld [vmem:[%s537 + $0x110] sm:$0xff]
      %v562 = vld [vmem:[%s537 + $0x120] sm:$0xff]
      %v563 = vld [vmem:[%s537 + $0x128] sm:$0xff]
      %v564 = vld [vmem:[%s537 + $0x138] sm:$0xff]
      %v565 = vld [vmem:[%s537 + $0x140] sm:$0xff]
      %v566 = vld [vmem:[%s537 + $0x150] sm:$0xff]
      %v567 = vld [vmem:[%s537 + $0x158] sm:$0xff]
      %v568 = vld [vmem:[%s537 + $0x168] sm:$0xff]
      %v569 = vld [vmem:[%s537 + $0x170] sm:$0xff]
      %v570 = vld [vmem:[%s537 + $0x1] sm:$0xff]
      %v571 = vld [vmem:[%s537 + $0x9] sm:$0xff]
      %v572 = vld [vmem:[%s537 + $0x19] sm:$0xff]
      %v573 = vld [vmem:[%s537 + $0x21] sm:$0xff]
      %v574 = vld [vmem:[%s537 + $0x31] sm:$0xff]
      %v575 = vld [vmem:[%s537 + $0x39] sm:$0xff]
      %v576 = vld [vmem:[%s537 + $0x49] sm:$0xff]
      %v577 = vld [vmem:[%s537 + $0x51] sm:$0xff]
      %v578 = vld [vmem:[%s537 + $0x61] sm:$0xff]
      %v579 = vld [vmem:[%s537 + $0x69] sm:$0xff]
      %v580 = vld [vmem:[%s537 + $0x79] sm:$0xff]
      %v581 = vld [vmem:[%s537 + $0x81] sm:$0xff]
      %v582 = vld [vmem:[%s537 + $0x91] sm:$0xff]
      %v583 = vld [vmem:[%s537 + $0x99] sm:$0xff]
      %v584 = vld [vmem:[%s537 + $0xa9] sm:$0xff]
      %v585 = vld [vmem:[%s537 + $0xb1] sm:$0xff]
      %v586 = vld [vmem:[%s537 + $0xc1] sm:$0xff]
      %v587 = vld [vmem:[%s537 + $0xc9] sm:$0xff]
      %v588 = vld [vmem:[%s537 + $0xd9] sm:$0xff]
      %v589 = vld [vmem:[%s537 + $0xe1] sm:$0xff]
      %v590 = vld [vmem:[%s537 + $0xf1] sm:$0xff]
      %v591 = vld [vmem:[%s537 + $0xf9] sm:$0xff]
      %v592 = vld [vmem:[%s537 + $0x109] sm:$0xff]
      %v593 = vld [vmem:[%s537 + $0x111] sm:$0xff]
      %v594 = vld [vmem:[%s537 + $0x121] sm:$0xff]
      %v595 = vld [vmem:[%s537 + $0x129] sm:$0xff]
      %v596 = vld [vmem:[%s537 + $0x139] sm:$0xff]
      %v597 = vld [vmem:[%s537 + $0x141] sm:$0xff]
      %v598 = vld [vmem:[%s537 + $0x151] sm:$0xff]
      %v599 = vld [vmem:[%s537 + $0x159] sm:$0xff]
      %v600 = vld [vmem:[%s537 + $0x169] sm:$0xff]
      %v601 = vld [vmem:[%s537 + $0x171] sm:$0xff]
      %v602 = vld [vmem:[%s537 + $0x2] sm:$0xff]
      %v603 = vld [vmem:[%s537 + $0xa] sm:$0xff]
      %v604 = vld [vmem:[%s537 + $0x1a] sm:$0xff]
      %v605 = vld [vmem:[%s537 + $0x22] sm:$0xff]
      %v606 = vld [vmem:[%s537 + $0x32] sm:$0xff]
      %v607 = vld [vmem:[%s537 + $0x3a] sm:$0xff]
      %v608 = vld [vmem:[%s537 + $0x4a] sm:$0xff]
      %v609 = vld [vmem:[%s537 + $0x52] sm:$0xff]
      %v610 = vld [vmem:[%s537 + $0x62] sm:$0xff]
      %v611 = vld [vmem:[%s537 + $0x6a] sm:$0xff]
      %v612 = vld [vmem:[%s537 + $0x7a] sm:$0xff]
      %v613 = vld [vmem:[%s537 + $0x82] sm:$0xff]
      %v614 = vld [vmem:[%s537 + $0x92] sm:$0xff]
      %v615 = vld [vmem:[%s537 + $0x9a] sm:$0xff]
      %v616 = vld [vmem:[%s537 + $0xaa] sm:$0xff]
      %v617 = vld [vmem:[%s537 + $0xb2] sm:$0xff]
      %v618 = vld [vmem:[%s537 + $0xc2] sm:$0xff]
      %v619 = vld [vmem:[%s537 + $0xca] sm:$0xff]
      %v620 = vld [vmem:[%s537 + $0xda] sm:$0xff]
      %v621 = vld [vmem:[%s537 + $0xe2] sm:$0xff]
      %v622 = vld [vmem:[%s537 + $0xf2] sm:$0xff]
      %v623 = vld [vmem:[%s537 + $0xfa] sm:$0xff]
      %v624 = vld [vmem:[%s537 + $0x10a] sm:$0xff]
      %v625 = vld [vmem:[%s537 + $0x112] sm:$0xff]
      %v626 = vld [vmem:[%s537 + $0x122] sm:$0xff]
      %v627 = vld [vmem:[%s537 + $0x12a] sm:$0xff]
      %v628 = vld [vmem:[%s537 + $0x13a] sm:$0xff]
      %v629 = vld [vmem:[%s537 + $0x142] sm:$0xff]
      %v630 = vld [vmem:[%s537 + $0x152] sm:$0xff]
      %v631 = vld [vmem:[%s537 + $0x15a] sm:$0xff]
      %v632 = vld [vmem:[%s537 + $0x16a] sm:$0xff]
      %v633 = vld [vmem:[%s537 + $0x172] sm:$0xff]
      %v634 = vld [vmem:[%s1] sm:$0xff]
      %v635 = vld [vmem:[%s1 + $0x8] sm:$0xff]
      %v636 = vld [vmem:[%s1 + $0x10] sm:$0xff]
      %v637 = vld [vmem:[%s1 + $0x18] sm:$0xff]
      %v638 = vld [vmem:[%s1 + $0x20] sm:$0xff]
      %v639 = vld [vmem:[%s1 + $0x28] sm:$0xff]
      %v640 = vld [vmem:[%s1 + $0x30] sm:$0xff]
      %v641 = vld [vmem:[%s1 + $0x38] sm:$0xff]
      %v642 = vld [vmem:[%s1 + $0x40] sm:$0xff]
      %v643 = vld [vmem:[%s1 + $0x48] sm:$0xff]
      %v644 = vld [vmem:[%s1 + $0x50] sm:$0xff]
      %v645 = vld [vmem:[%s1 + $0x58] sm:$0xff]
      %v646 = vld [vmem:[%s1 + $0x60] sm:$0xff]
      %v647 = vld [vmem:[%s1 + $0x68] sm:$0xff]
      %v648 = vld [vmem:[%s1 + $0x70] sm:$0xff]
      %v649 = vld [vmem:[%s1 + $0x78] sm:$0xff]
      %v650 = vld [vmem:[%s1 + $0x80] sm:$0xff]
      %v651 = vld [vmem:[%s1 + $0x88] sm:$0xff]
      %v652 = vld [vmem:[%s1 + $0x90] sm:$0xff]
      %v653 = vld [vmem:[%s1 + $0x98] sm:$0xff]
      %v654 = vld [vmem:[%s1 + $0xa0] sm:$0xff]
      %v655 = vld [vmem:[%s1 + $0xa8] sm:$0xff]
      %v656 = vld [vmem:[%s1 + $0xb0] sm:$0xff]
      %v657 = vld [vmem:[%s1 + $0xb8] sm:$0xff]
      %v658 = vld [vmem:[%s1 + $0xc0] sm:$0xff]
      %v659 = vld [vmem:[%s1 + $0xc8] sm:$0xff]
      %v660 = vld [vmem:[%s1 + $0xd0] sm:$0xff]
      %v661 = vld [vmem:[%s1 + $0xd8] sm:$0xff]
      %v662 = vld [vmem:[%s1 + $0xe0] sm:$0xff]
      %v663 = vld [vmem:[%s1 + $0xe8] sm:$0xff]
      %v664 = vld [vmem:[%s1 + $0xf0] sm:$0xff]
      %v665 = vld [vmem:[%s1 + $0xf8] sm:$0xff]
      %v666 = vld [vmem:[%s1 + $0x100] sm:$0xff]
      %v667 = vld [vmem:[%s1 + $0x108] sm:$0xff]
      %v668 = vld [vmem:[%s1 + $0x110] sm:$0xff]
      %v669 = vld [vmem:[%s1 + $0x118] sm:$0xff]
      %v670 = vld [vmem:[%s1 + $0x120] sm:$0xff]
      %v671 = vld [vmem:[%s1 + $0x128] sm:$0xff]
      %v672 = vld [vmem:[%s1 + $0x130] sm:$0xff]
      %v673 = vld [vmem:[%s1 + $0x138] sm:$0xff]
      %v674 = vld [vmem:[%s1 + $0x140] sm:$0xff]
      %v675 = vld [vmem:[%s1 + $0x148] sm:$0xff]
      %v676 = vld [vmem:[%s1 + $0x150] sm:$0xff]
      %v677 = vld [vmem:[%s1 + $0x158] sm:$0xff]
      %v678 = vld [vmem:[%s1 + $0x160] sm:$0xff]
      %v679 = vld [vmem:[%s1 + $0x168] sm:$0xff]
      %v680 = vld [vmem:[%s1 + $0x170] sm:$0xff]
      %v681 = vld [vmem:[%s1 + $0x178] sm:$0xff]
      %v682 = vld [vmem:[%s1 + $0x180] sm:$0xff]
      %v683 = vld [vmem:[%s1 + $0x188] sm:$0xff]
      %v684 = vld [vmem:[%s1 + $0x190] sm:$0xff]
      %v685 = vld [vmem:[%s1 + $0x198] sm:$0xff]
      %v686 = vld [vmem:[%s1 + $0x1a0] sm:$0xff]
      %v687 = vld [vmem:[%s1 + $0x1a8] sm:$0xff]
      %v688 = vld [vmem:[%s1 + $0x1b0] sm:$0xff]
      %v689 = vld [vmem:[%s1 + $0x1b8] sm:$0xff]
      %v690 = vld [vmem:[%s1 + $0x1c0] sm:$0xff]
      %v691 = vld [vmem:[%s1 + $0x1c8] sm:$0xff]
      %v692 = vld [vmem:[%s1 + $0x1d0] sm:$0xff]
      %v693 = vld [vmem:[%s1 + $0x1d8] sm:$0xff]
      %v694 = vld [vmem:[%s1 + $0x1e0] sm:$0xff]
      %v695 = vld [vmem:[%s1 + $0x1e8] sm:$0xff]
      %v696 = vld [vmem:[%s1 + $0x1f0] sm:$0xff]
      %v697 = vld [vmem:[%s1 + $0x1f8] sm:$0xff]
      %v698 = vld [vmem:[%s1 + $0x200] sm:$0xff]
      %v699 = vld [vmem:[%s1 + $0x208] sm:$0xff]
      %v700 = vld [vmem:[%s1 + $0x210] sm:$0xff]
      %v701 = vld [vmem:[%s1 + $0x218] sm:$0xff]
      %v702 = vld [vmem:[%s1 + $0x220] sm:$0xff]
      %v703 = vld [vmem:[%s1 + $0x228] sm:$0xff]
      %v704 = vld [vmem:[%s1 + $0x230] sm:$0xff]
      %v705 = vld [vmem:[%s1 + $0x238] sm:$0xff]
      %v706 = vld [vmem:[%s1 + $0x240] sm:$0xff]
      %v707 = vld [vmem:[%s1 + $0x248] sm:$0xff]
      %v708 = vld [vmem:[%s1 + $0x250] sm:$0xff]
      %v709 = vld [vmem:[%s1 + $0x258] sm:$0xff]
      %v710 = vld [vmem:[%s1 + $0x260] sm:$0xff]
      %v711 = vld [vmem:[%s1 + $0x268] sm:$0xff]
      %v712 = vld [vmem:[%s1 + $0x270] sm:$0xff]
      %v713 = vld [vmem:[%s1 + $0x278] sm:$0xff]
      %v714 = vld [vmem:[%s1 + $0x280] sm:$0xff]
      %v715 = vld [vmem:[%s1 + $0x288] sm:$0xff]
      %v716 = vld [vmem:[%s1 + $0x290] sm:$0xff]
      %v717 = vld [vmem:[%s1 + $0x298] sm:$0xff]
      %v718 = vld [vmem:[%s1 + $0x2a0] sm:$0xff]
      %v719 = vld [vmem:[%s1 + $0x2a8] sm:$0xff]
      %v720 = vld [vmem:[%s1 + $0x2b0] sm:$0xff]
      %v721 = vld [vmem:[%s1 + $0x2b8] sm:$0xff]
      %v722 = vld [vmem:[%s1 + $0x2c0] sm:$0xff]
      %v723 = vld [vmem:[%s1 + $0x2c8] sm:$0xff]
      %v724 = vld [vmem:[%s1 + $0x2d0] sm:$0xff]
      %v725 = vld [vmem:[%s1 + $0x2d8] sm:$0xff]
      %v726 = vld [vmem:[%s1 + $0x2e0] sm:$0xff]
      %v727 = vld [vmem:[%s1 + $0x2e8] sm:$0xff]
      %v728 = vld [vmem:[%s1 + $0x2f0] sm:$0xff]
      %v729 = vld [vmem:[%s1 + $0x2f8] sm:$0xff]
      %v730 = vld [vmem:[%s1 + $0x300] sm:$0xff]
      %v731 = vld [vmem:[%s1 + $0x308] sm:$0xff]
      %v732 = vld [vmem:[%s1 + $0x310] sm:$0xff]
      %v733 = vld [vmem:[%s1 + $0x318] sm:$0xff]
      %v734 = vld [vmem:[%s1 + $0x320] sm:$0xff]
      %v735 = vld [vmem:[%s1 + $0x328] sm:$0xff]
      %v736 = vld [vmem:[%s1 + $0x330] sm:$0xff]
      %v737 = vld [vmem:[%s1 + $0x338] sm:$0xff]
      %v738 = vld [vmem:[%s1 + $0x340] sm:$0xff]
      %v739 = vld [vmem:[%s1 + $0x348] sm:$0xff]
      %v740 = vld [vmem:[%s1 + $0x350] sm:$0xff]
      %v741 = vld [vmem:[%s1 + $0x358] sm:$0xff]
      %v742 = vld [vmem:[%s1 + $0x360] sm:$0xff]
      %v743 = vld [vmem:[%s1 + $0x368] sm:$0xff]
      %v744 = vld [vmem:[%s1 + $0x370] sm:$0xff]
      %v745 = vld [vmem:[%s1 + $0x378] sm:$0xff]
      %v746 = vld [vmem:[%s1 + $0x380] sm:$0xff]
      %v747 = vld [vmem:[%s1 + $0x388] sm:$0xff]
      %v748 = vld [vmem:[%s1 + $0x390] sm:$0xff]
      %v749 = vld [vmem:[%s1 + $0x398] sm:$0xff]
      %v750 = vld [vmem:[%s1 + $0x3a0] sm:$0xff]
      %v751 = vld [vmem:[%s1 + $0x3a8] sm:$0xff]
      %v752 = vld [vmem:[%s1 + $0x3b0] sm:$0xff]
      %v753 = vld [vmem:[%s1 + $0x3b8] sm:$0xff]
      %v754 = vld [vmem:[%s1 + $0x3c0] sm:$0xff]
      %v755 = vld [vmem:[%s1 + $0x3c8] sm:$0xff]
      %v756 = vld [vmem:[%s1 + $0x3d0] sm:$0xff]
      %v757 = vld [vmem:[%s1 + $0x3d8] sm:$0xff]
      %v758 = vld [vmem:[%s1 + $0x3e0] sm:$0xff]
      %v759 = vld [vmem:[%s1 + $0x3e8] sm:$0xff]
      %v760 = vld [vmem:[%s1 + $0x3f0] sm:$0xff]
      %v761 = vld [vmem:[%s1 + $0x3f8] sm:$0xff]
      %v762 = vld [vmem:[%s1 + $0x400] sm:$0xff]
      %v763 = vld [vmem:[%s1 + $0x408] sm:$0xff]
      %v764 = vld [vmem:[%s1 + $0x410] sm:$0xff]
      %v765 = vld [vmem:[%s1 + $0x418] sm:$0xff]
      %v766 = vld [vmem:[%s1 + $0x420] sm:$0xff]
      %v767 = vld [vmem:[%s1 + $0x428] sm:$0xff]
      %v768 = vld [vmem:[%s1 + $0x430] sm:$0xff]
      %v769 = vld [vmem:[%s1 + $0x438] sm:$0xff]
      %v770 = vld [vmem:[%s1 + $0x440] sm:$0xff]
      %v771 = vld [vmem:[%s1 + $0x448] sm:$0xff]
      %v772 = vld [vmem:[%s1 + $0x450] sm:$0xff]
      %v773 = vld [vmem:[%s1 + $0x458] sm:$0xff]
      %v774 = vld [vmem:[%s1 + $0x460] sm:$0xff]
      %v775 = vld [vmem:[%s1 + $0x468] sm:$0xff]
      %v776 = vld [vmem:[%s1 + $0x470] sm:$0xff]
      %v777 = vld [vmem:[%s1 + $0x478] sm:$0xff]
      %v778 = vld [vmem:[%s2] sm:$0x1]
      %v780 = vperm.slane %v778, 0
      %782 = vmatpush.msra.mxu0 %v649
      %783 = vmatpush.msra.mxu0 %v648
      %784 = vmatpush.msra.mxu0 %v647
      %785 = vmatpush.msra.mxu0 %v646
      %786 = vmatpush.msra.mxu0 %v645
      %787 = vmatpush.msra.mxu0 %v644
      %788 = vmatpush.msra.mxu0 %v643
      %789 = vmatpush.msra.mxu0 %v642
      %790 = vmatpush.msra.mxu0 %v641
      %791 = vmatpush.msra.mxu0 %v640
      %792 = vmatpush.msra.mxu0 %v639
      %793 = vmatpush.msra.mxu0 %v638
      %794 = vmatpush.msra.mxu0 %v637
      %795 = vmatpush.msra.mxu0 %v636
      %796 = vmatpush.msra.mxu0 %v635
      %797 = vmatpush.msra.mxu0 %v634
      %798 = vmatmul.f32.gmra.mxu0 %v345
      %v799 = vpop.f32.mrf.mxu0
      %v800 = vadd.f32 %v780, %v799
      %801 = vmatmul.f32.gmra.mxu0 %v346
      %v802 = vpop.f32.mrf.mxu0
      %v803 = vadd.f32 %v780, %v802
      %804 = vmatmul.f32.gmra.mxu0 %v347
      %v805 = vpop.f32.mrf.mxu0
      %v806 = vadd.f32 %v780, %v805
      %807 = vmatmul.f32.gmra.mxu0 %v348
      %v808 = vpop.f32.mrf.mxu0
      %v809 = vadd.f32 %v780, %v808
      %810 = vmatmul.f32.gmra.mxu0 %v349
      %v811 = vpop.f32.mrf.mxu0
      %v812 = vadd.f32 %v780, %v811
      %813 = vmatmul.f32.gmra.mxu0 %v350
      %v814 = vpop.f32.mrf.mxu0
      %v815 = vadd.f32 %v780, %v814
      %816 = vmatmul.f32.gmra.mxu0 %v351
      %v817 = vpop.f32.mrf.mxu0
      %v818 = vadd.f32 %v780, %v817
      %819 = vmatmul.f32.gmra.mxu0 %v352
      %v820 = vpop.f32.mrf.mxu0
      %v821 = vadd.f32 %v780, %v820
      %822 = vmatmul.f32.gmra.mxu0 %v353
      %v823 = vpop.f32.mrf.mxu0
      %v824 = vadd.f32 %v780, %v823
      %825 = vmatmul.f32.gmra.mxu0 %v354
      %v826 = vpop.f32.mrf.mxu0
      %v827 = vadd.f32 %v780, %v826
      %828 = vmatmul.f32.gmra.mxu0 %v355
      %v829 = vpop.f32.mrf.mxu0
      %v830 = vadd.f32 %v780, %v829
      %831 = vmatmul.f32.gmra.mxu0 %v356
      %v832 = vpop.f32.mrf.mxu0
      %v833 = vadd.f32 %v780, %v832
      %834 = vmatmul.f32.gmra.mxu0 %v357
      %v835 = vpop.f32.mrf.mxu0
      %v836 = vadd.f32 %v780, %v835
      %837 = vmatmul.f32.gmra.mxu0 %v358
      %v838 = vpop.f32.mrf.mxu0
      %v839 = vadd.f32 %v780, %v838
      %840 = vmatmul.f32.gmra.mxu0 %v359
      %v841 = vpop.f32.mrf.mxu0
      %v842 = vadd.f32 %v780, %v841
      %843 = vmatmul.f32.gmra.mxu0 %v360
      %v844 = vpop.f32.mrf.mxu0
      %v845 = vadd.f32 %v780, %v844
      %846 = vmatmul.f32.gmra.mxu0 %v361
      %v847 = vpop.f32.mrf.mxu0
      %v848 = vadd.f32 %v780, %v847
      %849 = vmatmul.f32.gmra.mxu0 %v362
      %v850 = vpop.f32.mrf.mxu0
      %v851 = vadd.f32 %v780, %v850
      %852 = vmatmul.f32.gmra.mxu0 %v363
      %v853 = vpop.f32.mrf.mxu0
      %v854 = vadd.f32 %v780, %v853
      %855 = vmatmul.f32.gmra.mxu0 %v364
      %v856 = vpop.f32.mrf.mxu0
      %v857 = vadd.f32 %v780, %v856
      %858 = vmatmul.f32.gmra.mxu0 %v365
      %v859 = vpop.f32.mrf.mxu0
      %v860 = vadd.f32 %v780, %v859
      %861 = vmatmul.f32.gmra.mxu0 %v366
      %v862 = vpop.f32.mrf.mxu0
      %v863 = vadd.f32 %v780, %v862
      %864 = vmatmul.f32.gmra.mxu0 %v367
      %v865 = vpop.f32.mrf.mxu0
      %v866 = vadd.f32 %v780, %v865
      %867 = vmatmul.f32.gmra.mxu0 %v368
      %v868 = vpop.f32.mrf.mxu0
      %v869 = vadd.f32 %v780, %v868
      %870 = vmatmul.f32.gmra.mxu0 %v369
      %v871 = vpop.f32.mrf.mxu0
      %v872 = vadd.f32 %v780, %v871
      %873 = vmatmul.f32.gmra.mxu0 %v370
      %v874 = vpop.f32.mrf.mxu0
      %v875 = vadd.f32 %v780, %v874
      %876 = vmatmul.f32.gmra.mxu0 %v371
      %v877 = vpop.f32.mrf.mxu0
      %v878 = vadd.f32 %v780, %v877
      %879 = vmatmul.f32.gmra.mxu0 %v372
      %v880 = vpop.f32.mrf.mxu0
      %v881 = vadd.f32 %v780, %v880
      %882 = vmatmul.f32.gmra.mxu0 %v373
      %v883 = vpop.f32.mrf.mxu0
      %v884 = vadd.f32 %v780, %v883
      %885 = vmatmul.f32.gmra.mxu0 %v374
      %v886 = vpop.f32.mrf.mxu0
      %v887 = vadd.f32 %v780, %v886
      %888 = vmatmul.f32.gmra.mxu0 %v375
      %v889 = vpop.f32.mrf.mxu0
      %v890 = vadd.f32 %v780, %v889
      %891 = vmatmul.f32.gmra.mxu0 %v376
      %v892 = vpop.f32.mrf.mxu0
      %v893 = vadd.f32 %v780, %v892
      %894 = vdwg.mxu0
      %895 = vmatpush.msra.mxu0 %v665
      %896 = vmatpush.msra.mxu0 %v664
      %897 = vmatpush.msra.mxu0 %v663
      %898 = vmatpush.msra.mxu0 %v662
      %899 = vmatpush.msra.mxu0 %v661
      %900 = vmatpush.msra.mxu0 %v660
      %901 = vmatpush.msra.mxu0 %v659
      %902 = vmatpush.msra.mxu0 %v658
      %903 = vmatpush.msra.mxu0 %v657
      %904 = vmatpush.msra.mxu0 %v656
      %905 = vmatpush.msra.mxu0 %v655
      %906 = vmatpush.msra.mxu0 %v654
      %907 = vmatpush.msra.mxu0 %v653
      %908 = vmatpush.msra.mxu0 %v652
      %909 = vmatpush.msra.mxu0 %v651
      %910 = vmatpush.msra.mxu0 %v650
      %911 = vmatmul.f32.gmra.mxu0 %v377
      %v912 = vpop.f32.mrf.mxu0
      %v913 = vadd.f32 %v800, %v912
      %914 = vmatmul.f32.gmra.mxu0 %v378
      %v915 = vpop.f32.mrf.mxu0
      %v916 = vadd.f32 %v803, %v915
      %917 = vmatmul.f32.gmra.mxu0 %v379
      %v918 = vpop.f32.mrf.mxu0
      %v919 = vadd.f32 %v806, %v918
      %920 = vmatmul.f32.gmra.mxu0 %v380
      %v921 = vpop.f32.mrf.mxu0
      %v922 = vadd.f32 %v809, %v921
      %923 = vmatmul.f32.gmra.mxu0 %v381
      %v924 = vpop.f32.mrf.mxu0
      %v925 = vadd.f32 %v812, %v924
      %926 = vmatmul.f32.gmra.mxu0 %v382
      %v927 = vpop.f32.mrf.mxu0
      %v928 = vadd.f32 %v815, %v927
      %929 = vmatmul.f32.gmra.mxu0 %v383
      %v930 = vpop.f32.mrf.mxu0
      %v931 = vadd.f32 %v818, %v930
      %932 = vmatmul.f32.gmra.mxu0 %v384
      %v933 = vpop.f32.mrf.mxu0
      %v934 = vadd.f32 %v821, %v933
      %935 = vmatmul.f32.gmra.mxu0 %v385
      %v936 = vpop.f32.mrf.mxu0
      %v937 = vadd.f32 %v824, %v936
      %938 = vmatmul.f32.gmra.mxu0 %v386
      %v939 = vpop.f32.mrf.mxu0
      %v940 = vadd.f32 %v827, %v939
      %941 = vmatmul.f32.gmra.mxu0 %v387
      %v942 = vpop.f32.mrf.mxu0
      %v943 = vadd.f32 %v830, %v942
      %944 = vmatmul.f32.gmra.mxu0 %v388
      %v945 = vpop.f32.mrf.mxu0
      %v946 = vadd.f32 %v833, %v945
      %947 = vmatmul.f32.gmra.mxu0 %v389
      %v948 = vpop.f32.mrf.mxu0
      %v949 = vadd.f32 %v836, %v948
      %950 = vmatmul.f32.gmra.mxu0 %v390
      %v951 = vpop.f32.mrf.mxu0
      %v952 = vadd.f32 %v839, %v951
      %953 = vmatmul.f32.gmra.mxu0 %v391
      %v954 = vpop.f32.mrf.mxu0
      %v955 = vadd.f32 %v842, %v954
      %956 = vmatmul.f32.gmra.mxu0 %v392
      %v957 = vpop.f32.mrf.mxu0
      %v958 = vadd.f32 %v845, %v957
      %959 = vmatmul.f32.gmra.mxu0 %v393
      %v960 = vpop.f32.mrf.mxu0
      %v961 = vadd.f32 %v848, %v960
      %962 = vmatmul.f32.gmra.mxu0 %v394
      %v963 = vpop.f32.mrf.mxu0
      %v964 = vadd.f32 %v851, %v963
      %965 = vmatmul.f32.gmra.mxu0 %v395
      %v966 = vpop.f32.mrf.mxu0
      %v967 = vadd.f32 %v854, %v966
      %968 = vmatmul.f32.gmra.mxu0 %v396
      %v969 = vpop.f32.mrf.mxu0
      %v970 = vadd.f32 %v857, %v969
      %971 = vmatmul.f32.gmra.mxu0 %v397
      %v972 = vpop.f32.mrf.mxu0
      %v973 = vadd.f32 %v860, %v972
      %974 = vmatmul.f32.gmra.mxu0 %v398
      %v975 = vpop.f32.mrf.mxu0
      %v976 = vadd.f32 %v863, %v975
      %977 = vmatmul.f32.gmra.mxu0 %v399
      %v978 = vpop.f32.mrf.mxu0
      %v979 = vadd.f32 %v866, %v978
      %980 = vmatmul.f32.gmra.mxu0 %v400
      %v981 = vpop.f32.mrf.mxu0
      %v982 = vadd.f32 %v869, %v981
      %983 = vmatmul.f32.gmra.mxu0 %v401
      %v984 = vpop.f32.mrf.mxu0
      %v985 = vadd.f32 %v872, %v984
      %986 = vmatmul.f32.gmra.mxu0 %v402
      %v987 = vpop.f32.mrf.mxu0
      %v988 = vadd.f32 %v875, %v987
      %989 = vmatmul.f32.gmra.mxu0 %v403
      %v990 = vpop.f32.mrf.mxu0
      %v991 = vadd.f32 %v878, %v990
      %992 = vmatmul.f32.gmra.mxu0 %v404
      %v993 = vpop.f32.mrf.mxu0
      %v994 = vadd.f32 %v881, %v993
      %995 = vmatmul.f32.gmra.mxu0 %v405
      %v996 = vpop.f32.mrf.mxu0
      %v997 = vadd.f32 %v884, %v996
      %998 = vmatmul.f32.gmra.mxu0 %v406
      %v999 = vpop.f32.mrf.mxu0
      %v1000 = vadd.f32 %v887, %v999
      %1001 = vmatmul.f32.gmra.mxu0 %v407
      %v1002 = vpop.f32.mrf.mxu0
      %v1003 = vadd.f32 %v890, %v1002
      %1004 = vmatmul.f32.gmra.mxu0 %v408
      %v1005 = vpop.f32.mrf.mxu0
      %v1006 = vadd.f32 %v893, %v1005
      %1007 = vdwg.mxu0
      %1008 = vmatpush.msra.mxu0 %v681
      %1009 = vmatpush.msra.mxu0 %v680
      %1010 = vmatpush.msra.mxu0 %v679
      %1011 = vmatpush.msra.mxu0 %v678
      %1012 = vmatpush.msra.mxu0 %v677
      %1013 = vmatpush.msra.mxu0 %v676
      %1014 = vmatpush.msra.mxu0 %v675
      %1015 = vmatpush.msra.mxu0 %v674
      %1016 = vmatpush.msra.mxu0 %v673
      %1017 = vmatpush.msra.mxu0 %v672
      %1018 = vmatpush.msra.mxu0 %v671
      %1019 = vmatpush.msra.mxu0 %v670
      %1020 = vmatpush.msra.mxu0 %v669
      %1021 = vmatpush.msra.mxu0 %v668
      %1022 = vmatpush.msra.mxu0 %v667
      %1023 = vmatpush.msra.mxu0 %v666
      %1024 = vmatmul.f32.gmra.mxu0 %v409
      %v1025 = vpop.f32.mrf.mxu0
      %v1026 = vadd.f32 %v913, %v1025
      %1027 = vmatmul.f32.gmra.mxu0 %v410
      %v1028 = vpop.f32.mrf.mxu0
      %v1029 = vadd.f32 %v916, %v1028
      %1030 = vmatmul.f32.gmra.mxu0 %v411
      %v1031 = vpop.f32.mrf.mxu0
      %v1032 = vadd.f32 %v919, %v1031
      %1033 = vmatmul.f32.gmra.mxu0 %v412
      %v1034 = vpop.f32.mrf.mxu0
      %v1035 = vadd.f32 %v922, %v1034
      %1036 = vmatmul.f32.gmra.mxu0 %v413
      %v1037 = vpop.f32.mrf.mxu0
      %v1038 = vadd.f32 %v925, %v1037
      %1039 = vmatmul.f32.gmra.mxu0 %v414
      %v1040 = vpop.f32.mrf.mxu0
      %v1041 = vadd.f32 %v928, %v1040
      %1042 = vmatmul.f32.gmra.mxu0 %v415
      %v1043 = vpop.f32.mrf.mxu0
      %v1044 = vadd.f32 %v931, %v1043
      %1045 = vmatmul.f32.gmra.mxu0 %v416
      %v1046 = vpop.f32.mrf.mxu0
      %v1047 = vadd.f32 %v934, %v1046
      %1048 = vmatmul.f32.gmra.mxu0 %v417
      %v1049 = vpop.f32.mrf.mxu0
      %v1050 = vadd.f32 %v937, %v1049
      %1051 = vmatmul.f32.gmra.mxu0 %v418
      %v1052 = vpop.f32.mrf.mxu0
      %v1053 = vadd.f32 %v940, %v1052
      %1054 = vmatmul.f32.gmra.mxu0 %v419
      %v1055 = vpop.f32.mrf.mxu0
      %v1056 = vadd.f32 %v943, %v1055
      %1057 = vmatmul.f32.gmra.mxu0 %v420
      %v1058 = vpop.f32.mrf.mxu0
      %v1059 = vadd.f32 %v946, %v1058
      %1060 = vmatmul.f32.gmra.mxu0 %v421
      %v1061 = vpop.f32.mrf.mxu0
      %v1062 = vadd.f32 %v949, %v1061
      %1063 = vmatmul.f32.gmra.mxu0 %v422
      %v1064 = vpop.f32.mrf.mxu0
      %v1065 = vadd.f32 %v952, %v1064
      %1066 = vmatmul.f32.gmra.mxu0 %v423
      %v1067 = vpop.f32.mrf.mxu0
      %v1068 = vadd.f32 %v955, %v1067
      %1069 = vmatmul.f32.gmra.mxu0 %v424
      %v1070 = vpop.f32.mrf.mxu0
      %v1071 = vadd.f32 %v958, %v1070
      %1072 = vmatmul.f32.gmra.mxu0 %v425
      %v1073 = vpop.f32.mrf.mxu0
      %v1074 = vadd.f32 %v961, %v1073
      %1075 = vmatmul.f32.gmra.mxu0 %v426
      %v1076 = vpop.f32.mrf.mxu0
      %v1077 = vadd.f32 %v964, %v1076
      %1078 = vmatmul.f32.gmra.mxu0 %v427
      %v1079 = vpop.f32.mrf.mxu0
      %v1080 = vadd.f32 %v967, %v1079
      %1081 = vmatmul.f32.gmra.mxu0 %v428
      %v1082 = vpop.f32.mrf.mxu0
      %v1083 = vadd.f32 %v970, %v1082
      %1084 = vmatmul.f32.gmra.mxu0 %v429
      %v1085 = vpop.f32.mrf.mxu0
      %v1086 = vadd.f32 %v973, %v1085
      %1087 = vmatmul.f32.gmra.mxu0 %v430
      %v1088 = vpop.f32.mrf.mxu0
      %v1089 = vadd.f32 %v976, %v1088
      %1090 = vmatmul.f32.gmra.mxu0 %v431
      %v1091 = vpop.f32.mrf.mxu0
      %v1092 = vadd.f32 %v979, %v1091
      %1093 = vmatmul.f32.gmra.mxu0 %v432
      %v1094 = vpop.f32.mrf.mxu0
      %v1095 = vadd.f32 %v982, %v1094
      %1096 = vmatmul.f32.gmra.mxu0 %v433
      %v1097 = vpop.f32.mrf.mxu0
      %v1098 = vadd.f32 %v985, %v1097
      %1099 = vmatmul.f32.gmra.mxu0 %v434
      %v1100 = vpop.f32.mrf.mxu0
      %v1101 = vadd.f32 %v988, %v1100
      %1102 = vmatmul.f32.gmra.mxu0 %v435
      %v1103 = vpop.f32.mrf.mxu0
      %v1104 = vadd.f32 %v991, %v1103
      %1105 = vmatmul.f32.gmra.mxu0 %v436
      %v1106 = vpop.f32.mrf.mxu0
      %v1107 = vadd.f32 %v994, %v1106
      %1108 = vmatmul.f32.gmra.mxu0 %v437
      %v1109 = vpop.f32.mrf.mxu0
      %v1110 = vadd.f32 %v997, %v1109
      %1111 = vmatmul.f32.gmra.mxu0 %v438
      %v1112 = vpop.f32.mrf.mxu0
      %v1113 = vadd.f32 %v1000, %v1112
      %1114 = vmatmul.f32.gmra.mxu0 %v439
      %v1115 = vpop.f32.mrf.mxu0
      %v1116 = vadd.f32 %v1003, %v1115
      %1117 = vmatmul.f32.gmra.mxu0 %v440
      %v1118 = vpop.f32.mrf.mxu0
      %v1119 = vadd.f32 %v1006, %v1118
      %1120 = vdwg.mxu0
      %1121 = vmatpush.msra.mxu0 %v697
      %1122 = vmatpush.msra.mxu0 %v696
      %1123 = vmatpush.msra.mxu0 %v695
      %1124 = vmatpush.msra.mxu0 %v694
      %1125 = vmatpush.msra.mxu0 %v693
      %1126 = vmatpush.msra.mxu0 %v692
      %1127 = vmatpush.msra.mxu0 %v691
      %1128 = vmatpush.msra.mxu0 %v690
      %1129 = vmatpush.msra.mxu0 %v689
      %1130 = vmatpush.msra.mxu0 %v688
      %1131 = vmatpush.msra.mxu0 %v687
      %1132 = vmatpush.msra.mxu0 %v686
      %1133 = vmatpush.msra.mxu0 %v685
      %1134 = vmatpush.msra.mxu0 %v684
      %1135 = vmatpush.msra.mxu0 %v683
      %1136 = vmatpush.msra.mxu0 %v682
      %1137 = vmatmul.f32.gmra.mxu0 %v441
      %v1138 = vpop.f32.mrf.mxu0
      %v1139 = vadd.f32 %v1026, %v1138
      %1140 = vmatmul.f32.gmra.mxu0 %v442
      %v1141 = vpop.f32.mrf.mxu0
      %v1142 = vadd.f32 %v1029, %v1141
      %1143 = vmatmul.f32.gmra.mxu0 %v443
      %v1144 = vpop.f32.mrf.mxu0
      %v1145 = vadd.f32 %v1032, %v1144
      %1146 = vmatmul.f32.gmra.mxu0 %v444
      %v1147 = vpop.f32.mrf.mxu0
      %v1148 = vadd.f32 %v1035, %v1147
      %1149 = vmatmul.f32.gmra.mxu0 %v445
      %v1150 = vpop.f32.mrf.mxu0
      %v1151 = vadd.f32 %v1038, %v1150
      %1152 = vmatmul.f32.gmra.mxu0 %v446
      %v1153 = vpop.f32.mrf.mxu0
      %v1154 = vadd.f32 %v1041, %v1153
      %1155 = vmatmul.f32.gmra.mxu0 %v447
      %v1156 = vpop.f32.mrf.mxu0
      %v1157 = vadd.f32 %v1044, %v1156
      %1158 = vmatmul.f32.gmra.mxu0 %v448
      %v1159 = vpop.f32.mrf.mxu0
      %v1160 = vadd.f32 %v1047, %v1159
      %1161 = vmatmul.f32.gmra.mxu0 %v449
      %v1162 = vpop.f32.mrf.mxu0
      %v1163 = vadd.f32 %v1050, %v1162
      %1164 = vmatmul.f32.gmra.mxu0 %v450
      %v1165 = vpop.f32.mrf.mxu0
      %v1166 = vadd.f32 %v1053, %v1165
      %1167 = vmatmul.f32.gmra.mxu0 %v451
      %v1168 = vpop.f32.mrf.mxu0
      %v1169 = vadd.f32 %v1056, %v1168
      %1170 = vmatmul.f32.gmra.mxu0 %v452
      %v1171 = vpop.f32.mrf.mxu0
      %v1172 = vadd.f32 %v1059, %v1171
      %1173 = vmatmul.f32.gmra.mxu0 %v453
      %v1174 = vpop.f32.mrf.mxu0
      %v1175 = vadd.f32 %v1062, %v1174
      %1176 = vmatmul.f32.gmra.mxu0 %v454
      %v1177 = vpop.f32.mrf.mxu0
      %v1178 = vadd.f32 %v1065, %v1177
      %1179 = vmatmul.f32.gmra.mxu0 %v455
      %v1180 = vpop.f32.mrf.mxu0
      %v1181 = vadd.f32 %v1068, %v1180
      %1182 = vmatmul.f32.gmra.mxu0 %v456
      %v1183 = vpop.f32.mrf.mxu0
      %v1184 = vadd.f32 %v1071, %v1183
      %1185 = vmatmul.f32.gmra.mxu0 %v457
      %v1186 = vpop.f32.mrf.mxu0
      %v1187 = vadd.f32 %v1074, %v1186
      %1188 = vmatmul.f32.gmra.mxu0 %v458
      %v1189 = vpop.f32.mrf.mxu0
      %v1190 = vadd.f32 %v1077, %v1189
      %1191 = vmatmul.f32.gmra.mxu0 %v459
      %v1192 = vpop.f32.mrf.mxu0
      %v1193 = vadd.f32 %v1080, %v1192
      %1194 = vmatmul.f32.gmra.mxu0 %v460
      %v1195 = vpop.f32.mrf.mxu0
      %v1196 = vadd.f32 %v1083, %v1195
      %1197 = vmatmul.f32.gmra.mxu0 %v461
      %v1198 = vpop.f32.mrf.mxu0
      %v1199 = vadd.f32 %v1086, %v1198
      %1200 = vmatmul.f32.gmra.mxu0 %v462
      %v1201 = vpop.f32.mrf.mxu0
      %v1202 = vadd.f32 %v1089, %v1201
      %1203 = vmatmul.f32.gmra.mxu0 %v463
      %v1204 = vpop.f32.mrf.mxu0
      %v1205 = vadd.f32 %v1092, %v1204
      %1206 = vmatmul.f32.gmra.mxu0 %v464
      %v1207 = vpop.f32.mrf.mxu0
      %v1208 = vadd.f32 %v1095, %v1207
      %1209 = vmatmul.f32.gmra.mxu0 %v465
      %v1210 = vpop.f32.mrf.mxu0
      %v1211 = vadd.f32 %v1098, %v1210
      %1212 = vmatmul.f32.gmra.mxu0 %v466
      %v1213 = vpop.f32.mrf.mxu0
      %v1214 = vadd.f32 %v1101, %v1213
      %1215 = vmatmul.f32.gmra.mxu0 %v467
      %v1216 = vpop.f32.mrf.mxu0
      %v1217 = vadd.f32 %v1104, %v1216
      %1218 = vmatmul.f32.gmra.mxu0 %v468
      %v1219 = vpop.f32.mrf.mxu0
      %v1220 = vadd.f32 %v1107, %v1219
      %1221 = vmatmul.f32.gmra.mxu0 %v469
      %v1222 = vpop.f32.mrf.mxu0
      %v1223 = vadd.f32 %v1110, %v1222
      %1224 = vmatmul.f32.gmra.mxu0 %v470
      %v1225 = vpop.f32.mrf.mxu0
      %v1226 = vadd.f32 %v1113, %v1225
      %1227 = vmatmul.f32.gmra.mxu0 %v471
      %v1228 = vpop.f32.mrf.mxu0
      %v1229 = vadd.f32 %v1116, %v1228
      %1230 = vmatmul.f32.gmra.mxu0 %v472
      %v1231 = vpop.f32.mrf.mxu0
      %v1232 = vadd.f32 %v1119, %v1231
      %1233 = vdwg.mxu0
      %1234 = vmatpush.msra.mxu0 %v713
      %1235 = vmatpush.msra.mxu0 %v712
      %1236 = vmatpush.msra.mxu0 %v711
      %1237 = vmatpush.msra.mxu0 %v710
      %1238 = vmatpush.msra.mxu0 %v709
      %1239 = vmatpush.msra.mxu0 %v708
      %1240 = vmatpush.msra.mxu0 %v707
      %1241 = vmatpush.msra.mxu0 %v706
      %1242 = vmatpush.msra.mxu0 %v705
      %1243 = vmatpush.msra.mxu0 %v704
      %1244 = vmatpush.msra.mxu0 %v703
      %1245 = vmatpush.msra.mxu0 %v702
      %1246 = vmatpush.msra.mxu0 %v701
      %1247 = vmatpush.msra.mxu0 %v700
      %1248 = vmatpush.msra.mxu0 %v699
      %1249 = vmatpush.msra.mxu0 %v698
      %1250 = vmatmul.f32.gmra.mxu0 %v473
      %v1251 = vpop.f32.mrf.mxu0
      %v1252 = vadd.f32 %v1139, %v1251
      %1253 = vmatmul.f32.gmra.mxu0 %v474
      %v1254 = vpop.f32.mrf.mxu0
      %v1255 = vadd.f32 %v1142, %v1254
      %1256 = vmatmul.f32.gmra.mxu0 %v475
      %v1257 = vpop.f32.mrf.mxu0
      %v1258 = vadd.f32 %v1145, %v1257
      %1259 = vmatmul.f32.gmra.mxu0 %v476
      %v1260 = vpop.f32.mrf.mxu0
      %v1261 = vadd.f32 %v1148, %v1260
      %1262 = vmatmul.f32.gmra.mxu0 %v477
      %v1263 = vpop.f32.mrf.mxu0
      %v1264 = vadd.f32 %v1151, %v1263
      %1265 = vmatmul.f32.gmra.mxu0 %v478
      %v1266 = vpop.f32.mrf.mxu0
      %v1267 = vadd.f32 %v1154, %v1266
      %1268 = vmatmul.f32.gmra.mxu0 %v479
      %v1269 = vpop.f32.mrf.mxu0
      %v1270 = vadd.f32 %v1157, %v1269
      %1271 = vmatmul.f32.gmra.mxu0 %v480
      %v1272 = vpop.f32.mrf.mxu0
      %v1273 = vadd.f32 %v1160, %v1272
      %1274 = vmatmul.f32.gmra.mxu0 %v481
      %v1275 = vpop.f32.mrf.mxu0
      %v1276 = vadd.f32 %v1163, %v1275
      %1277 = vmatmul.f32.gmra.mxu0 %v482
      %v1278 = vpop.f32.mrf.mxu0
      %v1279 = vadd.f32 %v1166, %v1278
      %1280 = vmatmul.f32.gmra.mxu0 %v483
      %v1281 = vpop.f32.mrf.mxu0
      %v1282 = vadd.f32 %v1169, %v1281
      %1283 = vmatmul.f32.gmra.mxu0 %v484
      %v1284 = vpop.f32.mrf.mxu0
      %v1285 = vadd.f32 %v1172, %v1284
      %1286 = vmatmul.f32.gmra.mxu0 %v485
      %v1287 = vpop.f32.mrf.mxu0
      %v1288 = vadd.f32 %v1175, %v1287
      %1289 = vmatmul.f32.gmra.mxu0 %v486
      %v1290 = vpop.f32.mrf.mxu0
      %v1291 = vadd.f32 %v1178, %v1290
      %1292 = vmatmul.f32.gmra.mxu0 %v487
      %v1293 = vpop.f32.mrf.mxu0
      %v1294 = vadd.f32 %v1181, %v1293
      %1295 = vmatmul.f32.gmra.mxu0 %v488
      %v1296 = vpop.f32.mrf.mxu0
      %v1297 = vadd.f32 %v1184, %v1296
      %1298 = vmatmul.f32.gmra.mxu0 %v489
      %v1299 = vpop.f32.mrf.mxu0
      %v1300 = vadd.f32 %v1187, %v1299
      %1301 = vmatmul.f32.gmra.mxu0 %v490
      %v1302 = vpop.f32.mrf.mxu0
      %v1303 = vadd.f32 %v1190, %v1302
      %1304 = vmatmul.f32.gmra.mxu0 %v491
      %v1305 = vpop.f32.mrf.mxu0
      %v1306 = vadd.f32 %v1193, %v1305
      %1307 = vmatmul.f32.gmra.mxu0 %v492
      %v1308 = vpop.f32.mrf.mxu0
      %v1309 = vadd.f32 %v1196, %v1308
      %1310 = vmatmul.f32.gmra.mxu0 %v493
      %v1311 = vpop.f32.mrf.mxu0
      %v1312 = vadd.f32 %v1199, %v1311
      %1313 = vmatmul.f32.gmra.mxu0 %v494
      %v1314 = vpop.f32.mrf.mxu0
      %v1315 = vadd.f32 %v1202, %v1314
      %1316 = vmatmul.f32.gmra.mxu0 %v495
      %v1317 = vpop.f32.mrf.mxu0
      %v1318 = vadd.f32 %v1205, %v1317
      %1319 = vmatmul.f32.gmra.mxu0 %v496
      %v1320 = vpop.f32.mrf.mxu0
      %v1321 = vadd.f32 %v1208, %v1320
      %1322 = vmatmul.f32.gmra.mxu0 %v497
      %v1323 = vpop.f32.mrf.mxu0
      %v1324 = vadd.f32 %v1211, %v1323
      %1325 = vmatmul.f32.gmra.mxu0 %v498
      %v1326 = vpop.f32.mrf.mxu0
      %v1327 = vadd.f32 %v1214, %v1326
      %1328 = vmatmul.f32.gmra.mxu0 %v499
      %v1329 = vpop.f32.mrf.mxu0
      %v1330 = vadd.f32 %v1217, %v1329
      %1331 = vmatmul.f32.gmra.mxu0 %v500
      %v1332 = vpop.f32.mrf.mxu0
      %v1333 = vadd.f32 %v1220, %v1332
      %1334 = vmatmul.f32.gmra.mxu0 %v501
      %v1335 = vpop.f32.mrf.mxu0
      %v1336 = vadd.f32 %v1223, %v1335
      %1337 = vmatmul.f32.gmra.mxu0 %v502
      %v1338 = vpop.f32.mrf.mxu0
      %v1339 = vadd.f32 %v1226, %v1338
      %1340 = vmatmul.f32.gmra.mxu0 %v503
      %v1341 = vpop.f32.mrf.mxu0
      %v1342 = vadd.f32 %v1229, %v1341
      %1343 = vmatmul.f32.gmra.mxu0 %v504
      %v1344 = vpop.f32.mrf.mxu0
      %v1345 = vadd.f32 %v1232, %v1344
      %1346 = vdwg.mxu0
      %1347 = vmatpush.msra.mxu0 %v729
      %1348 = vmatpush.msra.mxu0 %v728
      %1349 = vmatpush.msra.mxu0 %v727
      %1350 = vmatpush.msra.mxu0 %v726
      %1351 = vmatpush.msra.mxu0 %v725
      %1352 = vmatpush.msra.mxu0 %v724
      %1353 = vmatpush.msra.mxu0 %v723
      %1354 = vmatpush.msra.mxu0 %v722
      %1355 = vmatpush.msra.mxu0 %v721
      %1356 = vmatpush.msra.mxu0 %v720
      %1357 = vmatpush.msra.mxu0 %v719
      %1358 = vmatpush.msra.mxu0 %v718
      %1359 = vmatpush.msra.mxu0 %v717
      %1360 = vmatpush.msra.mxu0 %v716
      %1361 = vmatpush.msra.mxu0 %v715
      %1362 = vmatpush.msra.mxu0 %v714
      %1363 = vmatmul.f32.gmra.mxu0 %v505
      %v1364 = vpop.f32.mrf.mxu0
      %v1365 = vadd.f32 %v1252, %v1364
      %1366 = vmatmul.f32.gmra.mxu0 %v506
      %v1367 = vpop.f32.mrf.mxu0
      %v1368 = vadd.f32 %v1255, %v1367
      %1369 = vmatmul.f32.gmra.mxu0 %v507
      %v1370 = vpop.f32.mrf.mxu0
      %v1371 = vadd.f32 %v1258, %v1370
      %1372 = vmatmul.f32.gmra.mxu0 %v508
      %v1373 = vpop.f32.mrf.mxu0
      %v1374 = vadd.f32 %v1261, %v1373
      %1375 = vmatmul.f32.gmra.mxu0 %v509
      %v1376 = vpop.f32.mrf.mxu0
      %v1377 = vadd.f32 %v1264, %v1376
      %1378 = vmatmul.f32.gmra.mxu0 %v510
      %v1379 = vpop.f32.mrf.mxu0
      %v1380 = vadd.f32 %v1267, %v1379
      %1381 = vmatmul.f32.gmra.mxu0 %v511
      %v1382 = vpop.f32.mrf.mxu0
      %v1383 = vadd.f32 %v1270, %v1382
      %1384 = vmatmul.f32.gmra.mxu0 %v512
      %v1385 = vpop.f32.mrf.mxu0
      %v1386 = vadd.f32 %v1273, %v1385
      %1387 = vmatmul.f32.gmra.mxu0 %v513
      %v1388 = vpop.f32.mrf.mxu0
      %v1389 = vadd.f32 %v1276, %v1388
      %1390 = vmatmul.f32.gmra.mxu0 %v514
      %v1391 = vpop.f32.mrf.mxu0
      %v1392 = vadd.f32 %v1279, %v1391
      %1393 = vmatmul.f32.gmra.mxu0 %v515
      %v1394 = vpop.f32.mrf.mxu0
      %v1395 = vadd.f32 %v1282, %v1394
      %1396 = vmatmul.f32.gmra.mxu0 %v516
      %v1397 = vpop.f32.mrf.mxu0
      %v1398 = vadd.f32 %v1285, %v1397
      %1399 = vmatmul.f32.gmra.mxu0 %v517
      %v1400 = vpop.f32.mrf.mxu0
      %v1401 = vadd.f32 %v1288, %v1400
      %1402 = vmatmul.f32.gmra.mxu0 %v518
      %v1403 = vpop.f32.mrf.mxu0
      %v1404 = vadd.f32 %v1291, %v1403
      %1405 = vmatmul.f32.gmra.mxu0 %v519
      %v1406 = vpop.f32.mrf.mxu0
      %v1407 = vadd.f32 %v1294, %v1406
      %1408 = vmatmul.f32.gmra.mxu0 %v520
      %v1409 = vpop.f32.mrf.mxu0
      %v1410 = vadd.f32 %v1297, %v1409
      %1411 = vmatmul.f32.gmra.mxu0 %v521
      %v1412 = vpop.f32.mrf.mxu0
      %v1413 = vadd.f32 %v1300, %v1412
      %1414 = vmatmul.f32.gmra.mxu0 %v522
      %v1415 = vpop.f32.mrf.mxu0
      %v1416 = vadd.f32 %v1303, %v1415
      %1417 = vmatmul.f32.gmra.mxu0 %v523
      %v1418 = vpop.f32.mrf.mxu0
      %v1419 = vadd.f32 %v1306, %v1418
      %1420 = vmatmul.f32.gmra.mxu0 %v524
      %v1421 = vpop.f32.mrf.mxu0
      %v1422 = vadd.f32 %v1309, %v1421
      %1423 = vmatmul.f32.gmra.mxu0 %v525
      %v1424 = vpop.f32.mrf.mxu0
      %v1425 = vadd.f32 %v1312, %v1424
      %1426 = vmatmul.f32.gmra.mxu0 %v526
      %v1427 = vpop.f32.mrf.mxu0
      %v1428 = vadd.f32 %v1315, %v1427
      %1429 = vmatmul.f32.gmra.mxu0 %v527
      %v1430 = vpop.f32.mrf.mxu0
      %v1431 = vadd.f32 %v1318, %v1430
      %1432 = vmatmul.f32.gmra.mxu0 %v528
      %v1433 = vpop.f32.mrf.mxu0
      %v1434 = vadd.f32 %v1321, %v1433
      %1435 = vmatmul.f32.gmra.mxu0 %v529
      %v1436 = vpop.f32.mrf.mxu0
      %v1437 = vadd.f32 %v1324, %v1436
      %1438 = vmatmul.f32.gmra.mxu0 %v530
      %v1439 = vpop.f32.mrf.mxu0
      %v1440 = vadd.f32 %v1327, %v1439
      %1441 = vmatmul.f32.gmra.mxu0 %v531
      %v1442 = vpop.f32.mrf.mxu0
      %v1443 = vadd.f32 %v1330, %v1442
      %1444 = vmatmul.f32.gmra.mxu0 %v532
      %v1445 = vpop.f32.mrf.mxu0
      %v1446 = vadd.f32 %v1333, %v1445
      %1447 = vmatmul.f32.gmra.mxu0 %v533
      %v1448 = vpop.f32.mrf.mxu0
      %v1449 = vadd.f32 %v1336, %v1448
      %1450 = vmatmul.f32.gmra.mxu0 %v534
      %v1451 = vpop.f32.mrf.mxu0
      %v1452 = vadd.f32 %v1339, %v1451
      %1453 = vmatmul.f32.gmra.mxu0 %v535
      %v1454 = vpop.f32.mrf.mxu0
      %v1455 = vadd.f32 %v1342, %v1454
      %1456 = vmatmul.f32.gmra.mxu0 %v536
      %v1457 = vpop.f32.mrf.mxu0
      %v1458 = vadd.f32 %v1345, %v1457
      %1459 = vdwg.mxu0
      %1460 = vmatpush.msra.mxu0 %v745
      %1461 = vmatpush.msra.mxu0 %v744
      %1462 = vmatpush.msra.mxu0 %v743
      %1463 = vmatpush.msra.mxu0 %v742
      %1464 = vmatpush.msra.mxu0 %v741
      %1465 = vmatpush.msra.mxu0 %v740
      %1466 = vmatpush.msra.mxu0 %v739
      %1467 = vmatpush.msra.mxu0 %v738
      %1468 = vmatpush.msra.mxu0 %v737
      %1469 = vmatpush.msra.mxu0 %v736
      %1470 = vmatpush.msra.mxu0 %v735
      %1471 = vmatpush.msra.mxu0 %v734
      %1472 = vmatpush.msra.mxu0 %v733
      %1473 = vmatpush.msra.mxu0 %v732
      %1474 = vmatpush.msra.mxu0 %v731
      %1475 = vmatpush.msra.mxu0 %v730
      %1476 = vmatmul.f32.gmra.mxu0 %v538
      %v1477 = vpop.f32.mrf.mxu0
      %v1478 = vadd.f32 %v1365, %v1477
      %1479 = vmatmul.f32.gmra.mxu0 %v539
      %v1480 = vpop.f32.mrf.mxu0
      %v1481 = vadd.f32 %v1368, %v1480
      %1482 = vmatmul.f32.gmra.mxu0 %v540
      %v1483 = vpop.f32.mrf.mxu0
      %v1484 = vadd.f32 %v1371, %v1483
      %1485 = vmatmul.f32.gmra.mxu0 %v541
      %v1486 = vpop.f32.mrf.mxu0
      %v1487 = vadd.f32 %v1374, %v1486
      %1488 = vmatmul.f32.gmra.mxu0 %v542
      %v1489 = vpop.f32.mrf.mxu0
      %v1490 = vadd.f32 %v1377, %v1489
      %1491 = vmatmul.f32.gmra.mxu0 %v543
      %v1492 = vpop.f32.mrf.mxu0
      %v1493 = vadd.f32 %v1380, %v1492
      %1494 = vmatmul.f32.gmra.mxu0 %v544
      %v1495 = vpop.f32.mrf.mxu0
      %v1496 = vadd.f32 %v1383, %v1495
      %1497 = vmatmul.f32.gmra.mxu0 %v545
      %v1498 = vpop.f32.mrf.mxu0
      %v1499 = vadd.f32 %v1386, %v1498
      %1500 = vmatmul.f32.gmra.mxu0 %v546
      %v1501 = vpop.f32.mrf.mxu0
      %v1502 = vadd.f32 %v1389, %v1501
      %1503 = vmatmul.f32.gmra.mxu0 %v547
      %v1504 = vpop.f32.mrf.mxu0
      %v1505 = vadd.f32 %v1392, %v1504
      %1506 = vmatmul.f32.gmra.mxu0 %v548
      %v1507 = vpop.f32.mrf.mxu0
      %v1508 = vadd.f32 %v1395, %v1507
      %1509 = vmatmul.f32.gmra.mxu0 %v549
      %v1510 = vpop.f32.mrf.mxu0
      %v1511 = vadd.f32 %v1398, %v1510
      %1512 = vmatmul.f32.gmra.mxu0 %v550
      %v1513 = vpop.f32.mrf.mxu0
      %v1514 = vadd.f32 %v1401, %v1513
      %1515 = vmatmul.f32.gmra.mxu0 %v551
      %v1516 = vpop.f32.mrf.mxu0
      %v1517 = vadd.f32 %v1404, %v1516
      %1518 = vmatmul.f32.gmra.mxu0 %v552
      %v1519 = vpop.f32.mrf.mxu0
      %v1520 = vadd.f32 %v1407, %v1519
      %1521 = vmatmul.f32.gmra.mxu0 %v553
      %v1522 = vpop.f32.mrf.mxu0
      %v1523 = vadd.f32 %v1410, %v1522
      %1524 = vmatmul.f32.gmra.mxu0 %v554
      %v1525 = vpop.f32.mrf.mxu0
      %v1526 = vadd.f32 %v1413, %v1525
      %1527 = vmatmul.f32.gmra.mxu0 %v555
      %v1528 = vpop.f32.mrf.mxu0
      %v1529 = vadd.f32 %v1416, %v1528
      %1530 = vmatmul.f32.gmra.mxu0 %v556
      %v1531 = vpop.f32.mrf.mxu0
      %v1532 = vadd.f32 %v1419, %v1531
      %1533 = vmatmul.f32.gmra.mxu0 %v557
      %v1534 = vpop.f32.mrf.mxu0
      %v1535 = vadd.f32 %v1422, %v1534
      %1536 = vmatmul.f32.gmra.mxu0 %v558
      %v1537 = vpop.f32.mrf.mxu0
      %v1538 = vadd.f32 %v1425, %v1537
      %1539 = vmatmul.f32.gmra.mxu0 %v559
      %v1540 = vpop.f32.mrf.mxu0
      %v1541 = vadd.f32 %v1428, %v1540
      %1542 = vmatmul.f32.gmra.mxu0 %v560
      %v1543 = vpop.f32.mrf.mxu0
      %v1544 = vadd.f32 %v1431, %v1543
      %1545 = vmatmul.f32.gmra.mxu0 %v561
      %v1546 = vpop.f32.mrf.mxu0
      %v1547 = vadd.f32 %v1434, %v1546
      %1548 = vmatmul.f32.gmra.mxu0 %v562
      %v1549 = vpop.f32.mrf.mxu0
      %v1550 = vadd.f32 %v1437, %v1549
      %1551 = vmatmul.f32.gmra.mxu0 %v563
      %v1552 = vpop.f32.mrf.mxu0
      %v1553 = vadd.f32 %v1440, %v1552
      %1554 = vmatmul.f32.gmra.mxu0 %v564
      %v1555 = vpop.f32.mrf.mxu0
      %v1556 = vadd.f32 %v1443, %v1555
      %1557 = vmatmul.f32.gmra.mxu0 %v565
      %v1558 = vpop.f32.mrf.mxu0
      %v1559 = vadd.f32 %v1446, %v1558
      %1560 = vmatmul.f32.gmra.mxu0 %v566
      %v1561 = vpop.f32.mrf.mxu0
      %v1562 = vadd.f32 %v1449, %v1561
      %1563 = vmatmul.f32.gmra.mxu0 %v567
      %v1564 = vpop.f32.mrf.mxu0
      %v1565 = vadd.f32 %v1452, %v1564
      %1566 = vmatmul.f32.gmra.mxu0 %v568
      %v1567 = vpop.f32.mrf.mxu0
      %v1568 = vadd.f32 %v1455, %v1567
      %1569 = vmatmul.f32.gmra.mxu0 %v569
      %v1570 = vpop.f32.mrf.mxu0
      %v1571 = vadd.f32 %v1458, %v1570
      %1572 = vdwg.mxu0
      %1573 = vmatpush.msra.mxu0 %v761
      %1574 = vmatpush.msra.mxu0 %v760
      %1575 = vmatpush.msra.mxu0 %v759
      %1576 = vmatpush.msra.mxu0 %v758
      %1577 = vmatpush.msra.mxu0 %v757
      %1578 = vmatpush.msra.mxu0 %v756
      %1579 = vmatpush.msra.mxu0 %v755
      %1580 = vmatpush.msra.mxu0 %v754
      %1581 = vmatpush.msra.mxu0 %v753
      %1582 = vmatpush.msra.mxu0 %v752
      %1583 = vmatpush.msra.mxu0 %v751
      %1584 = vmatpush.msra.mxu0 %v750
      %1585 = vmatpush.msra.mxu0 %v749
      %1586 = vmatpush.msra.mxu0 %v748
      %1587 = vmatpush.msra.mxu0 %v747
      %1588 = vmatpush.msra.mxu0 %v746
      %1589 = vmatmul.f32.gmra.mxu0 %v570
      %v1590 = vpop.f32.mrf.mxu0
      %v1591 = vadd.f32 %v1478, %v1590
      %1592 = vmatmul.f32.gmra.mxu0 %v571
      %v1593 = vpop.f32.mrf.mxu0
      %v1594 = vadd.f32 %v1481, %v1593
      %1595 = vmatmul.f32.gmra.mxu0 %v572
      %v1596 = vpop.f32.mrf.mxu0
      %v1597 = vadd.f32 %v1484, %v1596
      %1598 = vmatmul.f32.gmra.mxu0 %v573
      %v1599 = vpop.f32.mrf.mxu0
      %v1600 = vadd.f32 %v1487, %v1599
      %1601 = vmatmul.f32.gmra.mxu0 %v574
      %v1602 = vpop.f32.mrf.mxu0
      %v1603 = vadd.f32 %v1490, %v1602
      %1604 = vmatmul.f32.gmra.mxu0 %v575
      %v1605 = vpop.f32.mrf.mxu0
      %v1606 = vadd.f32 %v1493, %v1605
      %1607 = vmatmul.f32.gmra.mxu0 %v576
      %v1608 = vpop.f32.mrf.mxu0
      %v1609 = vadd.f32 %v1496, %v1608
      %1610 = vmatmul.f32.gmra.mxu0 %v577
      %v1611 = vpop.f32.mrf.mxu0
      %v1612 = vadd.f32 %v1499, %v1611
      %1613 = vmatmul.f32.gmra.mxu0 %v578
      %v1614 = vpop.f32.mrf.mxu0
      %v1615 = vadd.f32 %v1502, %v1614
      %1616 = vmatmul.f32.gmra.mxu0 %v579
      %v1617 = vpop.f32.mrf.mxu0
      %v1618 = vadd.f32 %v1505, %v1617
      %1619 = vmatmul.f32.gmra.mxu0 %v580
      %v1620 = vpop.f32.mrf.mxu0
      %v1621 = vadd.f32 %v1508, %v1620
      %1622 = vmatmul.f32.gmra.mxu0 %v581
      %v1623 = vpop.f32.mrf.mxu0
      %v1624 = vadd.f32 %v1511, %v1623
      %1625 = vmatmul.f32.gmra.mxu0 %v582
      %v1626 = vpop.f32.mrf.mxu0
      %v1627 = vadd.f32 %v1514, %v1626
      %1628 = vmatmul.f32.gmra.mxu0 %v583
      %v1629 = vpop.f32.mrf.mxu0
      %v1630 = vadd.f32 %v1517, %v1629
      %1631 = vmatmul.f32.gmra.mxu0 %v584
      %v1632 = vpop.f32.mrf.mxu0
      %v1633 = vadd.f32 %v1520, %v1632
      %1634 = vmatmul.f32.gmra.mxu0 %v585
      %v1635 = vpop.f32.mrf.mxu0
      %v1636 = vadd.f32 %v1523, %v1635
      %1637 = vmatmul.f32.gmra.mxu0 %v586
      %v1638 = vpop.f32.mrf.mxu0
      %v1639 = vadd.f32 %v1526, %v1638
      %1640 = vmatmul.f32.gmra.mxu0 %v587
      %v1641 = vpop.f32.mrf.mxu0
      %v1642 = vadd.f32 %v1529, %v1641
      %1643 = vmatmul.f32.gmra.mxu0 %v588
      %v1644 = vpop.f32.mrf.mxu0
      %v1645 = vadd.f32 %v1532, %v1644
      %1646 = vmatmul.f32.gmra.mxu0 %v589
      %v1647 = vpop.f32.mrf.mxu0
      %v1648 = vadd.f32 %v1535, %v1647
      %1649 = vmatmul.f32.gmra.mxu0 %v590
      %v1650 = vpop.f32.mrf.mxu0
      %v1651 = vadd.f32 %v1538, %v1650
      %1652 = vmatmul.f32.gmra.mxu0 %v591
      %v1653 = vpop.f32.mrf.mxu0
      %v1654 = vadd.f32 %v1541, %v1653
      %1655 = vmatmul.f32.gmra.mxu0 %v592
      %v1656 = vpop.f32.mrf.mxu0
      %v1657 = vadd.f32 %v1544, %v1656
      %1658 = vmatmul.f32.gmra.mxu0 %v593
      %v1659 = vpop.f32.mrf.mxu0
      %v1660 = vadd.f32 %v1547, %v1659
      %1661 = vmatmul.f32.gmra.mxu0 %v594
      %v1662 = vpop.f32.mrf.mxu0
      %v1663 = vadd.f32 %v1550, %v1662
      %1664 = vmatmul.f32.gmra.mxu0 %v595
      %v1665 = vpop.f32.mrf.mxu0
      %v1666 = vadd.f32 %v1553, %v1665
      %1667 = vmatmul.f32.gmra.mxu0 %v596
      %v1668 = vpop.f32.mrf.mxu0
      %v1669 = vadd.f32 %v1556, %v1668
      %1670 = vmatmul.f32.gmra.mxu0 %v597
      %v1671 = vpop.f32.mrf.mxu0
      %v1672 = vadd.f32 %v1559, %v1671
      %1673 = vmatmul.f32.gmra.mxu0 %v598
      %v1674 = vpop.f32.mrf.mxu0
      %v1675 = vadd.f32 %v1562, %v1674
      %1676 = vmatmul.f32.gmra.mxu0 %v599
      %v1677 = vpop.f32.mrf.mxu0
      %v1678 = vadd.f32 %v1565, %v1677
      %1679 = vmatmul.f32.gmra.mxu0 %v600
      %v1680 = vpop.f32.mrf.mxu0
      %v1681 = vadd.f32 %v1568, %v1680
      %1682 = vmatmul.f32.gmra.mxu0 %v601
      %v1683 = vpop.f32.mrf.mxu0
      %v1684 = vadd.f32 %v1571, %v1683
      %1685 = vdwg.mxu0
      %1686 = vmatpush.msra.mxu0 %v777
      %1687 = vmatpush.msra.mxu0 %v776
      %1688 = vmatpush.msra.mxu0 %v775
      %1689 = vmatpush.msra.mxu0 %v774
      %1690 = vmatpush.msra.mxu0 %v773
      %1691 = vmatpush.msra.mxu0 %v772
      %1692 = vmatpush.msra.mxu0 %v771
      %1693 = vmatpush.msra.mxu0 %v770
      %1694 = vmatpush.msra.mxu0 %v769
      %1695 = vmatpush.msra.mxu0 %v768
      %1696 = vmatpush.msra.mxu0 %v767
      %1697 = vmatpush.msra.mxu0 %v766
      %1698 = vmatpush.msra.mxu0 %v765
      %1699 = vmatpush.msra.mxu0 %v764
      %1700 = vmatpush.msra.mxu0 %v763
      %1701 = vmatpush.msra.mxu0 %v762
      %1702 = vmatmul.f32.gmra.mxu0 %v602
      %v1703 = vpop.f32.mrf.mxu0
      %v1704 = vadd.f32 %v1591, %v1703
      %1705 = vmatmul.f32.gmra.mxu0 %v603
      %v1706 = vpop.f32.mrf.mxu0
      %v1707 = vadd.f32 %v1594, %v1706
      %1708 = vmatmul.f32.gmra.mxu0 %v604
      %v1709 = vpop.f32.mrf.mxu0
      %v1710 = vadd.f32 %v1597, %v1709
      %1711 = vmatmul.f32.gmra.mxu0 %v605
      %v1712 = vpop.f32.mrf.mxu0
      %v1713 = vadd.f32 %v1600, %v1712
      %1714 = vmatmul.f32.gmra.mxu0 %v606
      %v1715 = vpop.f32.mrf.mxu0
      %v1716 = vadd.f32 %v1603, %v1715
      %1717 = vmatmul.f32.gmra.mxu0 %v607
      %v1718 = vpop.f32.mrf.mxu0
      %v1719 = vadd.f32 %v1606, %v1718
      %1720 = vmatmul.f32.gmra.mxu0 %v608
      %v1721 = vpop.f32.mrf.mxu0
      %v1722 = vadd.f32 %v1609, %v1721
      %1723 = vmatmul.f32.gmra.mxu0 %v609
      %v1724 = vpop.f32.mrf.mxu0
      %v1725 = vadd.f32 %v1612, %v1724
      %1726 = vmatmul.f32.gmra.mxu0 %v610
      %v1727 = vpop.f32.mrf.mxu0
      %v1728 = vadd.f32 %v1615, %v1727
      %1729 = vmatmul.f32.gmra.mxu0 %v611
      %v1730 = vpop.f32.mrf.mxu0
      %v1731 = vadd.f32 %v1618, %v1730
      %1732 = vmatmul.f32.gmra.mxu0 %v612
      %v1733 = vpop.f32.mrf.mxu0
      %v1734 = vadd.f32 %v1621, %v1733
      %1735 = vmatmul.f32.gmra.mxu0 %v613
      %v1736 = vpop.f32.mrf.mxu0
      %v1737 = vadd.f32 %v1624, %v1736
      %1738 = vmatmul.f32.gmra.mxu0 %v614
      %v1739 = vpop.f32.mrf.mxu0
      %v1740 = vadd.f32 %v1627, %v1739
      %1741 = vmatmul.f32.gmra.mxu0 %v615
      %v1742 = vpop.f32.mrf.mxu0
      %v1743 = vadd.f32 %v1630, %v1742
      %1744 = vmatmul.f32.gmra.mxu0 %v616
      %v1745 = vpop.f32.mrf.mxu0
      %v1746 = vadd.f32 %v1633, %v1745
      %1747 = vmatmul.f32.gmra.mxu0 %v617
      %v1748 = vpop.f32.mrf.mxu0
      %v1749 = vadd.f32 %v1636, %v1748
      %1750 = vmatmul.f32.gmra.mxu0 %v618
      %v1751 = vpop.f32.mrf.mxu0
      %v1752 = vadd.f32 %v1639, %v1751
      %1753 = vmatmul.f32.gmra.mxu0 %v619
      %v1754 = vpop.f32.mrf.mxu0
      %v1755 = vadd.f32 %v1642, %v1754
      %1756 = vmatmul.f32.gmra.mxu0 %v620
      %v1757 = vpop.f32.mrf.mxu0
      %v1758 = vadd.f32 %v1645, %v1757
      %1759 = vmatmul.f32.gmra.mxu0 %v621
      %v1760 = vpop.f32.mrf.mxu0
      %v1761 = vadd.f32 %v1648, %v1760
      %1762 = vmatmul.f32.gmra.mxu0 %v622
      %v1763 = vpop.f32.mrf.mxu0
      %v1764 = vadd.f32 %v1651, %v1763
      %1765 = vmatmul.f32.gmra.mxu0 %v623
      %v1766 = vpop.f32.mrf.mxu0
      %v1767 = vadd.f32 %v1654, %v1766
      %1768 = vmatmul.f32.gmra.mxu0 %v624
      %v1769 = vpop.f32.mrf.mxu0
      %v1770 = vadd.f32 %v1657, %v1769
      %1771 = vmatmul.f32.gmra.mxu0 %v625
      %v1772 = vpop.f32.mrf.mxu0
      %v1773 = vadd.f32 %v1660, %v1772
      %1774 = vmatmul.f32.gmra.mxu0 %v626
      %v1775 = vpop.f32.mrf.mxu0
      %v1776 = vadd.f32 %v1663, %v1775
      %1777 = vmatmul.f32.gmra.mxu0 %v627
      %v1778 = vpop.f32.mrf.mxu0
      %v1779 = vadd.f32 %v1666, %v1778
      %1780 = vmatmul.f32.gmra.mxu0 %v628
      %v1781 = vpop.f32.mrf.mxu0
      %v1782 = vadd.f32 %v1669, %v1781
      %1783 = vmatmul.f32.gmra.mxu0 %v629
      %v1784 = vpop.f32.mrf.mxu0
      %v1785 = vadd.f32 %v1672, %v1784
      %1786 = vmatmul.f32.gmra.mxu0 %v630
      %v1787 = vpop.f32.mrf.mxu0
      %v1788 = vadd.f32 %v1675, %v1787
      %1789 = vmatmul.f32.gmra.mxu0 %v631
      %v1790 = vpop.f32.mrf.mxu0
      %v1791 = vadd.f32 %v1678, %v1790
      %1792 = vmatmul.f32.gmra.mxu0 %v632
      %v1793 = vpop.f32.mrf.mxu0
      %v1794 = vadd.f32 %v1681, %v1793
      %1795 = vmatmul.f32.gmra.mxu0 %v633
      %v1796 = vpop.f32.mrf.mxu0
      %v1797 = vadd.f32 %v1684, %v1796
      %1798 = vdwg.mxu0
      %v1799 = vmax.f32 %v1704, 0.0
      %v1800 = vmax.f32 %v1707, 0.0
      %v1801 = vmax.f32 %v1710, 0.0
      %v1802 = vmax.f32 %v1713, 0.0
      %v1803 = vmax.f32 %v1716, 0.0
      %v1804 = vmax.f32 %v1719, 0.0
      %v1805 = vmax.f32 %v1722, 0.0
      %v1806 = vmax.f32 %v1725, 0.0
      %v1807 = vmax.f32 %v1728, 0.0
      %v1808 = vmax.f32 %v1731, 0.0
      %v1809 = vmax.f32 %v1734, 0.0
      %v1810 = vmax.f32 %v1737, 0.0
      %v1811 = vmax.f32 %v1740, 0.0
      %v1812 = vmax.f32 %v1743, 0.0
      %v1813 = vmax.f32 %v1746, 0.0
      %v1814 = vmax.f32 %v1749, 0.0
      %v1815 = vmax.f32 %v1752, 0.0
      %v1816 = vmax.f32 %v1755, 0.0
      %v1817 = vmax.f32 %v1758, 0.0
      %v1818 = vmax.f32 %v1761, 0.0
      %v1819 = vmax.f32 %v1764, 0.0
      %v1820 = vmax.f32 %v1767, 0.0
      %v1821 = vmax.f32 %v1770, 0.0
      %v1822 = vmax.f32 %v1773, 0.0
      %v1823 = vmax.f32 %v1776, 0.0
      %v1824 = vmax.f32 %v1779, 0.0
      %v1825 = vmax.f32 %v1782, 0.0
      %v1826 = vmax.f32 %v1785, 0.0
      %v1827 = vmax.f32 %v1788, 0.0
      %v1828 = vmax.f32 %v1791, 0.0
      %v1829 = vmax.f32 %v1794, 0.0
      %v1830 = vmax.f32 %v1797, 0.0
      %1831 = vst [vmem:[#allocation3] sm:$0xff] 0.0
      %1832 = vst [vmem:[#allocation3 + $0x8] sm:$0xff] 0.0
      %1833 = vst [vmem:[#allocation3 + $0x10] sm:$0x3] 0.0
      %1834 = vst [vmem:[#allocation3 + $0x18] sm:$0xff] 0.0
      %1835 = vst [vmem:[#allocation3 + $0x20] sm:$0xff] 0.0
      %1836 = vst [vmem:[#allocation3 + $0x28] sm:$0x3] 0.0
      %1837 = vst [vmem:[#allocation3 + $0x30] sm:$0xff] 0.0
      %1838 = vst [vmem:[#allocation3 + $0x38] sm:$0xff] 0.0
      %1839 = vst [vmem:[#allocation3 + $0x40] sm:$0x3] 0.0
      %1840 = vst [vmem:[#allocation3 + $0x48] sm:$0xff] 0.0
      %1841 = vst [vmem:[#allocation3 + $0x50] sm:$0xff] 0.0
      %1842 = vst [vmem:[#allocation3 + $0x58] sm:$0x3] 0.0
      %1843 = vst [vmem:[#allocation3 + $0x60] sm:$0xff] 0.0
      %1844 = vst [vmem:[#allocation3 + $0x68] sm:$0xff] 0.0
      %1845 = vst [vmem:[#allocation3 + $0x70] sm:$0x3] 0.0
      %1846 = vst [vmem:[#allocation3 + $0x78] sm:$0xff] 0.0
      %1847 = vst [vmem:[#allocation3 + $0x80] sm:$0xff] 0.0
      %1848 = vst [vmem:[#allocation3 + $0x88] sm:$0x3] 0.0
      %1849 = vst [vmem:[#allocation3 + $0x90] sm:$0xff] 0.0
      %1850 = vst [vmem:[#allocation3 + $0x98] sm:$0xff] 0.0
      %1851 = vst [vmem:[#allocation3 + $0xa0] sm:$0x3] 0.0
      %1852 = vst [vmem:[#allocation3 + $0xa8] sm:$0xff] 0.0
      %1853 = vst [vmem:[#allocation3 + $0xb0] sm:$0xff] 0.0
      %1854 = vst [vmem:[#allocation3 + $0xb8] sm:$0x3] 0.0
      %1855 = vst [vmem:[#allocation3 + $0xc0] sm:$0xff] 0.0
      %1856 = vst [vmem:[#allocation3 + $0xc8] sm:$0xff] 0.0
      %1857 = vst [vmem:[#allocation3 + $0xd0] sm:$0x3] 0.0
      %1858 = vst [vmem:[#allocation3 + $0xd8] sm:$0xff] 0.0
      %1859 = vst [vmem:[#allocation3 + $0xe0] sm:$0xff] 0.0
      %1860 = vst [vmem:[#allocation3 + $0xe8] sm:$0x3] 0.0
      %1861 = vst [vmem:[#allocation3 + $0xf0] sm:$0xff] 0.0
      %1862 = vst [vmem:[#allocation3 + $0xf8] sm:$0xff] 0.0
      %1863 = vst [vmem:[#allocation3 + $0x100] sm:$0x3] 0.0
      %1864 = vst [vmem:[#allocation3 + $0x108] sm:$0xff] 0.0
      %1865 = vst [vmem:[#allocation3 + $0x110] sm:$0xff] 0.0
      %1866 = vst [vmem:[#allocation3 + $0x118] sm:$0x3] 0.0
      %1867 = vst [vmem:[#allocation3 + $0x120] sm:$0xff] 0.0
      %1868 = vst [vmem:[#allocation3 + $0x128] sm:$0xff] 0.0
      %1869 = vst [vmem:[#allocation3 + $0x130] sm:$0x3] 0.0
      %1870 = vst [vmem:[#allocation3 + $0x138] sm:$0xff] 0.0
      %1871 = vst [vmem:[#allocation3 + $0x140] sm:$0xff] 0.0
      %1872 = vst [vmem:[#allocation3 + $0x148] sm:$0x3] 0.0
      %1873 = vst [vmem:[#allocation3 + $0x150] sm:$0xff] 0.0
      %1874 = vst [vmem:[#allocation3 + $0x158] sm:$0xff] 0.0
      %1875 = vst [vmem:[#allocation3 + $0x160] sm:$0x3] 0.0
      %1876 = vst [vmem:[#allocation3 + $0x168] sm:$0xff] 0.0
      %1877 = vst [vmem:[#allocation3 + $0x170] sm:$0xff] 0.0
      %1878 = vst [vmem:[#allocation3 + $0x178] sm:$0x3] 0.0
      %1879 = vst [vmem:[#allocation3 + $0x180] sm:$0xff] 0.0
      %1880 = vst [vmem:[#allocation3 + $0x188] sm:$0xff] 0.0
      %1881 = vst [vmem:[#allocation3 + $0x190] sm:$0x3] 0.0
      %1882 = vst [vmem:[#allocation3 + $0x198] sm:$0xff] 0.0
      %1883 = vst [vmem:[#allocation3 + $0x1a0] sm:$0xff] 0.0
      %1884 = vst [vmem:[#allocation3 + $0x1a8] sm:$0x3] 0.0
      %s1885 = scalar_lea.vmem [#allocation3], 24
      %1886 = vst [vmem:[%s1885 + $0x1] sm:$0xff] %v1799
      %1887 = vst [vmem:[%s1885 + $0x9] sm:$0xff] %v1800
      %1888 = vst [vmem:[%s1885 + $0x19] sm:$0xff] %v1801
      %1889 = vst [vmem:[%s1885 + $0x21] sm:$0xff] %v1802
      %1890 = vst [vmem:[%s1885 + $0x31] sm:$0xff] %v1803
      %1891 = vst [vmem:[%s1885 + $0x39] sm:$0xff] %v1804
      %1892 = vst [vmem:[%s1885 + $0x49] sm:$0xff] %v1805
      %1893 = vst [vmem:[%s1885 + $0x51] sm:$0xff] %v1806
      %1894 = vst [vmem:[%s1885 + $0x61] sm:$0xff] %v1807
      %1895 = vst [vmem:[%s1885 + $0x69] sm:$0xff] %v1808
      %1896 = vst [vmem:[%s1885 + $0x79] sm:$0xff] %v1809
      %1897 = vst [vmem:[%s1885 + $0x81] sm:$0xff] %v1810
      %1898 = vst [vmem:[%s1885 + $0x91] sm:$0xff] %v1811
      %1899 = vst [vmem:[%s1885 + $0x99] sm:$0xff] %v1812
      %1900 = vst [vmem:[%s1885 + $0xa9] sm:$0xff] %v1813
      %1901 = vst [vmem:[%s1885 + $0xb1] sm:$0xff] %v1814
      %1902 = vst [vmem:[%s1885 + $0xc1] sm:$0xff] %v1815
      %1903 = vst [vmem:[%s1885 + $0xc9] sm:$0xff] %v1816
      %1904 = vst [vmem:[%s1885 + $0xd9] sm:$0xff] %v1817
      %1905 = vst [vmem:[%s1885 + $0xe1] sm:$0xff] %v1818
      %1906 = vst [vmem:[%s1885 + $0xf1] sm:$0xff] %v1819
      %1907 = vst [vmem:[%s1885 + $0xf9] sm:$0xff] %v1820
      %1908 = vst [vmem:[%s1885 + $0x109] sm:$0xff] %v1821
      %1909 = vst [vmem:[%s1885 + $0x111] sm:$0xff] %v1822
      %1910 = vst [vmem:[%s1885 + $0x121] sm:$0xff] %v1823
      %1911 = vst [vmem:[%s1885 + $0x129] sm:$0xff] %v1824
      %1912 = vst [vmem:[%s1885 + $0x139] sm:$0xff] %v1825
      %1913 = vst [vmem:[%s1885 + $0x141] sm:$0xff] %v1826
      %1914 = vst [vmem:[%s1885 + $0x151] sm:$0xff] %v1827
      %1915 = vst [vmem:[%s1885 + $0x159] sm:$0xff] %v1828
      %1916 = vst [vmem:[%s1885 + $0x169] sm:$0xff] %v1829
      %1917 = vst [vmem:[%s1885 + $0x171] sm:$0xff] %v1830
      %v1918 = vld [vmem:[#allocation3] sm:$0xff]
      %v1919 = vld [vmem:[#allocation3 + $0x8] sm:$0xff]
      %v1920 = vld [vmem:[#allocation3 + $0x18] sm:$0xff]
      %v1921 = vld [vmem:[#allocation3 + $0x20] sm:$0xff]
      %v1922 = vld [vmem:[#allocation3 + $0x30] sm:$0xff]
      %v1923 = vld [vmem:[#allocation3 + $0x38] sm:$0xff]
      %v1924 = vld [vmem:[#allocation3 + $0x48] sm:$0xff]
      %v1925 = vld [vmem:[#allocation3 + $0x50] sm:$0xff]
      %v1926 = vld [vmem:[#allocation3 + $0x60] sm:$0xff]
      %v1927 = vld [vmem:[#allocation3 + $0x68] sm:$0xff]
      %v1928 = vld [vmem:[#allocation3 + $0x78] sm:$0xff]
      %v1929 = vld [vmem:[#allocation3 + $0x80] sm:$0xff]
      %v1930 = vld [vmem:[#allocation3 + $0x90] sm:$0xff]
      %v1931 = vld [vmem:[#allocation3 + $0x98] sm:$0xff]
      %v1932 = vld [vmem:[#allocation3 + $0xa8] sm:$0xff]
      %v1933 = vld [vmem:[#allocation3 + $0xb0] sm:$0xff]
      %v1934 = vld [vmem:[#allocation3 + $0xc0] sm:$0xff]
      %v1935 = vld [vmem:[#allocation3 + $0xc8] sm:$0xff]
      %v1936 = vld [vmem:[#allocation3 + $0xd8] sm:$0xff]
      %v1937 = vld [vmem:[#allocation3 + $0xe0] sm:$0xff]
      %v1938 = vld [vmem:[#allocation3 + $0xf0] sm:$0xff]
      %v1939 = vld [vmem:[#allocation3 + $0xf8] sm:$0xff]
      %v1940 = vld [vmem:[#allocation3 + $0x108] sm:$0xff]
      %v1941 = vld [vmem:[#allocation3 + $0x110] sm:$0xff]
      %v1942 = vld [vmem:[#allocation3 + $0x120] sm:$0xff]
      %v1943 = vld [vmem:[#allocation3 + $0x128] sm:$0xff]
      %v1944 = vld [vmem:[#allocation3 + $0x138] sm:$0xff]
      %v1945 = vld [vmem:[#allocation3 + $0x140] sm:$0xff]
      %v1946 = vld [vmem:[#allocation3 + $0x150] sm:$0xff]
      %v1947 = vld [vmem:[#allocation3 + $0x158] sm:$0xff]
      %v1948 = vld [vmem:[#allocation3 + $0x168] sm:$0xff]
      %v1949 = vld [vmem:[#allocation3 + $0x170] sm:$0xff]
      %v1950 = vld [vmem:[#allocation3 + $0x1] sm:$0xff]
      %v1951 = vld [vmem:[#allocation3 + $0x9] sm:$0xff]
      %v1952 = vld [vmem:[#allocation3 + $0x19] sm:$0xff]
      %v1953 = vld [vmem:[#allocation3 + $0x21] sm:$0xff]
      %v1954 = vld [vmem:[#allocation3 + $0x31] sm:$0xff]
      %v1955 = vld [vmem:[#allocation3 + $0x39] sm:$0xff]
      %v1956 = vld [vmem:[#allocation3 + $0x49] sm:$0xff]
      %v1957 = vld [vmem:[#allocation3 + $0x51] sm:$0xff]
      %v1958 = vld [vmem:[#allocation3 + $0x61] sm:$0xff]
      %v1959 = vld [vmem:[#allocation3 + $0x69] sm:$0xff]
      %v1960 = vld [vmem:[#allocation3 + $0x79] sm:$0xff]
      %v1961 = vld [vmem:[#allocation3 + $0x81] sm:$0xff]
      %v1962 = vld [vmem:[#allocation3 + $0x91] sm:$0xff]
      %v1963 = vld [vmem:[#allocation3 + $0x99] sm:$0xff]
      %v1964 = vld [vmem:[#allocation3 + $0xa9] sm:$0xff]
      %v1965 = vld [vmem:[#allocation3 + $0xb1] sm:$0xff]
      %v1966 = vld [vmem:[#allocation3 + $0xc1] sm:$0xff]
      %v1967 = vld [vmem:[#allocation3 + $0xc9] sm:$0xff]
      %v1968 = vld [vmem:[#allocation3 + $0xd9] sm:$0xff]
      %v1969 = vld [vmem:[#allocation3 + $0xe1] sm:$0xff]
      %v1970 = vld [vmem:[#allocation3 + $0xf1] sm:$0xff]
      %v1971 = vld [vmem:[#allocation3 + $0xf9] sm:$0xff]
      %v1972 = vld [vmem:[#allocation3 + $0x109] sm:$0xff]
      %v1973 = vld [vmem:[#allocation3 + $0x111] sm:$0xff]
      %v1974 = vld [vmem:[#allocation3 + $0x121] sm:$0xff]
      %v1975 = vld [vmem:[#allocation3 + $0x129] sm:$0xff]
      %v1976 = vld [vmem:[#allocation3 + $0x139] sm:$0xff]
      %v1977 = vld [vmem:[#allocation3 + $0x141] sm:$0xff]
      %v1978 = vld [vmem:[#allocation3 + $0x151] sm:$0xff]
      %v1979 = vld [vmem:[#allocation3 + $0x159] sm:$0xff]
      %v1980 = vld [vmem:[#allocation3 + $0x169] sm:$0xff]
      %v1981 = vld [vmem:[#allocation3 + $0x171] sm:$0xff]
      %v1982 = vld [vmem:[#allocation3 + $0x2] sm:$0xff]
      %v1983 = vld [vmem:[#allocation3 + $0xa] sm:$0xff]
      %v1984 = vld [vmem:[#allocation3 + $0x1a] sm:$0xff]
      %v1985 = vld [vmem:[#allocation3 + $0x22] sm:$0xff]
      %v1986 = vld [vmem:[#allocation3 + $0x32] sm:$0xff]
      %v1987 = vld [vmem:[#allocation3 + $0x3a] sm:$0xff]
      %v1988 = vld [vmem:[#allocation3 + $0x4a] sm:$0xff]
      %v1989 = vld [vmem:[#allocation3 + $0x52] sm:$0xff]
      %v1990 = vld [vmem:[#allocation3 + $0x62] sm:$0xff]
      %v1991 = vld [vmem:[#allocation3 + $0x6a] sm:$0xff]
      %v1992 = vld [vmem:[#allocation3 + $0x7a] sm:$0xff]
      %v1993 = vld [vmem:[#allocation3 + $0x82] sm:$0xff]
      %v1994 = vld [vmem:[#allocation3 + $0x92] sm:$0xff]
      %v1995 = vld [vmem:[#allocation3 + $0x9a] sm:$0xff]
      %v1996 = vld [vmem:[#allocation3 + $0xaa] sm:$0xff]
      %v1997 = vld [vmem:[#allocation3 + $0xb2] sm:$0xff]
      %v1998 = vld [vmem:[#allocation3 + $0xc2] sm:$0xff]
      %v1999 = vld [vmem:[#allocation3 + $0xca] sm:$0xff]
      %v2000 = vld [vmem:[#allocation3 + $0xda] sm:$0xff]
      %v2001 = vld [vmem:[#allocation3 + $0xe2] sm:$0xff]
      %v2002 = vld [vmem:[#allocation3 + $0xf2] sm:$0xff]
      %v2003 = vld [vmem:[#allocation3 + $0xfa] sm:$0xff]
      %v2004 = vld [vmem:[#allocation3 + $0x10a] sm:$0xff]
      %v2005 = vld [vmem:[#allocation3 + $0x112] sm:$0xff]
      %v2006 = vld [vmem:[#allocation3 + $0x122] sm:$0xff]
      %v2007 = vld [vmem:[#allocation3 + $0x12a] sm:$0xff]
      %v2008 = vld [vmem:[#allocation3 + $0x13a] sm:$0xff]
      %v2009 = vld [vmem:[#allocation3 + $0x142] sm:$0xff]
      %v2010 = vld [vmem:[#allocation3 + $0x152] sm:$0xff]
      %v2011 = vld [vmem:[#allocation3 + $0x15a] sm:$0xff]
      %v2012 = vld [vmem:[#allocation3 + $0x16a] sm:$0xff]
      %v2013 = vld [vmem:[#allocation3 + $0x172] sm:$0xff]
      %v2014 = vld [vmem:[%s1885] sm:$0xff]
      %v2015 = vld [vmem:[%s1885 + $0x8] sm:$0xff]
      %v2016 = vld [vmem:[%s1885 + $0x18] sm:$0xff]
      %v2017 = vld [vmem:[%s1885 + $0x20] sm:$0xff]
      %v2018 = vld [vmem:[%s1885 + $0x30] sm:$0xff]
      %v2019 = vld [vmem:[%s1885 + $0x38] sm:$0xff]
      %v2020 = vld [vmem:[%s1885 + $0x48] sm:$0xff]
      %v2021 = vld [vmem:[%s1885 + $0x50] sm:$0xff]
      %v2022 = vld [vmem:[%s1885 + $0x60] sm:$0xff]
      %v2023 = vld [vmem:[%s1885 + $0x68] sm:$0xff]
      %v2024 = vld [vmem:[%s1885 + $0x78] sm:$0xff]
      %v2025 = vld [vmem:[%s1885 + $0x80] sm:$0xff]
      %v2026 = vld [vmem:[%s1885 + $0x90] sm:$0xff]
      %v2027 = vld [vmem:[%s1885 + $0x98] sm:$0xff]
      %v2028 = vld [vmem:[%s1885 + $0xa8] sm:$0xff]
      %v2029 = vld [vmem:[%s1885 + $0xb0] sm:$0xff]
      %v2030 = vld [vmem:[%s1885 + $0xc0] sm:$0xff]
      %v2031 = vld [vmem:[%s1885 + $0xc8] sm:$0xff]
      %v2032 = vld [vmem:[%s1885 + $0xd8] sm:$0xff]
      %v2033 = vld [vmem:[%s1885 + $0xe0] sm:$0xff]
      %v2034 = vld [vmem:[%s1885 + $0xf0] sm:$0xff]
      %v2035 = vld [vmem:[%s1885 + $0xf8] sm:$0xff]
      %v2036 = vld [vmem:[%s1885 + $0x108] sm:$0xff]
      %v2037 = vld [vmem:[%s1885 + $0x110] sm:$0xff]
      %v2038 = vld [vmem:[%s1885 + $0x120] sm:$0xff]
      %v2039 = vld [vmem:[%s1885 + $0x128] sm:$0xff]
      %v2040 = vld [vmem:[%s1885 + $0x138] sm:$0xff]
      %v2041 = vld [vmem:[%s1885 + $0x140] sm:$0xff]
      %v2042 = vld [vmem:[%s1885 + $0x150] sm:$0xff]
      %v2043 = vld [vmem:[%s1885 + $0x158] sm:$0xff]
      %v2044 = vld [vmem:[%s1885 + $0x168] sm:$0xff]
      %v2045 = vld [vmem:[%s1885 + $0x170] sm:$0xff]
      %v2046 = vld [vmem:[%s1885 + $0x1] sm:$0xff]
      %v2047 = vld [vmem:[%s1885 + $0x9] sm:$0xff]
      %v2048 = vld [vmem:[%s1885 + $0x19] sm:$0xff]
      %v2049 = vld [vmem:[%s1885 + $0x21] sm:$0xff]
      %v2050 = vld [vmem:[%s1885 + $0x31] sm:$0xff]
      %v2051 = vld [vmem:[%s1885 + $0x39] sm:$0xff]
      %v2052 = vld [vmem:[%s1885 + $0x49] sm:$0xff]
      %v2053 = vld [vmem:[%s1885 + $0x51] sm:$0xff]
      %v2054 = vld [vmem:[%s1885 + $0x61] sm:$0xff]
      %v2055 = vld [vmem:[%s1885 + $0x69] sm:$0xff]
      %v2056 = vld [vmem:[%s1885 + $0x79] sm:$0xff]
      %v2057 = vld [vmem:[%s1885 + $0x81] sm:$0xff]
      %v2058 = vld [vmem:[%s1885 + $0x91] sm:$0xff]
      %v2059 = vld [vmem:[%s1885 + $0x99] sm:$0xff]
      %v2060 = vld [vmem:[%s1885 + $0xa9] sm:$0xff]
      %v2061 = vld [vmem:[%s1885 + $0xb1] sm:$0xff]
      %v2062 = vld [vmem:[%s1885 + $0xc1] sm:$0xff]
      %v2063 = vld [vmem:[%s1885 + $0xc9] sm:$0xff]
      %v2064 = vld [vmem:[%s1885 + $0xd9] sm:$0xff]
      %v2065 = vld [vmem:[%s1885 + $0xe1] sm:$0xff]
      %v2066 = vld [vmem:[%s1885 + $0xf1] sm:$0xff]
      %v2067 = vld [vmem:[%s1885 + $0xf9] sm:$0xff]
      %v2068 = vld [vmem:[%s1885 + $0x109] sm:$0xff]
      %v2069 = vld [vmem:[%s1885 + $0x111] sm:$0xff]
      %v2070 = vld [vmem:[%s1885 + $0x121] sm:$0xff]
      %v2071 = vld [vmem:[%s1885 + $0x129] sm:$0xff]
      %v2072 = vld [vmem:[%s1885 + $0x139] sm:$0xff]
      %v2073 = vld [vmem:[%s1885 + $0x141] sm:$0xff]
      %v2074 = vld [vmem:[%s1885 + $0x151] sm:$0xff]
      %v2075 = vld [vmem:[%s1885 + $0x159] sm:$0xff]
      %v2076 = vld [vmem:[%s1885 + $0x169] sm:$0xff]
      %v2077 = vld [vmem:[%s1885 + $0x171] sm:$0xff]
      %v2078 = vld [vmem:[%s1885 + $0x2] sm:$0xff]
      %v2079 = vld [vmem:[%s1885 + $0xa] sm:$0xff]
      %v2080 = vld [vmem:[%s1885 + $0x1a] sm:$0xff]
      %v2081 = vld [vmem:[%s1885 + $0x22] sm:$0xff]
      %v2082 = vld [vmem:[%s1885 + $0x32] sm:$0xff]
      %v2083 = vld [vmem:[%s1885 + $0x3a] sm:$0xff]
      %v2084 = vld [vmem:[%s1885 + $0x4a] sm:$0xff]
      %v2085 = vld [vmem:[%s1885 + $0x52] sm:$0xff]
      %v2086 = vld [vmem:[%s1885 + $0x62] sm:$0xff]
      %v2087 = vld [vmem:[%s1885 + $0x6a] sm:$0xff]
      %v2088 = vld [vmem:[%s1885 + $0x7a] sm:$0xff]
      %v2089 = vld [vmem:[%s1885 + $0x82] sm:$0xff]
      %v2090 = vld [vmem:[%s1885 + $0x92] sm:$0xff]
      %v2091 = vld [vmem:[%s1885 + $0x9a] sm:$0xff]
      %v2092 = vld [vmem:[%s1885 + $0xaa] sm:$0xff]
      %v2093 = vld [vmem:[%s1885 + $0xb2] sm:$0xff]
      %v2094 = vld [vmem:[%s1885 + $0xc2] sm:$0xff]
      %v2095 = vld [vmem:[%s1885 + $0xca] sm:$0xff]
      %v2096 = vld [vmem:[%s1885 + $0xda] sm:$0xff]
      %v2097 = vld [vmem:[%s1885 + $0xe2] sm:$0xff]
      %v2098 = vld [vmem:[%s1885 + $0xf2] sm:$0xff]
      %v2099 = vld [vmem:[%s1885 + $0xfa] sm:$0xff]
      %v2100 = vld [vmem:[%s1885 + $0x10a] sm:$0xff]
      %v2101 = vld [vmem:[%s1885 + $0x112] sm:$0xff]
      %v2102 = vld [vmem:[%s1885 + $0x122] sm:$0xff]
      %v2103 = vld [vmem:[%s1885 + $0x12a] sm:$0xff]
      %v2104 = vld [vmem:[%s1885 + $0x13a] sm:$0xff]
      %v2105 = vld [vmem:[%s1885 + $0x142] sm:$0xff]
      %v2106 = vld [vmem:[%s1885 + $0x152] sm:$0xff]
      %v2107 = vld [vmem:[%s1885 + $0x15a] sm:$0xff]
      %v2108 = vld [vmem:[%s1885 + $0x16a] sm:$0xff]
      %v2109 = vld [vmem:[%s1885 + $0x172] sm:$0xff]
      %s2110 = scalar_lea.vmem [#allocation3], 48
      %v2111 = vld [vmem:[%s2110] sm:$0xff]
      %v2112 = vld [vmem:[%s2110 + $0x8] sm:$0xff]
      %v2113 = vld [vmem:[%s2110 + $0x18] sm:$0xff]
      %v2114 = vld [vmem:[%s2110 + $0x20] sm:$0xff]
      %v2115 = vld [vmem:[%s2110 + $0x30] sm:$0xff]
      %v2116 = vld [vmem:[%s2110 + $0x38] sm:$0xff]
      %v2117 = vld [vmem:[%s2110 + $0x48] sm:$0xff]
      %v2118 = vld [vmem:[%s2110 + $0x50] sm:$0xff]
      %v2119 = vld [vmem:[%s2110 + $0x60] sm:$0xff]
      %v2120 = vld [vmem:[%s2110 + $0x68] sm:$0xff]
      %v2121 = vld [vmem:[%s2110 + $0x78] sm:$0xff]
      %v2122 = vld [vmem:[%s2110 + $0x80] sm:$0xff]
      %v2123 = vld [vmem:[%s2110 + $0x90] sm:$0xff]
      %v2124 = vld [vmem:[%s2110 + $0x98] sm:$0xff]
      %v2125 = vld [vmem:[%s2110 + $0xa8] sm:$0xff]
      %v2126 = vld [vmem:[%s2110 + $0xb0] sm:$0xff]
      %v2127 = vld [vmem:[%s2110 + $0xc0] sm:$0xff]
      %v2128 = vld [vmem:[%s2110 + $0xc8] sm:$0xff]
      %v2129 = vld [vmem:[%s2110 + $0xd8] sm:$0xff]
      %v2130 = vld [vmem:[%s2110 + $0xe0] sm:$0xff]
      %v2131 = vld [vmem:[%s2110 + $0xf0] sm:$0xff]
      %v2132 = vld [vmem:[%s2110 + $0xf8] sm:$0xff]
      %v2133 = vld [vmem:[%s2110 + $0x108] sm:$0xff]
      %v2134 = vld [vmem:[%s2110 + $0x110] sm:$0xff]
      %v2135 = vld [vmem:[%s2110 + $0x120] sm:$0xff]
      %v2136 = vld [vmem:[%s2110 + $0x128] sm:$0xff]
      %v2137 = vld [vmem:[%s2110 + $0x138] sm:$0xff]
      %v2138 = vld [vmem:[%s2110 + $0x140] sm:$0xff]
      %v2139 = vld [vmem:[%s2110 + $0x150] sm:$0xff]
      %v2140 = vld [vmem:[%s2110 + $0x158] sm:$0xff]
      %v2141 = vld [vmem:[%s2110 + $0x168] sm:$0xff]
      %v2142 = vld [vmem:[%s2110 + $0x170] sm:$0xff]
      %v2143 = vld [vmem:[%s2110 + $0x1] sm:$0xff]
      %v2144 = vld [vmem:[%s2110 + $0x9] sm:$0xff]
      %v2145 = vld [vmem:[%s2110 + $0x19] sm:$0xff]
      %v2146 = vld [vmem:[%s2110 + $0x21] sm:$0xff]
      %v2147 = vld [vmem:[%s2110 + $0x31] sm:$0xff]
      %v2148 = vld [vmem:[%s2110 + $0x39] sm:$0xff]
      %v2149 = vld [vmem:[%s2110 + $0x49] sm:$0xff]
      %v2150 = vld [vmem:[%s2110 + $0x51] sm:$0xff]
      %v2151 = vld [vmem:[%s2110 + $0x61] sm:$0xff]
      %v2152 = vld [vmem:[%s2110 + $0x69] sm:$0xff]
      %v2153 = vld [vmem:[%s2110 + $0x79] sm:$0xff]
      %v2154 = vld [vmem:[%s2110 + $0x81] sm:$0xff]
      %v2155 = vld [vmem:[%s2110 + $0x91] sm:$0xff]
      %v2156 = vld [vmem:[%s2110 + $0x99] sm:$0xff]
      %v2157 = vld [vmem:[%s2110 + $0xa9] sm:$0xff]
      %v2158 = vld [vmem:[%s2110 + $0xb1] sm:$0xff]
      %v2159 = vld [vmem:[%s2110 + $0xc1] sm:$0xff]
      %v2160 = vld [vmem:[%s2110 + $0xc9] sm:$0xff]
      %v2161 = vld [vmem:[%s2110 + $0xd9] sm:$0xff]
      %v2162 = vld [vmem:[%s2110 + $0xe1] sm:$0xff]
      %v2163 = vld [vmem:[%s2110 + $0xf1] sm:$0xff]
      %v2164 = vld [vmem:[%s2110 + $0xf9] sm:$0xff]
      %v2165 = vld [vmem:[%s2110 + $0x109] sm:$0xff]
      %v2166 = vld [vmem:[%s2110 + $0x111] sm:$0xff]
      %v2167 = vld [vmem:[%s2110 + $0x121] sm:$0xff]
      %v2168 = vld [vmem:[%s2110 + $0x129] sm:$0xff]
      %v2169 = vld [vmem:[%s2110 + $0x139] sm:$0xff]
      %v2170 = vld [vmem:[%s2110 + $0x141] sm:$0xff]
      %v2171 = vld [vmem:[%s2110 + $0x151] sm:$0xff]
      %v2172 = vld [vmem:[%s2110 + $0x159] sm:$0xff]
      %v2173 = vld [vmem:[%s2110 + $0x169] sm:$0xff]
      %v2174 = vld [vmem:[%s2110 + $0x171] sm:$0xff]
      %v2175 = vld [vmem:[%s2110 + $0x2] sm:$0xff]
      %v2176 = vld [vmem:[%s2110 + $0xa] sm:$0xff]
      %v2177 = vld [vmem:[%s2110 + $0x1a] sm:$0xff]
      %v2178 = vld [vmem:[%s2110 + $0x22] sm:$0xff]
      %v2179 = vld [vmem:[%s2110 + $0x32] sm:$0xff]
      %v2180 = vld [vmem:[%s2110 + $0x3a] sm:$0xff]
      %v2181 = vld [vmem:[%s2110 + $0x4a] sm:$0xff]
      %v2182 = vld [vmem:[%s2110 + $0x52] sm:$0xff]
      %v2183 = vld [vmem:[%s2110 + $0x62] sm:$0xff]
      %v2184 = vld [vmem:[%s2110 + $0x6a] sm:$0xff]
      %v2185 = vld [vmem:[%s2110 + $0x7a] sm:$0xff]
      %v2186 = vld [vmem:[%s2110 + $0x82] sm:$0xff]
      %v2187 = vld [vmem:[%s2110 + $0x92] sm:$0xff]
      %v2188 = vld [vmem:[%s2110 + $0x9a] sm:$0xff]
      %v2189 = vld [vmem:[%s2110 + $0xaa] sm:$0xff]
      %v2190 = vld [vmem:[%s2110 + $0xb2] sm:$0xff]
      %v2191 = vld [vmem:[%s2110 + $0xc2] sm:$0xff]
      %v2192 = vld [vmem:[%s2110 + $0xca] sm:$0xff]
      %v2193 = vld [vmem:[%s2110 + $0xda] sm:$0xff]
      %v2194 = vld [vmem:[%s2110 + $0xe2] sm:$0xff]
      %v2195 = vld [vmem:[%s2110 + $0xf2] sm:$0xff]
      %v2196 = vld [vmem:[%s2110 + $0xfa] sm:$0xff]
      %v2197 = vld [vmem:[%s2110 + $0x10a] sm:$0xff]
      %v2198 = vld [vmem:[%s2110 + $0x112] sm:$0xff]
      %v2199 = vld [vmem:[%s2110 + $0x122] sm:$0xff]
      %v2200 = vld [vmem:[%s2110 + $0x12a] sm:$0xff]
      %v2201 = vld [vmem:[%s2110 + $0x13a] sm:$0xff]
      %v2202 = vld [vmem:[%s2110 + $0x142] sm:$0xff]
      %v2203 = vld [vmem:[%s2110 + $0x152] sm:$0xff]
      %v2204 = vld [vmem:[%s2110 + $0x15a] sm:$0xff]
      %v2205 = vld [vmem:[%s2110 + $0x16a] sm:$0xff]
      %v2206 = vld [vmem:[%s2110 + $0x172] sm:$0xff]
      %v2207 = vld [vmem:[%s3] sm:$0xff]
      %v2208 = vld [vmem:[%s3 + $0x8] sm:$0xff]
      %v2209 = vld [vmem:[%s3 + $0x10] sm:$0xff]
      %v2210 = vld [vmem:[%s3 + $0x18] sm:$0xff]
      %v2211 = vld [vmem:[%s3 + $0x20] sm:$0xff]
      %v2212 = vld [vmem:[%s3 + $0x28] sm:$0xff]
      %v2213 = vld [vmem:[%s3 + $0x30] sm:$0xff]
      %v2214 = vld [vmem:[%s3 + $0x38] sm:$0xff]
      %v2215 = vld [vmem:[%s3 + $0x40] sm:$0xff]
      %v2216 = vld [vmem:[%s3 + $0x48] sm:$0xff]
      %v2217 = vld [vmem:[%s3 + $0x50] sm:$0xff]
      %v2218 = vld [vmem:[%s3 + $0x58] sm:$0xff]
      %v2219 = vld [vmem:[%s3 + $0x60] sm:$0xff]
      %v2220 = vld [vmem:[%s3 + $0x68] sm:$0xff]
      %v2221 = vld [vmem:[%s3 + $0x70] sm:$0xff]
      %v2222 = vld [vmem:[%s3 + $0x78] sm:$0xff]
      %v2223 = vld [vmem:[%s3 + $0x80] sm:$0xff]
      %v2224 = vld [vmem:[%s3 + $0x88] sm:$0xff]
      %v2225 = vld [vmem:[%s3 + $0x90] sm:$0xff]
      %v2226 = vld [vmem:[%s3 + $0x98] sm:$0xff]
      %v2227 = vld [vmem:[%s3 + $0xa0] sm:$0xff]
      %v2228 = vld [vmem:[%s3 + $0xa8] sm:$0xff]
      %v2229 = vld [vmem:[%s3 + $0xb0] sm:$0xff]
      %v2230 = vld [vmem:[%s3 + $0xb8] sm:$0xff]
      %v2231 = vld [vmem:[%s3 + $0xc0] sm:$0xff]
      %v2232 = vld [vmem:[%s3 + $0xc8] sm:$0xff]
      %v2233 = vld [vmem:[%s3 + $0xd0] sm:$0xff]
      %v2234 = vld [vmem:[%s3 + $0xd8] sm:$0xff]
      %v2235 = vld [vmem:[%s3 + $0xe0] sm:$0xff]
      %v2236 = vld [vmem:[%s3 + $0xe8] sm:$0xff]
      %v2237 = vld [vmem:[%s3 + $0xf0] sm:$0xff]
      %v2238 = vld [vmem:[%s3 + $0xf8] sm:$0xff]
      %v2239 = vld [vmem:[%s3 + $0x100] sm:$0xff]
      %v2240 = vld [vmem:[%s3 + $0x108] sm:$0xff]
      %v2241 = vld [vmem:[%s3 + $0x110] sm:$0xff]
      %v2242 = vld [vmem:[%s3 + $0x118] sm:$0xff]
      %v2243 = vld [vmem:[%s3 + $0x120] sm:$0xff]
      %v2244 = vld [vmem:[%s3 + $0x128] sm:$0xff]
      %v2245 = vld [vmem:[%s3 + $0x130] sm:$0xff]
      %v2246 = vld [vmem:[%s3 + $0x138] sm:$0xff]
      %v2247 = vld [vmem:[%s3 + $0x140] sm:$0xff]
      %v2248 = vld [vmem:[%s3 + $0x148] sm:$0xff]
      %v2249 = vld [vmem:[%s3 + $0x150] sm:$0xff]
      %v2250 = vld [vmem:[%s3 + $0x158] sm:$0xff]
      %v2251 = vld [vmem:[%s3 + $0x160] sm:$0xff]
      %v2252 = vld [vmem:[%s3 + $0x168] sm:$0xff]
      %v2253 = vld [vmem:[%s3 + $0x170] sm:$0xff]
      %v2254 = vld [vmem:[%s3 + $0x178] sm:$0xff]
      %v2255 = vld [vmem:[%s3 + $0x180] sm:$0xff]
      %v2256 = vld [vmem:[%s3 + $0x188] sm:$0xff]
      %v2257 = vld [vmem:[%s3 + $0x190] sm:$0xff]
      %v2258 = vld [vmem:[%s3 + $0x198] sm:$0xff]
      %v2259 = vld [vmem:[%s3 + $0x1a0] sm:$0xff]
      %v2260 = vld [vmem:[%s3 + $0x1a8] sm:$0xff]
      %v2261 = vld [vmem:[%s3 + $0x1b0] sm:$0xff]
      %v2262 = vld [vmem:[%s3 + $0x1b8] sm:$0xff]
      %v2263 = vld [vmem:[%s3 + $0x1c0] sm:$0xff]
      %v2264 = vld [vmem:[%s3 + $0x1c8] sm:$0xff]
      %v2265 = vld [vmem:[%s3 + $0x1d0] sm:$0xff]
      %v2266 = vld [vmem:[%s3 + $0x1d8] sm:$0xff]
      %v2267 = vld [vmem:[%s3 + $0x1e0] sm:$0xff]
      %v2268 = vld [vmem:[%s3 + $0x1e8] sm:$0xff]
      %v2269 = vld [vmem:[%s3 + $0x1f0] sm:$0xff]
      %v2270 = vld [vmem:[%s3 + $0x1f8] sm:$0xff]
      %v2271 = vld [vmem:[%s3 + $0x200] sm:$0xff]
      %v2272 = vld [vmem:[%s3 + $0x208] sm:$0xff]
      %v2273 = vld [vmem:[%s3 + $0x210] sm:$0xff]
      %v2274 = vld [vmem:[%s3 + $0x218] sm:$0xff]
      %v2275 = vld [vmem:[%s3 + $0x220] sm:$0xff]
      %v2276 = vld [vmem:[%s3 + $0x228] sm:$0xff]
      %v2277 = vld [vmem:[%s3 + $0x230] sm:$0xff]
      %v2278 = vld [vmem:[%s3 + $0x238] sm:$0xff]
      %v2279 = vld [vmem:[%s3 + $0x240] sm:$0xff]
      %v2280 = vld [vmem:[%s3 + $0x248] sm:$0xff]
      %v2281 = vld [vmem:[%s3 + $0x250] sm:$0xff]
      %v2282 = vld [vmem:[%s3 + $0x258] sm:$0xff]
      %v2283 = vld [vmem:[%s3 + $0x260] sm:$0xff]
      %v2284 = vld [vmem:[%s3 + $0x268] sm:$0xff]
      %v2285 = vld [vmem:[%s3 + $0x270] sm:$0xff]
      %v2286 = vld [vmem:[%s3 + $0x278] sm:$0xff]
      %v2287 = vld [vmem:[%s3 + $0x280] sm:$0xff]
      %v2288 = vld [vmem:[%s3 + $0x288] sm:$0xff]
      %v2289 = vld [vmem:[%s3 + $0x290] sm:$0xff]
      %v2290 = vld [vmem:[%s3 + $0x298] sm:$0xff]
      %v2291 = vld [vmem:[%s3 + $0x2a0] sm:$0xff]
      %v2292 = vld [vmem:[%s3 + $0x2a8] sm:$0xff]
      %v2293 = vld [vmem:[%s3 + $0x2b0] sm:$0xff]
      %v2294 = vld [vmem:[%s3 + $0x2b8] sm:$0xff]
      %v2295 = vld [vmem:[%s3 + $0x2c0] sm:$0xff]
      %v2296 = vld [vmem:[%s3 + $0x2c8] sm:$0xff]
      %v2297 = vld [vmem:[%s3 + $0x2d0] sm:$0xff]
      %v2298 = vld [vmem:[%s3 + $0x2d8] sm:$0xff]
      %v2299 = vld [vmem:[%s3 + $0x2e0] sm:$0xff]
      %v2300 = vld [vmem:[%s3 + $0x2e8] sm:$0xff]
      %v2301 = vld [vmem:[%s3 + $0x2f0] sm:$0xff]
      %v2302 = vld [vmem:[%s3 + $0x2f8] sm:$0xff]
      %v2303 = vld [vmem:[%s3 + $0x300] sm:$0xff]
      %v2304 = vld [vmem:[%s3 + $0x308] sm:$0xff]
      %v2305 = vld [vmem:[%s3 + $0x310] sm:$0xff]
      %v2306 = vld [vmem:[%s3 + $0x318] sm:$0xff]
      %v2307 = vld [vmem:[%s3 + $0x320] sm:$0xff]
      %v2308 = vld [vmem:[%s3 + $0x328] sm:$0xff]
      %v2309 = vld [vmem:[%s3 + $0x330] sm:$0xff]
      %v2310 = vld [vmem:[%s3 + $0x338] sm:$0xff]
      %v2311 = vld [vmem:[%s3 + $0x340] sm:$0xff]
      %v2312 = vld [vmem:[%s3 + $0x348] sm:$0xff]
      %v2313 = vld [vmem:[%s3 + $0x350] sm:$0xff]
      %v2314 = vld [vmem:[%s3 + $0x358] sm:$0xff]
      %v2315 = vld [vmem:[%s3 + $0x360] sm:$0xff]
      %v2316 = vld [vmem:[%s3 + $0x368] sm:$0xff]
      %v2317 = vld [vmem:[%s3 + $0x370] sm:$0xff]
      %v2318 = vld [vmem:[%s3 + $0x378] sm:$0xff]
      %v2319 = vld [vmem:[%s3 + $0x380] sm:$0xff]
      %v2320 = vld [vmem:[%s3 + $0x388] sm:$0xff]
      %v2321 = vld [vmem:[%s3 + $0x390] sm:$0xff]
      %v2322 = vld [vmem:[%s3 + $0x398] sm:$0xff]
      %v2323 = vld [vmem:[%s3 + $0x3a0] sm:$0xff]
      %v2324 = vld [vmem:[%s3 + $0x3a8] sm:$0xff]
      %v2325 = vld [vmem:[%s3 + $0x3b0] sm:$0xff]
      %v2326 = vld [vmem:[%s3 + $0x3b8] sm:$0xff]
      %v2327 = vld [vmem:[%s3 + $0x3c0] sm:$0xff]
      %v2328 = vld [vmem:[%s3 + $0x3c8] sm:$0xff]
      %v2329 = vld [vmem:[%s3 + $0x3d0] sm:$0xff]
      %v2330 = vld [vmem:[%s3 + $0x3d8] sm:$0xff]
      %v2331 = vld [vmem:[%s3 + $0x3e0] sm:$0xff]
      %v2332 = vld [vmem:[%s3 + $0x3e8] sm:$0xff]
      %v2333 = vld [vmem:[%s3 + $0x3f0] sm:$0xff]
      %v2334 = vld [vmem:[%s3 + $0x3f8] sm:$0xff]
      %v2335 = vld [vmem:[%s3 + $0x400] sm:$0xff]
      %v2336 = vld [vmem:[%s3 + $0x408] sm:$0xff]
      %v2337 = vld [vmem:[%s3 + $0x410] sm:$0xff]
      %v2338 = vld [vmem:[%s3 + $0x418] sm:$0xff]
      %v2339 = vld [vmem:[%s3 + $0x420] sm:$0xff]
      %v2340 = vld [vmem:[%s3 + $0x428] sm:$0xff]
      %v2341 = vld [vmem:[%s3 + $0x430] sm:$0xff]
      %v2342 = vld [vmem:[%s3 + $0x438] sm:$0xff]
      %v2343 = vld [vmem:[%s3 + $0x440] sm:$0xff]
      %v2344 = vld [vmem:[%s3 + $0x448] sm:$0xff]
      %v2345 = vld [vmem:[%s3 + $0x450] sm:$0xff]
      %v2346 = vld [vmem:[%s3 + $0x458] sm:$0xff]
      %v2347 = vld [vmem:[%s3 + $0x460] sm:$0xff]
      %v2348 = vld [vmem:[%s3 + $0x468] sm:$0xff]
      %v2349 = vld [vmem:[%s3 + $0x470] sm:$0xff]
      %v2350 = vld [vmem:[%s3 + $0x478] sm:$0xff]
      %v2351 = vld [vmem:[%s4] sm:$0x1]
      %v2353 = vperm.slane %v2351, 0
      %2355 = vmatpush.msra.mxu0 %v2222
      %2356 = vmatpush.msra.mxu0 %v2221
      %2357 = vmatpush.msra.mxu0 %v2220
      %2358 = vmatpush.msra.mxu0 %v2219
      %2359 = vmatpush.msra.mxu0 %v2218
      %2360 = vmatpush.msra.mxu0 %v2217
      %2361 = vmatpush.msra.mxu0 %v2216
      %2362 = vmatpush.msra.mxu0 %v2215
      %2363 = vmatpush.msra.mxu0 %v2214
      %2364 = vmatpush.msra.mxu0 %v2213
      %2365 = vmatpush.msra.mxu0 %v2212
      %2366 = vmatpush.msra.mxu0 %v2211
      %2367 = vmatpush.msra.mxu0 %v2210
      %2368 = vmatpush.msra.mxu0 %v2209
      %2369 = vmatpush.msra.mxu0 %v2208
      %2370 = vmatpush.msra.mxu0 %v2207
      %2371 = vmatmul.f32.gmra.mxu0 %v1918
      %v2372 = vpop.f32.mrf.mxu0
      %v2373 = vadd.f32 %v2353, %v2372
      %2374 = vmatmul.f32.gmra.mxu0 %v1919
      %v2375 = vpop.f32.mrf.mxu0
      %v2376 = vadd.f32 %v2353, %v2375
      %2377 = vmatmul.f32.gmra.mxu0 %v1920
      %v2378 = vpop.f32.mrf.mxu0
      %v2379 = vadd.f32 %v2353, %v2378
      %2380 = vmatmul.f32.gmra.mxu0 %v1921
      %v2381 = vpop.f32.mrf.mxu0
      %v2382 = vadd.f32 %v2353, %v2381
      %2383 = vmatmul.f32.gmra.mxu0 %v1922
      %v2384 = vpop.f32.mrf.mxu0
      %v2385 = vadd.f32 %v2353, %v2384
      %2386 = vmatmul.f32.gmra.mxu0 %v1923
      %v2387 = vpop.f32.mrf.mxu0
      %v2388 = vadd.f32 %v2353, %v2387
      %2389 = vmatmul.f32.gmra.mxu0 %v1924
      %v2390 = vpop.f32.mrf.mxu0
      %v2391 = vadd.f32 %v2353, %v2390
      %2392 = vmatmul.f32.gmra.mxu0 %v1925
      %v2393 = vpop.f32.mrf.mxu0
      %v2394 = vadd.f32 %v2353, %v2393
      %2395 = vmatmul.f32.gmra.mxu0 %v1926
      %v2396 = vpop.f32.mrf.mxu0
      %v2397 = vadd.f32 %v2353, %v2396
      %2398 = vmatmul.f32.gmra.mxu0 %v1927
      %v2399 = vpop.f32.mrf.mxu0
      %v2400 = vadd.f32 %v2353, %v2399
      %2401 = vmatmul.f32.gmra.mxu0 %v1928
      %v2402 = vpop.f32.mrf.mxu0
      %v2403 = vadd.f32 %v2353, %v2402
      %2404 = vmatmul.f32.gmra.mxu0 %v1929
      %v2405 = vpop.f32.mrf.mxu0
      %v2406 = vadd.f32 %v2353, %v2405
      %2407 = vmatmul.f32.gmra.mxu0 %v1930
      %v2408 = vpop.f32.mrf.mxu0
      %v2409 = vadd.f32 %v2353, %v2408
      %2410 = vmatmul.f32.gmra.mxu0 %v1931
      %v2411 = vpop.f32.mrf.mxu0
      %v2412 = vadd.f32 %v2353, %v2411
      %2413 = vmatmul.f32.gmra.mxu0 %v1932
      %v2414 = vpop.f32.mrf.mxu0
      %v2415 = vadd.f32 %v2353, %v2414
      %2416 = vmatmul.f32.gmra.mxu0 %v1933
      %v2417 = vpop.f32.mrf.mxu0
      %v2418 = vadd.f32 %v2353, %v2417
      %2419 = vmatmul.f32.gmra.mxu0 %v1934
      %v2420 = vpop.f32.mrf.mxu0
      %v2421 = vadd.f32 %v2353, %v2420
      %2422 = vmatmul.f32.gmra.mxu0 %v1935
      %v2423 = vpop.f32.mrf.mxu0
      %v2424 = vadd.f32 %v2353, %v2423
      %2425 = vmatmul.f32.gmra.mxu0 %v1936
      %v2426 = vpop.f32.mrf.mxu0
      %v2427 = vadd.f32 %v2353, %v2426
      %2428 = vmatmul.f32.gmra.mxu0 %v1937
      %v2429 = vpop.f32.mrf.mxu0
      %v2430 = vadd.f32 %v2353, %v2429
      %2431 = vmatmul.f32.gmra.mxu0 %v1938
      %v2432 = vpop.f32.mrf.mxu0
      %v2433 = vadd.f32 %v2353, %v2432
      %2434 = vmatmul.f32.gmra.mxu0 %v1939
      %v2435 = vpop.f32.mrf.mxu0
      %v2436 = vadd.f32 %v2353, %v2435
      %2437 = vmatmul.f32.gmra.mxu0 %v1940
      %v2438 = vpop.f32.mrf.mxu0
      %v2439 = vadd.f32 %v2353, %v2438
      %2440 = vmatmul.f32.gmra.mxu0 %v1941
      %v2441 = vpop.f32.mrf.mxu0
      %v2442 = vadd.f32 %v2353, %v2441
      %2443 = vmatmul.f32.gmra.mxu0 %v1942
      %v2444 = vpop.f32.mrf.mxu0
      %v2445 = vadd.f32 %v2353, %v2444
      %2446 = vmatmul.f32.gmra.mxu0 %v1943
      %v2447 = vpop.f32.mrf.mxu0
      %v2448 = vadd.f32 %v2353, %v2447
      %2449 = vmatmul.f32.gmra.mxu0 %v1944
      %v2450 = vpop.f32.mrf.mxu0
      %v2451 = vadd.f32 %v2353, %v2450
      %2452 = vmatmul.f32.gmra.mxu0 %v1945
      %v2453 = vpop.f32.mrf.mxu0
      %v2454 = vadd.f32 %v2353, %v2453
      %2455 = vmatmul.f32.gmra.mxu0 %v1946
      %v2456 = vpop.f32.mrf.mxu0
      %v2457 = vadd.f32 %v2353, %v2456
      %2458 = vmatmul.f32.gmra.mxu0 %v1947
      %v2459 = vpop.f32.mrf.mxu0
      %v2460 = vadd.f32 %v2353, %v2459
      %2461 = vmatmul.f32.gmra.mxu0 %v1948
      %v2462 = vpop.f32.mrf.mxu0
      %v2463 = vadd.f32 %v2353, %v2462
      %2464 = vmatmul.f32.gmra.mxu0 %v1949
      %v2465 = vpop.f32.mrf.mxu0
      %v2466 = vadd.f32 %v2353, %v2465
      %2467 = vdwg.mxu0
      %2468 = vmatpush.msra.mxu0 %v2238
      %2469 = vmatpush.msra.mxu0 %v2237
      %2470 = vmatpush.msra.mxu0 %v2236
      %2471 = vmatpush.msra.mxu0 %v2235
      %2472 = vmatpush.msra.mxu0 %v2234
      %2473 = vmatpush.msra.mxu0 %v2233
      %2474 = vmatpush.msra.mxu0 %v2232
      %2475 = vmatpush.msra.mxu0 %v2231
      %2476 = vmatpush.msra.mxu0 %v2230
      %2477 = vmatpush.msra.mxu0 %v2229
      %2478 = vmatpush.msra.mxu0 %v2228
      %2479 = vmatpush.msra.mxu0 %v2227
      %2480 = vmatpush.msra.mxu0 %v2226
      %2481 = vmatpush.msra.mxu0 %v2225
      %2482 = vmatpush.msra.mxu0 %v2224
      %2483 = vmatpush.msra.mxu0 %v2223
      %2484 = vmatmul.f32.gmra.mxu0 %v1950
      %v2485 = vpop.f32.mrf.mxu0
      %v2486 = vadd.f32 %v2373, %v2485
      %2487 = vmatmul.f32.gmra.mxu0 %v1951
      %v2488 = vpop.f32.mrf.mxu0
      %v2489 = vadd.f32 %v2376, %v2488
      %2490 = vmatmul.f32.gmra.mxu0 %v1952
      %v2491 = vpop.f32.mrf.mxu0
      %v2492 = vadd.f32 %v2379, %v2491
      %2493 = vmatmul.f32.gmra.mxu0 %v1953
      %v2494 = vpop.f32.mrf.mxu0
      %v2495 = vadd.f32 %v2382, %v2494
      %2496 = vmatmul.f32.gmra.mxu0 %v1954
      %v2497 = vpop.f32.mrf.mxu0
      %v2498 = vadd.f32 %v2385, %v2497
      %2499 = vmatmul.f32.gmra.mxu0 %v1955
      %v2500 = vpop.f32.mrf.mxu0
      %v2501 = vadd.f32 %v2388, %v2500
      %2502 = vmatmul.f32.gmra.mxu0 %v1956
      %v2503 = vpop.f32.mrf.mxu0
      %v2504 = vadd.f32 %v2391, %v2503
      %2505 = vmatmul.f32.gmra.mxu0 %v1957
      %v2506 = vpop.f32.mrf.mxu0
      %v2507 = vadd.f32 %v2394, %v2506
      %2508 = vmatmul.f32.gmra.mxu0 %v1958
      %v2509 = vpop.f32.mrf.mxu0
      %v2510 = vadd.f32 %v2397, %v2509
      %2511 = vmatmul.f32.gmra.mxu0 %v1959
      %v2512 = vpop.f32.mrf.mxu0
      %v2513 = vadd.f32 %v2400, %v2512
      %2514 = vmatmul.f32.gmra.mxu0 %v1960
      %v2515 = vpop.f32.mrf.mxu0
      %v2516 = vadd.f32 %v2403, %v2515
      %2517 = vmatmul.f32.gmra.mxu0 %v1961
      %v2518 = vpop.f32.mrf.mxu0
      %v2519 = vadd.f32 %v2406, %v2518
      %2520 = vmatmul.f32.gmra.mxu0 %v1962
      %v2521 = vpop.f32.mrf.mxu0
      %v2522 = vadd.f32 %v2409, %v2521
      %2523 = vmatmul.f32.gmra.mxu0 %v1963
      %v2524 = vpop.f32.mrf.mxu0
      %v2525 = vadd.f32 %v2412, %v2524
      %2526 = vmatmul.f32.gmra.mxu0 %v1964
      %v2527 = vpop.f32.mrf.mxu0
      %v2528 = vadd.f32 %v2415, %v2527
      %2529 = vmatmul.f32.gmra.mxu0 %v1965
      %v2530 = vpop.f32.mrf.mxu0
      %v2531 = vadd.f32 %v2418, %v2530
      %2532 = vmatmul.f32.gmra.mxu0 %v1966
      %v2533 = vpop.f32.mrf.mxu0
      %v2534 = vadd.f32 %v2421, %v2533
      %2535 = vmatmul.f32.gmra.mxu0 %v1967
      %v2536 = vpop.f32.mrf.mxu0
      %v2537 = vadd.f32 %v2424, %v2536
      %2538 = vmatmul.f32.gmra.mxu0 %v1968
      %v2539 = vpop.f32.mrf.mxu0
      %v2540 = vadd.f32 %v2427, %v2539
      %2541 = vmatmul.f32.gmra.mxu0 %v1969
      %v2542 = vpop.f32.mrf.mxu0
      %v2543 = vadd.f32 %v2430, %v2542
      %2544 = vmatmul.f32.gmra.mxu0 %v1970
      %v2545 = vpop.f32.mrf.mxu0
      %v2546 = vadd.f32 %v2433, %v2545
      %2547 = vmatmul.f32.gmra.mxu0 %v1971
      %v2548 = vpop.f32.mrf.mxu0
      %v2549 = vadd.f32 %v2436, %v2548
      %2550 = vmatmul.f32.gmra.mxu0 %v1972
      %v2551 = vpop.f32.mrf.mxu0
      %v2552 = vadd.f32 %v2439, %v2551
      %2553 = vmatmul.f32.gmra.mxu0 %v1973
      %v2554 = vpop.f32.mrf.mxu0
      %v2555 = vadd.f32 %v2442, %v2554
      %2556 = vmatmul.f32.gmra.mxu0 %v1974
      %v2557 = vpop.f32.mrf.mxu0
      %v2558 = vadd.f32 %v2445, %v2557
      %2559 = vmatmul.f32.gmra.mxu0 %v1975
      %v2560 = vpop.f32.mrf.mxu0
      %v2561 = vadd.f32 %v2448, %v2560
      %2562 = vmatmul.f32.gmra.mxu0 %v1976
      %v2563 = vpop.f32.mrf.mxu0
      %v2564 = vadd.f32 %v2451, %v2563
      %2565 = vmatmul.f32.gmra.mxu0 %v1977
      %v2566 = vpop.f32.mrf.mxu0
      %v2567 = vadd.f32 %v2454, %v2566
      %2568 = vmatmul.f32.gmra.mxu0 %v1978
      %v2569 = vpop.f32.mrf.mxu0
      %v2570 = vadd.f32 %v2457, %v2569
      %2571 = vmatmul.f32.gmra.mxu0 %v1979
      %v2572 = vpop.f32.mrf.mxu0
      %v2573 = vadd.f32 %v2460, %v2572
      %2574 = vmatmul.f32.gmra.mxu0 %v1980
      %v2575 = vpop.f32.mrf.mxu0
      %v2576 = vadd.f32 %v2463, %v2575
      %2577 = vmatmul.f32.gmra.mxu0 %v1981
      %v2578 = vpop.f32.mrf.mxu0
      %v2579 = vadd.f32 %v2466, %v2578
      %2580 = vdwg.mxu0
      %2581 = vmatpush.msra.mxu0 %v2254
      %2582 = vmatpush.msra.mxu0 %v2253
      %2583 = vmatpush.msra.mxu0 %v2252
      %2584 = vmatpush.msra.mxu0 %v2251
      %2585 = vmatpush.msra.mxu0 %v2250
      %2586 = vmatpush.msra.mxu0 %v2249
      %2587 = vmatpush.msra.mxu0 %v2248
      %2588 = vmatpush.msra.mxu0 %v2247
      %2589 = vmatpush.msra.mxu0 %v2246
      %2590 = vmatpush.msra.mxu0 %v2245
      %2591 = vmatpush.msra.mxu0 %v2244
      %2592 = vmatpush.msra.mxu0 %v2243
      %2593 = vmatpush.msra.mxu0 %v2242
      %2594 = vmatpush.msra.mxu0 %v2241
      %2595 = vmatpush.msra.mxu0 %v2240
      %2596 = vmatpush.msra.mxu0 %v2239
      %2597 = vmatmul.f32.gmra.mxu0 %v1982
      %v2598 = vpop.f32.mrf.mxu0
      %v2599 = vadd.f32 %v2486, %v2598
      %2600 = vmatmul.f32.gmra.mxu0 %v1983
      %v2601 = vpop.f32.mrf.mxu0
      %v2602 = vadd.f32 %v2489, %v2601
      %2603 = vmatmul.f32.gmra.mxu0 %v1984
      %v2604 = vpop.f32.mrf.mxu0
      %v2605 = vadd.f32 %v2492, %v2604
      %2606 = vmatmul.f32.gmra.mxu0 %v1985
      %v2607 = vpop.f32.mrf.mxu0
      %v2608 = vadd.f32 %v2495, %v2607
      %2609 = vmatmul.f32.gmra.mxu0 %v1986
      %v2610 = vpop.f32.mrf.mxu0
      %v2611 = vadd.f32 %v2498, %v2610
      %2612 = vmatmul.f32.gmra.mxu0 %v1987
      %v2613 = vpop.f32.mrf.mxu0
      %v2614 = vadd.f32 %v2501, %v2613
      %2615 = vmatmul.f32.gmra.mxu0 %v1988
      %v2616 = vpop.f32.mrf.mxu0
      %v2617 = vadd.f32 %v2504, %v2616
      %2618 = vmatmul.f32.gmra.mxu0 %v1989
      %v2619 = vpop.f32.mrf.mxu0
      %v2620 = vadd.f32 %v2507, %v2619
      %2621 = vmatmul.f32.gmra.mxu0 %v1990
      %v2622 = vpop.f32.mrf.mxu0
      %v2623 = vadd.f32 %v2510, %v2622
      %2624 = vmatmul.f32.gmra.mxu0 %v1991
      %v2625 = vpop.f32.mrf.mxu0
      %v2626 = vadd.f32 %v2513, %v2625
      %2627 = vmatmul.f32.gmra.mxu0 %v1992
      %v2628 = vpop.f32.mrf.mxu0
      %v2629 = vadd.f32 %v2516, %v2628
      %2630 = vmatmul.f32.gmra.mxu0 %v1993
      %v2631 = vpop.f32.mrf.mxu0
      %v2632 = vadd.f32 %v2519, %v2631
      %2633 = vmatmul.f32.gmra.mxu0 %v1994
      %v2634 = vpop.f32.mrf.mxu0
      %v2635 = vadd.f32 %v2522, %v2634
      %2636 = vmatmul.f32.gmra.mxu0 %v1995
      %v2637 = vpop.f32.mrf.mxu0
      %v2638 = vadd.f32 %v2525, %v2637
      %2639 = vmatmul.f32.gmra.mxu0 %v1996
      %v2640 = vpop.f32.mrf.mxu0
      %v2641 = vadd.f32 %v2528, %v2640
      %2642 = vmatmul.f32.gmra.mxu0 %v1997
      %v2643 = vpop.f32.mrf.mxu0
      %v2644 = vadd.f32 %v2531, %v2643
      %2645 = vmatmul.f32.gmra.mxu0 %v1998
      %v2646 = vpop.f32.mrf.mxu0
      %v2647 = vadd.f32 %v2534, %v2646
      %2648 = vmatmul.f32.gmra.mxu0 %v1999
      %v2649 = vpop.f32.mrf.mxu0
      %v2650 = vadd.f32 %v2537, %v2649
      %2651 = vmatmul.f32.gmra.mxu0 %v2000
      %v2652 = vpop.f32.mrf.mxu0
      %v2653 = vadd.f32 %v2540, %v2652
      %2654 = vmatmul.f32.gmra.mxu0 %v2001
      %v2655 = vpop.f32.mrf.mxu0
      %v2656 = vadd.f32 %v2543, %v2655
      %2657 = vmatmul.f32.gmra.mxu0 %v2002
      %v2658 = vpop.f32.mrf.mxu0
      %v2659 = vadd.f32 %v2546, %v2658
      %2660 = vmatmul.f32.gmra.mxu0 %v2003
      %v2661 = vpop.f32.mrf.mxu0
      %v2662 = vadd.f32 %v2549, %v2661
      %2663 = vmatmul.f32.gmra.mxu0 %v2004
      %v2664 = vpop.f32.mrf.mxu0
      %v2665 = vadd.f32 %v2552, %v2664
      %2666 = vmatmul.f32.gmra.mxu0 %v2005
      %v2667 = vpop.f32.mrf.mxu0
      %v2668 = vadd.f32 %v2555, %v2667
      %2669 = vmatmul.f32.gmra.mxu0 %v2006
      %v2670 = vpop.f32.mrf.mxu0
      %v2671 = vadd.f32 %v2558, %v2670
      %2672 = vmatmul.f32.gmra.mxu0 %v2007
      %v2673 = vpop.f32.mrf.mxu0
      %v2674 = vadd.f32 %v2561, %v2673
      %2675 = vmatmul.f32.gmra.mxu0 %v2008
      %v2676 = vpop.f32.mrf.mxu0
      %v2677 = vadd.f32 %v2564, %v2676
      %2678 = vmatmul.f32.gmra.mxu0 %v2009
      %v2679 = vpop.f32.mrf.mxu0
      %v2680 = vadd.f32 %v2567, %v2679
      %2681 = vmatmul.f32.gmra.mxu0 %v2010
      %v2682 = vpop.f32.mrf.mxu0
      %v2683 = vadd.f32 %v2570, %v2682
      %2684 = vmatmul.f32.gmra.mxu0 %v2011
      %v2685 = vpop.f32.mrf.mxu0
      %v2686 = vadd.f32 %v2573, %v2685
      %2687 = vmatmul.f32.gmra.mxu0 %v2012
      %v2688 = vpop.f32.mrf.mxu0
      %v2689 = vadd.f32 %v2576, %v2688
      %2690 = vmatmul.f32.gmra.mxu0 %v2013
      %v2691 = vpop.f32.mrf.mxu0
      %v2692 = vadd.f32 %v2579, %v2691
      %2693 = vdwg.mxu0
      %2694 = vmatpush.msra.mxu0 %v2270
      %2695 = vmatpush.msra.mxu0 %v2269
      %2696 = vmatpush.msra.mxu0 %v2268
      %2697 = vmatpush.msra.mxu0 %v2267
      %2698 = vmatpush.msra.mxu0 %v2266
      %2699 = vmatpush.msra.mxu0 %v2265
      %2700 = vmatpush.msra.mxu0 %v2264
      %2701 = vmatpush.msra.mxu0 %v2263
      %2702 = vmatpush.msra.mxu0 %v2262
      %2703 = vmatpush.msra.mxu0 %v2261
      %2704 = vmatpush.msra.mxu0 %v2260
      %2705 = vmatpush.msra.mxu0 %v2259
      %2706 = vmatpush.msra.mxu0 %v2258
      %2707 = vmatpush.msra.mxu0 %v2257
      %2708 = vmatpush.msra.mxu0 %v2256
      %2709 = vmatpush.msra.mxu0 %v2255
      %2710 = vmatmul.f32.gmra.mxu0 %v2014
      %v2711 = vpop.f32.mrf.mxu0
      %v2712 = vadd.f32 %v2599, %v2711
      %2713 = vmatmul.f32.gmra.mxu0 %v2015
      %v2714 = vpop.f32.mrf.mxu0
      %v2715 = vadd.f32 %v2602, %v2714
      %2716 = vmatmul.f32.gmra.mxu0 %v2016
      %v2717 = vpop.f32.mrf.mxu0
      %v2718 = vadd.f32 %v2605, %v2717
      %2719 = vmatmul.f32.gmra.mxu0 %v2017
      %v2720 = vpop.f32.mrf.mxu0
      %v2721 = vadd.f32 %v2608, %v2720
      %2722 = vmatmul.f32.gmra.mxu0 %v2018
      %v2723 = vpop.f32.mrf.mxu0
      %v2724 = vadd.f32 %v2611, %v2723
      %2725 = vmatmul.f32.gmra.mxu0 %v2019
      %v2726 = vpop.f32.mrf.mxu0
      %v2727 = vadd.f32 %v2614, %v2726
      %2728 = vmatmul.f32.gmra.mxu0 %v2020
      %v2729 = vpop.f32.mrf.mxu0
      %v2730 = vadd.f32 %v2617, %v2729
      %2731 = vmatmul.f32.gmra.mxu0 %v2021
      %v2732 = vpop.f32.mrf.mxu0
      %v2733 = vadd.f32 %v2620, %v2732
      %2734 = vmatmul.f32.gmra.mxu0 %v2022
      %v2735 = vpop.f32.mrf.mxu0
      %v2736 = vadd.f32 %v2623, %v2735
      %2737 = vmatmul.f32.gmra.mxu0 %v2023
      %v2738 = vpop.f32.mrf.mxu0
      %v2739 = vadd.f32 %v2626, %v2738
      %2740 = vmatmul.f32.gmra.mxu0 %v2024
      %v2741 = vpop.f32.mrf.mxu0
      %v2742 = vadd.f32 %v2629, %v2741
      %2743 = vmatmul.f32.gmra.mxu0 %v2025
      %v2744 = vpop.f32.mrf.mxu0
      %v2745 = vadd.f32 %v2632, %v2744
      %2746 = vmatmul.f32.gmra.mxu0 %v2026
      %v2747 = vpop.f32.mrf.mxu0
      %v2748 = vadd.f32 %v2635, %v2747
      %2749 = vmatmul.f32.gmra.mxu0 %v2027
      %v2750 = vpop.f32.mrf.mxu0
      %v2751 = vadd.f32 %v2638, %v2750
      %2752 = vmatmul.f32.gmra.mxu0 %v2028
      %v2753 = vpop.f32.mrf.mxu0
      %v2754 = vadd.f32 %v2641, %v2753
      %2755 = vmatmul.f32.gmra.mxu0 %v2029
      %v2756 = vpop.f32.mrf.mxu0
      %v2757 = vadd.f32 %v2644, %v2756
      %2758 = vmatmul.f32.gmra.mxu0 %v2030
      %v2759 = vpop.f32.mrf.mxu0
      %v2760 = vadd.f32 %v2647, %v2759
      %2761 = vmatmul.f32.gmra.mxu0 %v2031
      %v2762 = vpop.f32.mrf.mxu0
      %v2763 = vadd.f32 %v2650, %v2762
      %2764 = vmatmul.f32.gmra.mxu0 %v2032
      %v2765 = vpop.f32.mrf.mxu0
      %v2766 = vadd.f32 %v2653, %v2765
      %2767 = vmatmul.f32.gmra.mxu0 %v2033
      %v2768 = vpop.f32.mrf.mxu0
      %v2769 = vadd.f32 %v2656, %v2768
      %2770 = vmatmul.f32.gmra.mxu0 %v2034
      %v2771 = vpop.f32.mrf.mxu0
      %v2772 = vadd.f32 %v2659, %v2771
      %2773 = vmatmul.f32.gmra.mxu0 %v2035
      %v2774 = vpop.f32.mrf.mxu0
      %v2775 = vadd.f32 %v2662, %v2774
      %2776 = vmatmul.f32.gmra.mxu0 %v2036
      %v2777 = vpop.f32.mrf.mxu0
      %v2778 = vadd.f32 %v2665, %v2777
      %2779 = vmatmul.f32.gmra.mxu0 %v2037
      %v2780 = vpop.f32.mrf.mxu0
      %v2781 = vadd.f32 %v2668, %v2780
      %2782 = vmatmul.f32.gmra.mxu0 %v2038
      %v2783 = vpop.f32.mrf.mxu0
      %v2784 = vadd.f32 %v2671, %v2783
      %2785 = vmatmul.f32.gmra.mxu0 %v2039
      %v2786 = vpop.f32.mrf.mxu0
      %v2787 = vadd.f32 %v2674, %v2786
      %2788 = vmatmul.f32.gmra.mxu0 %v2040
      %v2789 = vpop.f32.mrf.mxu0
      %v2790 = vadd.f32 %v2677, %v2789
      %2791 = vmatmul.f32.gmra.mxu0 %v2041
      %v2792 = vpop.f32.mrf.mxu0
      %v2793 = vadd.f32 %v2680, %v2792
      %2794 = vmatmul.f32.gmra.mxu0 %v2042
      %v2795 = vpop.f32.mrf.mxu0
      %v2796 = vadd.f32 %v2683, %v2795
      %2797 = vmatmul.f32.gmra.mxu0 %v2043
      %v2798 = vpop.f32.mrf.mxu0
      %v2799 = vadd.f32 %v2686, %v2798
      %2800 = vmatmul.f32.gmra.mxu0 %v2044
      %v2801 = vpop.f32.mrf.mxu0
      %v2802 = vadd.f32 %v2689, %v2801
      %2803 = vmatmul.f32.gmra.mxu0 %v2045
      %v2804 = vpop.f32.mrf.mxu0
      %v2805 = vadd.f32 %v2692, %v2804
      %2806 = vdwg.mxu0
      %2807 = vmatpush.msra.mxu0 %v2286
      %2808 = vmatpush.msra.mxu0 %v2285
      %2809 = vmatpush.msra.mxu0 %v2284
      %2810 = vmatpush.msra.mxu0 %v2283
      %2811 = vmatpush.msra.mxu0 %v2282
      %2812 = vmatpush.msra.mxu0 %v2281
      %2813 = vmatpush.msra.mxu0 %v2280
      %2814 = vmatpush.msra.mxu0 %v2279
      %2815 = vmatpush.msra.mxu0 %v2278
      %2816 = vmatpush.msra.mxu0 %v2277
      %2817 = vmatpush.msra.mxu0 %v2276
      %2818 = vmatpush.msra.mxu0 %v2275
      %2819 = vmatpush.msra.mxu0 %v2274
      %2820 = vmatpush.msra.mxu0 %v2273
      %2821 = vmatpush.msra.mxu0 %v2272
      %2822 = vmatpush.msra.mxu0 %v2271
      %2823 = vmatmul.f32.gmra.mxu0 %v2046
      %v2824 = vpop.f32.mrf.mxu0
      %v2825 = vadd.f32 %v2712, %v2824
      %2826 = vmatmul.f32.gmra.mxu0 %v2047
      %v2827 = vpop.f32.mrf.mxu0
      %v2828 = vadd.f32 %v2715, %v2827
      %2829 = vmatmul.f32.gmra.mxu0 %v2048
      %v2830 = vpop.f32.mrf.mxu0
      %v2831 = vadd.f32 %v2718, %v2830
      %2832 = vmatmul.f32.gmra.mxu0 %v2049
      %v2833 = vpop.f32.mrf.mxu0
      %v2834 = vadd.f32 %v2721, %v2833
      %2835 = vmatmul.f32.gmra.mxu0 %v2050
      %v2836 = vpop.f32.mrf.mxu0
      %v2837 = vadd.f32 %v2724, %v2836
      %2838 = vmatmul.f32.gmra.mxu0 %v2051
      %v2839 = vpop.f32.mrf.mxu0
      %v2840 = vadd.f32 %v2727, %v2839
      %2841 = vmatmul.f32.gmra.mxu0 %v2052
      %v2842 = vpop.f32.mrf.mxu0
      %v2843 = vadd.f32 %v2730, %v2842
      %2844 = vmatmul.f32.gmra.mxu0 %v2053
      %v2845 = vpop.f32.mrf.mxu0
      %v2846 = vadd.f32 %v2733, %v2845
      %2847 = vmatmul.f32.gmra.mxu0 %v2054
      %v2848 = vpop.f32.mrf.mxu0
      %v2849 = vadd.f32 %v2736, %v2848
      %2850 = vmatmul.f32.gmra.mxu0 %v2055
      %v2851 = vpop.f32.mrf.mxu0
      %v2852 = vadd.f32 %v2739, %v2851
      %2853 = vmatmul.f32.gmra.mxu0 %v2056
      %v2854 = vpop.f32.mrf.mxu0
      %v2855 = vadd.f32 %v2742, %v2854
      %2856 = vmatmul.f32.gmra.mxu0 %v2057
      %v2857 = vpop.f32.mrf.mxu0
      %v2858 = vadd.f32 %v2745, %v2857
      %2859 = vmatmul.f32.gmra.mxu0 %v2058
      %v2860 = vpop.f32.mrf.mxu0
      %v2861 = vadd.f32 %v2748, %v2860
      %2862 = vmatmul.f32.gmra.mxu0 %v2059
      %v2863 = vpop.f32.mrf.mxu0
      %v2864 = vadd.f32 %v2751, %v2863
      %2865 = vmatmul.f32.gmra.mxu0 %v2060
      %v2866 = vpop.f32.mrf.mxu0
      %v2867 = vadd.f32 %v2754, %v2866
      %2868 = vmatmul.f32.gmra.mxu0 %v2061
      %v2869 = vpop.f32.mrf.mxu0
      %v2870 = vadd.f32 %v2757, %v2869
      %2871 = vmatmul.f32.gmra.mxu0 %v2062
      %v2872 = vpop.f32.mrf.mxu0
      %v2873 = vadd.f32 %v2760, %v2872
      %2874 = vmatmul.f32.gmra.mxu0 %v2063
      %v2875 = vpop.f32.mrf.mxu0
      %v2876 = vadd.f32 %v2763, %v2875
      %2877 = vmatmul.f32.gmra.mxu0 %v2064
      %v2878 = vpop.f32.mrf.mxu0
      %v2879 = vadd.f32 %v2766, %v2878
      %2880 = vmatmul.f32.gmra.mxu0 %v2065
      %v2881 = vpop.f32.mrf.mxu0
      %v2882 = vadd.f32 %v2769, %v2881
      %2883 = vmatmul.f32.gmra.mxu0 %v2066
      %v2884 = vpop.f32.mrf.mxu0
      %v2885 = vadd.f32 %v2772, %v2884
      %2886 = vmatmul.f32.gmra.mxu0 %v2067
      %v2887 = vpop.f32.mrf.mxu0
      %v2888 = vadd.f32 %v2775, %v2887
      %2889 = vmatmul.f32.gmra.mxu0 %v2068
      %v2890 = vpop.f32.mrf.mxu0
      %v2891 = vadd.f32 %v2778, %v2890
      %2892 = vmatmul.f32.gmra.mxu0 %v2069
      %v2893 = vpop.f32.mrf.mxu0
      %v2894 = vadd.f32 %v2781, %v2893
      %2895 = vmatmul.f32.gmra.mxu0 %v2070
      %v2896 = vpop.f32.mrf.mxu0
      %v2897 = vadd.f32 %v2784, %v2896
      %2898 = vmatmul.f32.gmra.mxu0 %v2071
      %v2899 = vpop.f32.mrf.mxu0
      %v2900 = vadd.f32 %v2787, %v2899
      %2901 = vmatmul.f32.gmra.mxu0 %v2072
      %v2902 = vpop.f32.mrf.mxu0
      %v2903 = vadd.f32 %v2790, %v2902
      %2904 = vmatmul.f32.gmra.mxu0 %v2073
      %v2905 = vpop.f32.mrf.mxu0
      %v2906 = vadd.f32 %v2793, %v2905
      %2907 = vmatmul.f32.gmra.mxu0 %v2074
      %v2908 = vpop.f32.mrf.mxu0
      %v2909 = vadd.f32 %v2796, %v2908
      %2910 = vmatmul.f32.gmra.mxu0 %v2075
      %v2911 = vpop.f32.mrf.mxu0
      %v2912 = vadd.f32 %v2799, %v2911
      %2913 = vmatmul.f32.gmra.mxu0 %v2076
      %v2914 = vpop.f32.mrf.mxu0
      %v2915 = vadd.f32 %v2802, %v2914
      %2916 = vmatmul.f32.gmra.mxu0 %v2077
      %v2917 = vpop.f32.mrf.mxu0
      %v2918 = vadd.f32 %v2805, %v2917
      %2919 = vdwg.mxu0
      %2920 = vmatpush.msra.mxu0 %v2302
      %2921 = vmatpush.msra.mxu0 %v2301
      %2922 = vmatpush.msra.mxu0 %v2300
      %2923 = vmatpush.msra.mxu0 %v2299
      %2924 = vmatpush.msra.mxu0 %v2298
      %2925 = vmatpush.msra.mxu0 %v2297
      %2926 = vmatpush.msra.mxu0 %v2296
      %2927 = vmatpush.msra.mxu0 %v2295
      %2928 = vmatpush.msra.mxu0 %v2294
      %2929 = vmatpush.msra.mxu0 %v2293
      %2930 = vmatpush.msra.mxu0 %v2292
      %2931 = vmatpush.msra.mxu0 %v2291
      %2932 = vmatpush.msra.mxu0 %v2290
      %2933 = vmatpush.msra.mxu0 %v2289
      %2934 = vmatpush.msra.mxu0 %v2288
      %2935 = vmatpush.msra.mxu0 %v2287
      %2936 = vmatmul.f32.gmra.mxu0 %v2078
      %v2937 = vpop.f32.mrf.mxu0
      %v2938 = vadd.f32 %v2825, %v2937
      %2939 = vmatmul.f32.gmra.mxu0 %v2079
      %v2940 = vpop.f32.mrf.mxu0
      %v2941 = vadd.f32 %v2828, %v2940
      %2942 = vmatmul.f32.gmra.mxu0 %v2080
      %v2943 = vpop.f32.mrf.mxu0
      %v2944 = vadd.f32 %v2831, %v2943
      %2945 = vmatmul.f32.gmra.mxu0 %v2081
      %v2946 = vpop.f32.mrf.mxu0
      %v2947 = vadd.f32 %v2834, %v2946
      %2948 = vmatmul.f32.gmra.mxu0 %v2082
      %v2949 = vpop.f32.mrf.mxu0
      %v2950 = vadd.f32 %v2837, %v2949
      %2951 = vmatmul.f32.gmra.mxu0 %v2083
      %v2952 = vpop.f32.mrf.mxu0
      %v2953 = vadd.f32 %v2840, %v2952
      %2954 = vmatmul.f32.gmra.mxu0 %v2084
      %v2955 = vpop.f32.mrf.mxu0
      %v2956 = vadd.f32 %v2843, %v2955
      %2957 = vmatmul.f32.gmra.mxu0 %v2085
      %v2958 = vpop.f32.mrf.mxu0
      %v2959 = vadd.f32 %v2846, %v2958
      %2960 = vmatmul.f32.gmra.mxu0 %v2086
      %v2961 = vpop.f32.mrf.mxu0
      %v2962 = vadd.f32 %v2849, %v2961
      %2963 = vmatmul.f32.gmra.mxu0 %v2087
      %v2964 = vpop.f32.mrf.mxu0
      %v2965 = vadd.f32 %v2852, %v2964
      %2966 = vmatmul.f32.gmra.mxu0 %v2088
      %v2967 = vpop.f32.mrf.mxu0
      %v2968 = vadd.f32 %v2855, %v2967
      %2969 = vmatmul.f32.gmra.mxu0 %v2089
      %v2970 = vpop.f32.mrf.mxu0
      %v2971 = vadd.f32 %v2858, %v2970
      %2972 = vmatmul.f32.gmra.mxu0 %v2090
      %v2973 = vpop.f32.mrf.mxu0
      %v2974 = vadd.f32 %v2861, %v2973
      %2975 = vmatmul.f32.gmra.mxu0 %v2091
      %v2976 = vpop.f32.mrf.mxu0
      %v2977 = vadd.f32 %v2864, %v2976
      %2978 = vmatmul.f32.gmra.mxu0 %v2092
      %v2979 = vpop.f32.mrf.mxu0
      %v2980 = vadd.f32 %v2867, %v2979
      %2981 = vmatmul.f32.gmra.mxu0 %v2093
      %v2982 = vpop.f32.mrf.mxu0
      %v2983 = vadd.f32 %v2870, %v2982
      %2984 = vmatmul.f32.gmra.mxu0 %v2094
      %v2985 = vpop.f32.mrf.mxu0
      %v2986 = vadd.f32 %v2873, %v2985
      %2987 = vmatmul.f32.gmra.mxu0 %v2095
      %v2988 = vpop.f32.mrf.mxu0
      %v2989 = vadd.f32 %v2876, %v2988
      %2990 = vmatmul.f32.gmra.mxu0 %v2096
      %v2991 = vpop.f32.mrf.mxu0
      %v2992 = vadd.f32 %v2879, %v2991
      %2993 = vmatmul.f32.gmra.mxu0 %v2097
      %v2994 = vpop.f32.mrf.mxu0
      %v2995 = vadd.f32 %v2882, %v2994
      %2996 = vmatmul.f32.gmra.mxu0 %v2098
      %v2997 = vpop.f32.mrf.mxu0
      %v2998 = vadd.f32 %v2885, %v2997
      %2999 = vmatmul.f32.gmra.mxu0 %v2099
      %v3000 = vpop.f32.mrf.mxu0
      %v3001 = vadd.f32 %v2888, %v3000
      %3002 = vmatmul.f32.gmra.mxu0 %v2100
      %v3003 = vpop.f32.mrf.mxu0
      %v3004 = vadd.f32 %v2891, %v3003
      %3005 = vmatmul.f32.gmra.mxu0 %v2101
      %v3006 = vpop.f32.mrf.mxu0
      %v3007 = vadd.f32 %v2894, %v3006
      %3008 = vmatmul.f32.gmra.mxu0 %v2102
      %v3009 = vpop.f32.mrf.mxu0
      %v3010 = vadd.f32 %v2897, %v3009
      %3011 = vmatmul.f32.gmra.mxu0 %v2103
      %v3012 = vpop.f32.mrf.mxu0
      %v3013 = vadd.f32 %v2900, %v3012
      %3014 = vmatmul.f32.gmra.mxu0 %v2104
      %v3015 = vpop.f32.mrf.mxu0
      %v3016 = vadd.f32 %v2903, %v3015
      %3017 = vmatmul.f32.gmra.mxu0 %v2105
      %v3018 = vpop.f32.mrf.mxu0
      %v3019 = vadd.f32 %v2906, %v3018
      %3020 = vmatmul.f32.gmra.mxu0 %v2106
      %v3021 = vpop.f32.mrf.mxu0
      %v3022 = vadd.f32 %v2909, %v3021
      %3023 = vmatmul.f32.gmra.mxu0 %v2107
      %v3024 = vpop.f32.mrf.mxu0
      %v3025 = vadd.f32 %v2912, %v3024
      %3026 = vmatmul.f32.gmra.mxu0 %v2108
      %v3027 = vpop.f32.mrf.mxu0
      %v3028 = vadd.f32 %v2915, %v3027
      %3029 = vmatmul.f32.gmra.mxu0 %v2109
      %v3030 = vpop.f32.mrf.mxu0
      %v3031 = vadd.f32 %v2918, %v3030
      %3032 = vdwg.mxu0
      %3033 = vmatpush.msra.mxu0 %v2318
      %3034 = vmatpush.msra.mxu0 %v2317
      %3035 = vmatpush.msra.mxu0 %v2316
      %3036 = vmatpush.msra.mxu0 %v2315
      %3037 = vmatpush.msra.mxu0 %v2314
      %3038 = vmatpush.msra.mxu0 %v2313
      %3039 = vmatpush.msra.mxu0 %v2312
      %3040 = vmatpush.msra.mxu0 %v2311
      %3041 = vmatpush.msra.mxu0 %v2310
      %3042 = vmatpush.msra.mxu0 %v2309
      %3043 = vmatpush.msra.mxu0 %v2308
      %3044 = vmatpush.msra.mxu0 %v2307
      %3045 = vmatpush.msra.mxu0 %v2306
      %3046 = vmatpush.msra.mxu0 %v2305
      %3047 = vmatpush.msra.mxu0 %v2304
      %3048 = vmatpush.msra.mxu0 %v2303
      %3049 = vmatmul.f32.gmra.mxu0 %v2111
      %v3050 = vpop.f32.mrf.mxu0
      %v3051 = vadd.f32 %v2938, %v3050
      %3052 = vmatmul.f32.gmra.mxu0 %v2112
      %v3053 = vpop.f32.mrf.mxu0
      %v3054 = vadd.f32 %v2941, %v3053
      %3055 = vmatmul.f32.gmra.mxu0 %v2113
      %v3056 = vpop.f32.mrf.mxu0
      %v3057 = vadd.f32 %v2944, %v3056
      %3058 = vmatmul.f32.gmra.mxu0 %v2114
      %v3059 = vpop.f32.mrf.mxu0
      %v3060 = vadd.f32 %v2947, %v3059
      %3061 = vmatmul.f32.gmra.mxu0 %v2115
      %v3062 = vpop.f32.mrf.mxu0
      %v3063 = vadd.f32 %v2950, %v3062
      %3064 = vmatmul.f32.gmra.mxu0 %v2116
      %v3065 = vpop.f32.mrf.mxu0
      %v3066 = vadd.f32 %v2953, %v3065
      %3067 = vmatmul.f32.gmra.mxu0 %v2117
      %v3068 = vpop.f32.mrf.mxu0
      %v3069 = vadd.f32 %v2956, %v3068
      %3070 = vmatmul.f32.gmra.mxu0 %v2118
      %v3071 = vpop.f32.mrf.mxu0
      %v3072 = vadd.f32 %v2959, %v3071
      %3073 = vmatmul.f32.gmra.mxu0 %v2119
      %v3074 = vpop.f32.mrf.mxu0
      %v3075 = vadd.f32 %v2962, %v3074
      %3076 = vmatmul.f32.gmra.mxu0 %v2120
      %v3077 = vpop.f32.mrf.mxu0
      %v3078 = vadd.f32 %v2965, %v3077
      %3079 = vmatmul.f32.gmra.mxu0 %v2121
      %v3080 = vpop.f32.mrf.mxu0
      %v3081 = vadd.f32 %v2968, %v3080
      %3082 = vmatmul.f32.gmra.mxu0 %v2122
      %v3083 = vpop.f32.mrf.mxu0
      %v3084 = vadd.f32 %v2971, %v3083
      %3085 = vmatmul.f32.gmra.mxu0 %v2123
      %v3086 = vpop.f32.mrf.mxu0
      %v3087 = vadd.f32 %v2974, %v3086
      %3088 = vmatmul.f32.gmra.mxu0 %v2124
      %v3089 = vpop.f32.mrf.mxu0
      %v3090 = vadd.f32 %v2977, %v3089
      %3091 = vmatmul.f32.gmra.mxu0 %v2125
      %v3092 = vpop.f32.mrf.mxu0
      %v3093 = vadd.f32 %v2980, %v3092
      %3094 = vmatmul.f32.gmra.mxu0 %v2126
      %v3095 = vpop.f32.mrf.mxu0
      %v3096 = vadd.f32 %v2983, %v3095
      %3097 = vmatmul.f32.gmra.mxu0 %v2127
      %v3098 = vpop.f32.mrf.mxu0
      %v3099 = vadd.f32 %v2986, %v3098
      %3100 = vmatmul.f32.gmra.mxu0 %v2128
      %v3101 = vpop.f32.mrf.mxu0
      %v3102 = vadd.f32 %v2989, %v3101
      %3103 = vmatmul.f32.gmra.mxu0 %v2129
      %v3104 = vpop.f32.mrf.mxu0
      %v3105 = vadd.f32 %v2992, %v3104
      %3106 = vmatmul.f32.gmra.mxu0 %v2130
      %v3107 = vpop.f32.mrf.mxu0
      %v3108 = vadd.f32 %v2995, %v3107
      %3109 = vmatmul.f32.gmra.mxu0 %v2131
      %v3110 = vpop.f32.mrf.mxu0
      %v3111 = vadd.f32 %v2998, %v3110
      %3112 = vmatmul.f32.gmra.mxu0 %v2132
      %v3113 = vpop.f32.mrf.mxu0
      %v3114 = vadd.f32 %v3001, %v3113
      %3115 = vmatmul.f32.gmra.mxu0 %v2133
      %v3116 = vpop.f32.mrf.mxu0
      %v3117 = vadd.f32 %v3004, %v3116
      %3118 = vmatmul.f32.gmra.mxu0 %v2134
      %v3119 = vpop.f32.mrf.mxu0
      %v3120 = vadd.f32 %v3007, %v3119
      %3121 = vmatmul.f32.gmra.mxu0 %v2135
      %v3122 = vpop.f32.mrf.mxu0
      %v3123 = vadd.f32 %v3010, %v3122
      %3124 = vmatmul.f32.gmra.mxu0 %v2136
      %v3125 = vpop.f32.mrf.mxu0
      %v3126 = vadd.f32 %v3013, %v3125
      %3127 = vmatmul.f32.gmra.mxu0 %v2137
      %v3128 = vpop.f32.mrf.mxu0
      %v3129 = vadd.f32 %v3016, %v3128
      %3130 = vmatmul.f32.gmra.mxu0 %v2138
      %v3131 = vpop.f32.mrf.mxu0
      %v3132 = vadd.f32 %v3019, %v3131
      %3133 = vmatmul.f32.gmra.mxu0 %v2139
      %v3134 = vpop.f32.mrf.mxu0
      %v3135 = vadd.f32 %v3022, %v3134
      %3136 = vmatmul.f32.gmra.mxu0 %v2140
      %v3137 = vpop.f32.mrf.mxu0
      %v3138 = vadd.f32 %v3025, %v3137
      %3139 = vmatmul.f32.gmra.mxu0 %v2141
      %v3140 = vpop.f32.mrf.mxu0
      %v3141 = vadd.f32 %v3028, %v3140
      %3142 = vmatmul.f32.gmra.mxu0 %v2142
      %v3143 = vpop.f32.mrf.mxu0
      %v3144 = vadd.f32 %v3031, %v3143
      %3145 = vdwg.mxu0
      %3146 = vmatpush.msra.mxu0 %v2334
      %3147 = vmatpush.msra.mxu0 %v2333
      %3148 = vmatpush.msra.mxu0 %v2332
      %3149 = vmatpush.msra.mxu0 %v2331
      %3150 = vmatpush.msra.mxu0 %v2330
      %3151 = vmatpush.msra.mxu0 %v2329
      %3152 = vmatpush.msra.mxu0 %v2328
      %3153 = vmatpush.msra.mxu0 %v2327
      %3154 = vmatpush.msra.mxu0 %v2326
      %3155 = vmatpush.msra.mxu0 %v2325
      %3156 = vmatpush.msra.mxu0 %v2324
      %3157 = vmatpush.msra.mxu0 %v2323
      %3158 = vmatpush.msra.mxu0 %v2322
      %3159 = vmatpush.msra.mxu0 %v2321
      %3160 = vmatpush.msra.mxu0 %v2320
      %3161 = vmatpush.msra.mxu0 %v2319
      %3162 = vmatmul.f32.gmra.mxu0 %v2143
      %v3163 = vpop.f32.mrf.mxu0
      %v3164 = vadd.f32 %v3051, %v3163
      %3165 = vmatmul.f32.gmra.mxu0 %v2144
      %v3166 = vpop.f32.mrf.mxu0
      %v3167 = vadd.f32 %v3054, %v3166
      %3168 = vmatmul.f32.gmra.mxu0 %v2145
      %v3169 = vpop.f32.mrf.mxu0
      %v3170 = vadd.f32 %v3057, %v3169
      %3171 = vmatmul.f32.gmra.mxu0 %v2146
      %v3172 = vpop.f32.mrf.mxu0
      %v3173 = vadd.f32 %v3060, %v3172
      %3174 = vmatmul.f32.gmra.mxu0 %v2147
      %v3175 = vpop.f32.mrf.mxu0
      %v3176 = vadd.f32 %v3063, %v3175
      %3177 = vmatmul.f32.gmra.mxu0 %v2148
      %v3178 = vpop.f32.mrf.mxu0
      %v3179 = vadd.f32 %v3066, %v3178
      %3180 = vmatmul.f32.gmra.mxu0 %v2149
      %v3181 = vpop.f32.mrf.mxu0
      %v3182 = vadd.f32 %v3069, %v3181
      %3183 = vmatmul.f32.gmra.mxu0 %v2150
      %v3184 = vpop.f32.mrf.mxu0
      %v3185 = vadd.f32 %v3072, %v3184
      %3186 = vmatmul.f32.gmra.mxu0 %v2151
      %v3187 = vpop.f32.mrf.mxu0
      %v3188 = vadd.f32 %v3075, %v3187
      %3189 = vmatmul.f32.gmra.mxu0 %v2152
      %v3190 = vpop.f32.mrf.mxu0
      %v3191 = vadd.f32 %v3078, %v3190
      %3192 = vmatmul.f32.gmra.mxu0 %v2153
      %v3193 = vpop.f32.mrf.mxu0
      %v3194 = vadd.f32 %v3081, %v3193
      %3195 = vmatmul.f32.gmra.mxu0 %v2154
      %v3196 = vpop.f32.mrf.mxu0
      %v3197 = vadd.f32 %v3084, %v3196
      %3198 = vmatmul.f32.gmra.mxu0 %v2155
      %v3199 = vpop.f32.mrf.mxu0
      %v3200 = vadd.f32 %v3087, %v3199
      %3201 = vmatmul.f32.gmra.mxu0 %v2156
      %v3202 = vpop.f32.mrf.mxu0
      %v3203 = vadd.f32 %v3090, %v3202
      %3204 = vmatmul.f32.gmra.mxu0 %v2157
      %v3205 = vpop.f32.mrf.mxu0
      %v3206 = vadd.f32 %v3093, %v3205
      %3207 = vmatmul.f32.gmra.mxu0 %v2158
      %v3208 = vpop.f32.mrf.mxu0
      %v3209 = vadd.f32 %v3096, %v3208
      %3210 = vmatmul.f32.gmra.mxu0 %v2159
      %v3211 = vpop.f32.mrf.mxu0
      %v3212 = vadd.f32 %v3099, %v3211
      %3213 = vmatmul.f32.gmra.mxu0 %v2160
      %v3214 = vpop.f32.mrf.mxu0
      %v3215 = vadd.f32 %v3102, %v3214
      %3216 = vmatmul.f32.gmra.mxu0 %v2161
      %v3217 = vpop.f32.mrf.mxu0
      %v3218 = vadd.f32 %v3105, %v3217
      %3219 = vmatmul.f32.gmra.mxu0 %v2162
      %v3220 = vpop.f32.mrf.mxu0
      %v3221 = vadd.f32 %v3108, %v3220
      %3222 = vmatmul.f32.gmra.mxu0 %v2163
      %v3223 = vpop.f32.mrf.mxu0
      %v3224 = vadd.f32 %v3111, %v3223
      %3225 = vmatmul.f32.gmra.mxu0 %v2164
      %v3226 = vpop.f32.mrf.mxu0
      %v3227 = vadd.f32 %v3114, %v3226
      %3228 = vmatmul.f32.gmra.mxu0 %v2165
      %v3229 = vpop.f32.mrf.mxu0
      %v3230 = vadd.f32 %v3117, %v3229
      %3231 = vmatmul.f32.gmra.mxu0 %v2166
      %v3232 = vpop.f32.mrf.mxu0
      %v3233 = vadd.f32 %v3120, %v3232
      %3234 = vmatmul.f32.gmra.mxu0 %v2167
      %v3235 = vpop.f32.mrf.mxu0
      %v3236 = vadd.f32 %v3123, %v3235
      %3237 = vmatmul.f32.gmra.mxu0 %v2168
      %v3238 = vpop.f32.mrf.mxu0
      %v3239 = vadd.f32 %v3126, %v3238
      %3240 = vmatmul.f32.gmra.mxu0 %v2169
      %v3241 = vpop.f32.mrf.mxu0
      %v3242 = vadd.f32 %v3129, %v3241
      %3243 = vmatmul.f32.gmra.mxu0 %v2170
      %v3244 = vpop.f32.mrf.mxu0
      %v3245 = vadd.f32 %v3132, %v3244
      %3246 = vmatmul.f32.gmra.mxu0 %v2171
      %v3247 = vpop.f32.mrf.mxu0
      %v3248 = vadd.f32 %v3135, %v3247
      %3249 = vmatmul.f32.gmra.mxu0 %v2172
      %v3250 = vpop.f32.mrf.mxu0
      %v3251 = vadd.f32 %v3138, %v3250
      %3252 = vmatmul.f32.gmra.mxu0 %v2173
      %v3253 = vpop.f32.mrf.mxu0
      %v3254 = vadd.f32 %v3141, %v3253
      %3255 = vmatmul.f32.gmra.mxu0 %v2174
      %v3256 = vpop.f32.mrf.mxu0
      %v3257 = vadd.f32 %v3144, %v3256
      %3258 = vdwg.mxu0
      %3259 = vmatpush.msra.mxu0 %v2350
      %3260 = vmatpush.msra.mxu0 %v2349
      %3261 = vmatpush.msra.mxu0 %v2348
      %3262 = vmatpush.msra.mxu0 %v2347
      %3263 = vmatpush.msra.mxu0 %v2346
      %3264 = vmatpush.msra.mxu0 %v2345
      %3265 = vmatpush.msra.mxu0 %v2344
      %3266 = vmatpush.msra.mxu0 %v2343
      %3267 = vmatpush.msra.mxu0 %v2342
      %3268 = vmatpush.msra.mxu0 %v2341
      %3269 = vmatpush.msra.mxu0 %v2340
      %3270 = vmatpush.msra.mxu0 %v2339
      %3271 = vmatpush.msra.mxu0 %v2338
      %3272 = vmatpush.msra.mxu0 %v2337
      %3273 = vmatpush.msra.mxu0 %v2336
      %3274 = vmatpush.msra.mxu0 %v2335
      %3275 = vmatmul.f32.gmra.mxu0 %v2175
      %v3276 = vpop.f32.mrf.mxu0
      %v3277 = vadd.f32 %v3164, %v3276
      %3278 = vmatmul.f32.gmra.mxu0 %v2176
      %v3279 = vpop.f32.mrf.mxu0
      %v3280 = vadd.f32 %v3167, %v3279
      %3281 = vmatmul.f32.gmra.mxu0 %v2177
      %v3282 = vpop.f32.mrf.mxu0
      %v3283 = vadd.f32 %v3170, %v3282
      %3284 = vmatmul.f32.gmra.mxu0 %v2178
      %v3285 = vpop.f32.mrf.mxu0
      %v3286 = vadd.f32 %v3173, %v3285
      %3287 = vmatmul.f32.gmra.mxu0 %v2179
      %v3288 = vpop.f32.mrf.mxu0
      %v3289 = vadd.f32 %v3176, %v3288
      %3290 = vmatmul.f32.gmra.mxu0 %v2180
      %v3291 = vpop.f32.mrf.mxu0
      %v3292 = vadd.f32 %v3179, %v3291
      %3293 = vmatmul.f32.gmra.mxu0 %v2181
      %v3294 = vpop.f32.mrf.mxu0
      %v3295 = vadd.f32 %v3182, %v3294
      %3296 = vmatmul.f32.gmra.mxu0 %v2182
      %v3297 = vpop.f32.mrf.mxu0
      %v3298 = vadd.f32 %v3185, %v3297
      %3299 = vmatmul.f32.gmra.mxu0 %v2183
      %v3300 = vpop.f32.mrf.mxu0
      %v3301 = vadd.f32 %v3188, %v3300
      %3302 = vmatmul.f32.gmra.mxu0 %v2184
      %v3303 = vpop.f32.mrf.mxu0
      %v3304 = vadd.f32 %v3191, %v3303
      %3305 = vmatmul.f32.gmra.mxu0 %v2185
      %v3306 = vpop.f32.mrf.mxu0
      %v3307 = vadd.f32 %v3194, %v3306
      %3308 = vmatmul.f32.gmra.mxu0 %v2186
      %v3309 = vpop.f32.mrf.mxu0
      %v3310 = vadd.f32 %v3197, %v3309
      %3311 = vmatmul.f32.gmra.mxu0 %v2187
      %v3312 = vpop.f32.mrf.mxu0
      %v3313 = vadd.f32 %v3200, %v3312
      %3314 = vmatmul.f32.gmra.mxu0 %v2188
      %v3315 = vpop.f32.mrf.mxu0
      %v3316 = vadd.f32 %v3203, %v3315
      %3317 = vmatmul.f32.gmra.mxu0 %v2189
      %v3318 = vpop.f32.mrf.mxu0
      %v3319 = vadd.f32 %v3206, %v3318
      %3320 = vmatmul.f32.gmra.mxu0 %v2190
      %v3321 = vpop.f32.mrf.mxu0
      %v3322 = vadd.f32 %v3209, %v3321
      %3323 = vmatmul.f32.gmra.mxu0 %v2191
      %v3324 = vpop.f32.mrf.mxu0
      %v3325 = vadd.f32 %v3212, %v3324
      %3326 = vmatmul.f32.gmra.mxu0 %v2192
      %v3327 = vpop.f32.mrf.mxu0
      %v3328 = vadd.f32 %v3215, %v3327
      %3329 = vmatmul.f32.gmra.mxu0 %v2193
      %v3330 = vpop.f32.mrf.mxu0
      %v3331 = vadd.f32 %v3218, %v3330
      %3332 = vmatmul.f32.gmra.mxu0 %v2194
      %v3333 = vpop.f32.mrf.mxu0
      %v3334 = vadd.f32 %v3221, %v3333
      %3335 = vmatmul.f32.gmra.mxu0 %v2195
      %v3336 = vpop.f32.mrf.mxu0
      %v3337 = vadd.f32 %v3224, %v3336
      %3338 = vmatmul.f32.gmra.mxu0 %v2196
      %v3339 = vpop.f32.mrf.mxu0
      %v3340 = vadd.f32 %v3227, %v3339
      %3341 = vmatmul.f32.gmra.mxu0 %v2197
      %v3342 = vpop.f32.mrf.mxu0
      %v3343 = vadd.f32 %v3230, %v3342
      %3344 = vmatmul.f32.gmra.mxu0 %v2198
      %v3345 = vpop.f32.mrf.mxu0
      %v3346 = vadd.f32 %v3233, %v3345
      %3347 = vmatmul.f32.gmra.mxu0 %v2199
      %v3348 = vpop.f32.mrf.mxu0
      %v3349 = vadd.f32 %v3236, %v3348
      %3350 = vmatmul.f32.gmra.mxu0 %v2200
      %v3351 = vpop.f32.mrf.mxu0
      %v3352 = vadd.f32 %v3239, %v3351
      %3353 = vmatmul.f32.gmra.mxu0 %v2201
      %v3354 = vpop.f32.mrf.mxu0
      %v3355 = vadd.f32 %v3242, %v3354
      %3356 = vmatmul.f32.gmra.mxu0 %v2202
      %v3357 = vpop.f32.mrf.mxu0
      %v3358 = vadd.f32 %v3245, %v3357
      %3359 = vmatmul.f32.gmra.mxu0 %v2203
      %v3360 = vpop.f32.mrf.mxu0
      %v3361 = vadd.f32 %v3248, %v3360
      %3362 = vmatmul.f32.gmra.mxu0 %v2204
      %v3363 = vpop.f32.mrf.mxu0
      %v3364 = vadd.f32 %v3251, %v3363
      %3365 = vmatmul.f32.gmra.mxu0 %v2205
      %v3366 = vpop.f32.mrf.mxu0
      %v3367 = vadd.f32 %v3254, %v3366
      %3368 = vmatmul.f32.gmra.mxu0 %v2206
      %v3369 = vpop.f32.mrf.mxu0
      %v3370 = vadd.f32 %v3257, %v3369
      %3371 = vdwg.mxu0
      %v3372 = vmax.f32 %v3277, 0.0
      %v3373 = vmax.f32 %v3280, 0.0
      %v3374 = vmax.f32 %v3283, 0.0
      %v3375 = vmax.f32 %v3286, 0.0
      %v3376 = vmax.f32 %v3289, 0.0
      %v3377 = vmax.f32 %v3292, 0.0
      %v3378 = vmax.f32 %v3295, 0.0
      %v3379 = vmax.f32 %v3298, 0.0
      %v3380 = vmax.f32 %v3301, 0.0
      %v3381 = vmax.f32 %v3304, 0.0
      %v3382 = vmax.f32 %v3307, 0.0
      %v3383 = vmax.f32 %v3310, 0.0
      %v3384 = vmax.f32 %v3313, 0.0
      %v3385 = vmax.f32 %v3316, 0.0
      %v3386 = vmax.f32 %v3319, 0.0
      %v3387 = vmax.f32 %v3322, 0.0
      %v3388 = vmax.f32 %v3325, 0.0
      %v3389 = vmax.f32 %v3328, 0.0
      %v3390 = vmax.f32 %v3331, 0.0
      %v3391 = vmax.f32 %v3334, 0.0
      %v3392 = vmax.f32 %v3337, 0.0
      %v3393 = vmax.f32 %v3340, 0.0
      %v3394 = vmax.f32 %v3343, 0.0
      %v3395 = vmax.f32 %v3346, 0.0
      %v3396 = vmax.f32 %v3349, 0.0
      %v3397 = vmax.f32 %v3352, 0.0
      %v3398 = vmax.f32 %v3355, 0.0
      %v3399 = vmax.f32 %v3358, 0.0
      %v3400 = vmax.f32 %v3361, 0.0
      %v3401 = vmax.f32 %v3364, 0.0
      %v3402 = vmax.f32 %v3367, 0.0
      %v3403 = vmax.f32 %v3370, 0.0
      %3404 = vst [vmem:[%s224] sm:$0xff] %v3372
      %3405 = vst [vmem:[%s224 + $0x8] sm:$0xff] %v3373
      %3406 = vst [vmem:[%s224 + $0x10] sm:$0xff] %v3374
      %3407 = vst [vmem:[%s224 + $0x18] sm:$0xff] %v3375
      %3408 = vst [vmem:[%s224 + $0x20] sm:$0xff] %v3376
      %3409 = vst [vmem:[%s224 + $0x28] sm:$0xff] %v3377
      %3410 = vst [vmem:[%s224 + $0x30] sm:$0xff] %v3378
      %3411 = vst [vmem:[%s224 + $0x38] sm:$0xff] %v3379
      %3412 = vst [vmem:[%s224 + $0x40] sm:$0xff] %v3380
      %3413 = vst [vmem:[%s224 + $0x48] sm:$0xff] %v3381
      %3414 = vst [vmem:[%s224 + $0x50] sm:$0xff] %v3382
      %3415 = vst [vmem:[%s224 + $0x58] sm:$0xff] %v3383
      %3416 = vst [vmem:[%s224 + $0x60] sm:$0xff] %v3384
      %3417 = vst [vmem:[%s224 + $0x68] sm:$0xff] %v3385
      %3418 = vst [vmem:[%s224 + $0x70] sm:$0xff] %v3386
      %3419 = vst [vmem:[%s224 + $0x78] sm:$0xff] %v3387
      %3420 = vst [vmem:[%s224 + $0x80] sm:$0xff] %v3388
      %3421 = vst [vmem:[%s224 + $0x88] sm:$0xff] %v3389
      %3422 = vst [vmem:[%s224 + $0x90] sm:$0xff] %v3390
      %3423 = vst [vmem:[%s224 + $0x98] sm:$0xff] %v3391
      %3424 = vst [vmem:[%s224 + $0xa0] sm:$0xff] %v3392
      %3425 = vst [vmem:[%s224 + $0xa8] sm:$0xff] %v3393
      %3426 = vst [vmem:[%s224 + $0xb0] sm:$0xff] %v3394
      %3427 = vst [vmem:[%s224 + $0xb8] sm:$0xff] %v3395
      %3428 = vst [vmem:[%s224 + $0xc0] sm:$0xff] %v3396
      %3429 = vst [vmem:[%s224 + $0xc8] sm:$0xff] %v3397
      %3430 = vst [vmem:[%s224 + $0xd0] sm:$0xff] %v3398
      %3431 = vst [vmem:[%s224 + $0xd8] sm:$0xff] %v3399
      %3432 = vst [vmem:[%s224 + $0xe0] sm:$0xff] %v3400
      %3433 = vst [vmem:[%s224 + $0xe8] sm:$0xff] %v3401
      %3434 = vst [vmem:[%s224 + $0xf0] sm:$0xff] %v3402
      %3435 = vst [vmem:[%s224 + $0xf8] sm:$0xff] %v3403
      %p3436 = scmp.lt.s32.totalorder %s16, 1
      %s3437 = scalar_select %p3436, %s16, 1
      %s3438 = smul.addr %s3437, 32
      %s3439 = smul.addr %s3438, 8
      %s3440 = scalar_lea.vmem %s5, %s3439
      // Predicated region
      $region41: #{convblock_pallas_nhwc.1} parent=39 // pred_check
        %p3441 = pneg %p144
      $region42: #{convblock_pallas_nhwc.1} parent=39 // pred_check_branch
        %3443 = sbr.rel (%p3441) target = $region44
      $region43: #{convblock_pallas_nhwc.1} parent=39 // pred_region
        _
      $region44: #{convblock_pallas_nhwc.1} parent=39 // pred_fallthru
        _
    $region40: #{convblock_pallas_nhwc.1} parent=5 // pred_fallthru
      _
    %p3444 = scmp.le.s32.totalorder 2, %s11
    // Predicated region
    $region45: #{convblock_pallas_nhwc.1} parent=5 // pred_check
      %p3445 = pneg %p3444
    $region46: #{convblock_pallas_nhwc.1} parent=5 // pred_check_branch
      %3447 = sbr.rel (%p3445) target = $region48
    $region47: #{convblock_pallas_nhwc.1} parent=5 // pred_region
      %s3448 = ssub.s32 %s11, 2
      // Predicated region
      $region49: #{convblock_pallas_nhwc.1} parent=47 // pred_check
        %p3449 = pneg %p150
      $region50: #{convblock_pallas_nhwc.1} parent=47 // pred_check_branch
        %3451 = sbr.rel (%p3449) target = $region52
      $region51: #{convblock_pallas_nhwc.1} parent=47 // pred_region
        %p3452 = scmp.lt.s32.totalorder %s17, 1
        %s3453 = scalar_select %p3452, %s17, 1
        %s3454 = smul.addr %s3453, 32
        %s3455 = smul.addr %s3454, 8
        %s3456 = scalar_lea.vmem %s5, %s3455
      $region52: #{convblock_pallas_nhwc.1} parent=47 // pred_fallthru
        _
    $region48: #{convblock_pallas_nhwc.1} parent=5 // pred_fallthru
      _
  $region6: #{convblock_pallas_nhwc.1} parent=0 // loop_footer
    %s15 = sadd.s32 1, %s11
  $region7: #{convblock_pallas_nhwc.1} parent=0 // loop_footer_branch
    %10 = sbr.rel target = $region3
  $region8: #{convblock_pallas_nhwc.1} parent=0 // loop_exit
    _

</llo_original>
